<compile_context>
chip_gen: v7x
topology: tpu7x:2x2x1
jax: 0.10.0
libtpu: 0.0.40
codegen_flags: <defaults>
</compile_context>

<pallas_src>
import functools
import numpy as np
import jax
import jax.numpy as jnp
from jax.experimental import pallas as pl
from jax.experimental.pallas import tpu as pltpu

EMBED_DIM = 32        # embed.output_size
SIZE = 64             # TreeEncoder `size`
CHUNK = SIZE // 2     # TreeLSTM chunk_size ; output_size = 2*chunk = SIZE
VOCAB = 50

# gate band order in the packed [*, 4*CHUNK] weight slabs
_I, _F, _O, _U = 0, 1, 2, 3


def _vmem():
    return pl.BlockSpec(memory_space=pltpu.MemorySpace.VMEM)


def _band(x, g):
    return x[:, g * CHUNK:(g + 1) * CHUNK]


# ----------------------------- fused Pallas kernel ---------------------------
def _tree_encoder_kernel(level_meta, n_nodes,
                         emb_ref, wnode_ref, wg_ref, ug_ref, bg_ref,
                         leaf_mask_ref, *refs):
    """Whole TreeEncoder forward (inside + outside) in one kernel invocation.

    level_meta: static tuple of (P_pad, n_children) per tree level (bottom-up order).
    refs: per-level constant gather/scatter matrices [gp, sp, gc_0..gc_{n-1},
          sc_0..sc_{n-1}] for every level, followed by the output ref.
    """
    out_ref = refs[-1]
    lvl_refs = refs[:-1]

    dot = lambda a, b: jnp.dot(a, b, preferred_element_type=jnp.float32)
    sig, tanh = jax.nn.sigmoid, jnp.tanh

    wg = wg_ref[...]      # [SIZE, 4*CHUNK]   (W_i | W_f | W_o | W_u)
    ug = ug_ref[...]      # [CHUNK, 4*CHUNK]  (U_i | U_f | U_o | U_u)
    bg = bg_ref[...]      # [1, 4*CHUNK]

    # node features + leaf initialization, fused into the same kernel.
    nf = dot(emb_ref[...], wnode_ref[...])                  # [N, SIZE]
    leaf_mask = leaf_mask_ref[...]                          # [N, 1]
    z_children = leaf_mask * tanh(nf)                       # leaves: tanh(z_node); else 0
    z_ctxt_in = jnp.zeros((n_nodes, CHUNK), jnp.float32)

    # unpack the per-level constant selection matrices.
    levels = []
    idx = 0
    for (P, n) in level_meta:
        gp = lvl_refs[idx][...]                                     # [P, N] gather parents
        sp = lvl_refs[idx + 1][...]                                 # [N, P] scatter parents
        gcs = [lvl_refs[idx + 2 + k][...] for k in range(n)]        # [P, N] gather child k
        scs = [lvl_refs[idx + 2 + n + k][...] for k in range(n)]    # [N, P] scatter child k
        idx += 2 + 2 * n
        levels.append((P, n, gp, sp, gcs, scs))

    # ---------------- inside pass (bottom-up, statically unrolled) ----------------
    for (P, n, gp, sp, gcs, scs) in levels:
        z_node = dot(gp, nf)                                 # [P, SIZE]
        w_all = dot(z_node, wg)                              # [P, 128] lane-dense gates
        zc = [dot(gcs[k], z_children) for k in range(n)]     # n x [P, SIZE]
        h_k = [z[:, :CHUNK] for z in zc]
        c_k = [z[:, CHUNK:] for z in zc]
        h_tilde = h_k[0]
        for k in range(1, n):
            h_tilde = h_tilde + h_k[k]

        u_ht = dot(h_tilde, ug) + bg                         # [P, 128]
        i_j = sig(_band(w_all, _I) + _band(u_ht, _I))
        o_j = sig(_band(w_all, _O) + _band(u_ht, _O))
        uu_lin = _band(u_ht, _U)                             # reused for u_j and z_ctxt
        u_j = tanh(_band(w_all, _U) + uu_lin)

        # all children forget-gates with one stacked matmul
        h_stack = jnp.concatenate(h_k, axis=0) if n > 1 else h_k[0]   # [n*P, CHUNK]
        uf_all = dot(h_stack, ug) + bg                                 # [n*P, 128]
        wf = _band(w_all, _F)
        sum_fc = jnp.zeros_like(h_tilde)
        for k in range(n):
            f_k = sig(wf + _band(uf_all[k * P:(k + 1) * P], _F))
            sum_fc = sum_fc + f_k * c_k[k]

        c_j = i_j * u_j + sum_fc
        h_j = o_j * tanh(c_j)
        out_lvl = jnp.concatenate([h_j, c_j], axis=-1)       # [P, SIZE]

        mp = jnp.sum(sp, axis=1, keepdims=True)              # [N, 1] 0/1 parent-row mask
        z_children = z_children * (1.0 - mp) + dot(sp, out_lvl)
        z_ctxt_in = z_ctxt_in * (1.0 - mp) + dot(sp, tanh(uu_lin))

    # ---------------- outside pass (top-down, statically unrolled) ----------------
    z_parent = jnp.zeros((n_nodes, SIZE), jnp.float32)       # roots keep z_parent = 0
    z_ctxt_out = jnp.zeros((n_nodes, CHUNK), jnp.float32)    # roots keep ctxt = 0
    for (P, n, gp, sp, gcs, scs) in reversed(levels):
        z_node = dot(gp, nf)                                 # [P, SIZE]
        w_all = dot(z_node, wg)                              # [P, 128]
        zpar = dot(gp, z_parent)                             # [P, SIZE]
        h_parent = zpar[:, :CHUNK]
        c_parent = zpar[:, CHUNK:]

        zc = [dot(gcs[k], z_children) for k in range(n)]
        h_k = [z[:, :CHUNK] for z in zc]
        c_k = [z[:, CHUNK:] for z in zc]
        h_tilde = h_k[0]
        for k in range(1, n):
            h_tilde = h_tilde + h_k[k]

        # forget gates for all children + the parent in one stacked matmul
        hf_stack = jnp.concatenate(h_k + [h_parent], axis=0)          # [(n+1)*P, CHUNK]
        uf_all = dot(hf_stack, ug) + bg
        wf = _band(w_all, _F)
        f_ks = [sig(wf + _band(uf_all[k * P:(k + 1) * P], _F)) for k in range(n)]
        f_parent = sig(wf + _band(uf_all[n * P:(n + 1) * P], _F))

        cprev = [f_ks[k] * c_k[k] for k in range(n)]
        c_j_prev = cprev[0]
        for k in range(1, n):
            c_j_prev = c_j_prev + cprev[k]
        fp_cp = f_parent * c_parent

        # i/o/u gates for all children with one stacked matmul on htm1
        htm1_stack = jnp.concatenate(
            [h_tilde - h_k[k] + h_parent for k in range(n)], axis=0)  # [n*P, CHUNK]
        u_all = dot(htm1_stack, ug) + bg
        wi = _band(w_all, _I)
        wo = _band(w_all, _O)
        wu = _band(w_all, _U)
        for k in range(n):
            blk = u_all[k * P:(k + 1) * P]
            i_k = sig(wi + _band(blk, _I))
            o_k = sig(wo + _band(blk, _O))
            u_k = tanh(wu + _band(blk, _U))
            c_jk = i_k * u_k + (c_j_prev - cprev[k] + fp_cp)
            h_jk = o_k * tanh(c_jk)
            out_k = jnp.concatenate([h_jk, c_jk], axis=-1)   # [P, SIZE]

            mck = jnp.sum(scs[k], axis=1, keepdims=True)     # [N, 1] child-k row mask
            z_parent = z_parent * (1.0 - mck) + dot(scs[k], out_k)
            z_ctxt_out = z_ctxt_out * (1.0 - mck) + dot(scs[k], h_jk)

    out_ref[...] = jnp.concatenate([z_ctxt_in, z_ctxt_out], axis=-1)   # [N, SIZE]


# ------------------------------ host-side glue --------------------------------
def _build_level_constants(levels, n_nodes):
    """Turn per-level (parents, children) index tables into constant 0/1 gather /
    scatter matrices; parent count is padded to a multiple of 8 sublanes (padded
    rows are all-zero selectors, so they never affect the state)."""
    meta = []
    arrays = []
    for parents, children in levels:
        parents = np.asarray(parents)
        children = np.asarray(children)
        P, n = children.shape
        P_pad = -(-P // 8) * 8
        rows = np.arange(P)

        gp = np.zeros((P_pad, n_nodes), np.float32)
        gp[rows, parents] = 1.0
        arrays.append(gp)
        arrays.append(np.ascontiguousarray(gp.T))

        gcs, scs = [], []
        for k in range(n):
            g = np.zeros((P_pad, n_nodes), np.float32)
            g[rows, children[:, k]] = 1.0
            gcs.append(g)
            scs.append(np.ascontiguousarray(g.T))
        arrays.extend(gcs)
        arrays.extend(scs)
        meta.append((P_pad, n))
    return tuple(meta), arrays


def tree_encoder_forward(params, node_tokens, node_ids, levels, leaf_ids,
                         batch_size, length):
    """TreeEncoder.forward with outside=True, dropout_p=0 (identity)."""
    # TODO(synk): DGL graph batching + dgl.prop_nodes_topo scheduling is host-side,
    # data-dependent glue; it is represented here by static per-level (parents,
    # children) index tables baked into constant 0/1 gather/scatter matrices.
    emb = params['embed'][node_tokens]                       # embedding lookup (glue)
    N = int(emb.shape[0])

    # pack gate weights into lane-dense 128-wide slabs (i | f | o | u)
    wg = jnp.concatenate([params['W_i'], params['W_f'],
                          params['W_o'], params['W_u']], axis=1)       # [SIZE, 128]
    ug = jnp.concatenate([params['U_i_w'], params['U_f_w'],
                          params['U_o_w'], params['U_u_w']], axis=1)   # [CHUNK, 128]
    bg = jnp.concatenate([params['U_i_b'], params['U_f_b'],
                          params['U_o_b'], params['U_u_b']], axis=1)   # [1, 128]

    leaf_mask = np.zeros((N, 1), np.float32)
    leaf_mask[np.asarray(leaf_ids)] = 1.0

    meta, lvl_arrays = _build_level_constants(levels, N)
    operands = [emb.astype(jnp.float32), params['W_node'], wg, ug, bg,
                jnp.asarray(leaf_mask)] + [jnp.asarray(a) for a in lvl_arrays]

    h = pl.pallas_call(
        functools.partial(_tree_encoder_kernel, meta, N),
        out_shape=jax.ShapeDtypeStruct((N, SIZE), jnp.float32),
        in_specs=[_vmem()] * len(operands),
        out_specs=_vmem(),
    )(*operands)

    output = h.reshape(batch_size, length, SIZE)             # dropout(p=0) == identity
    labels = node_tokens.reshape(batch_size, length).astype(jnp.int32)
    labels_mask = jnp.ones((batch_size, length), dtype=bool)
    label_node_ids = node_ids.reshape(batch_size, length).astype(jnp.int32)
    return output, labels, labels_mask, label_node_ids


# ----------------------- pure-JAX reference (torch-faithful) -----------------
def ref_forward(params, node_tokens, node_ids, levels, leaf_ids, batch_size, length):
    p = params
    sig, tanh = jax.nn.sigmoid, jnp.tanh
    nf = p['embed'][node_tokens] @ p['W_node']
    N = nf.shape[0]
    z_children = jnp.zeros((N, SIZE), jnp.float32)
    z_ctxt_inside = jnp.zeros((N, CHUNK), jnp.float32)
    z_children = z_children.at[leaf_ids].set(tanh(nf[leaf_ids]))

    for parents, children in levels:
        P_, n_ = children.shape
        z_node_rep = jnp.broadcast_to(nf[parents][:, None, :], (P_, n_, SIZE))
        zc = z_children[children]
        z_node = z_node_rep[:, 0]
        h_k, c_k = zc[..., :CHUNK], zc[..., CHUNK:]
        h_tilde = h_k.sum(axis=1)
        i_j = sig(z_node @ p['W_i'] + h_tilde @ p['U_i_w'] + p['U_i_b'])
        f_j_k = sig(jnp.einsum('pns,sc->pnc', z_node_rep, p['W_f'])
                    + jnp.einsum('pnc,cd->pnd', h_k, p['U_f_w']) + p['U_f_b'])
        o_j = sig(z_node @ p['W_o'] + h_tilde @ p['U_o_w'] + p['U_o_b'])
        u_j = tanh(z_node @ p['W_u'] + h_tilde @ p['U_u_w'] + p['U_u_b'])
        c_j = i_j * u_j + jnp.sum(f_j_k * c_k, axis=1)
        h_j = o_j * tanh(c_j)
        z_children = z_children.at[parents].set(jnp.concatenate([h_j, c_j], -1))
        z_ctxt_inside = z_ctxt_inside.at[parents].set(
            tanh(h_tilde @ p['U_u_w'] + p['U_u_b']))

    z_parent = jnp.zeros((N, SIZE), jnp.float32)
    z_ctxt_outside = jnp.zeros((N, CHUNK), jnp.float32)
    for parents, children in reversed(levels):
        P_, n_ = children.shape
        z_node_rep = jnp.broadcast_to(nf[parents][:, None, :], (P_, n_, SIZE))
        zc = z_children[children]
        zp_rep = jnp.broadcast_to(z_parent[parents][:, None, :], (P_, n_, SIZE))
        h_k, c_k = zc[..., :CHUNK], zc[..., CHUNK:]
        h_parent, c_parent = zp_rep[..., :CHUNK], zp_rep[..., CHUNK:]
        h_tilde = h_k.sum(axis=1, keepdims=True)
        htm1 = h_tilde - h_k + h_parent
        W = lambda nm: jnp.einsum('pns,sc->pnc', z_node_rep, p[nm])
        U = lambda x, nm: jnp.einsum('pnc,cd->pnd', x, p[nm + '_w']) + p[nm + '_b']
        i_j = sig(W('W_i') + U(htm1, 'U_i'))
        f_j_k = sig(W('W_f') + U(h_k, 'U_f'))
        o_j = sig(W('W_o') + U(htm1, 'U_o'))
        u_j = tanh(W('W_u') + U(htm1, 'U_u'))
        f_parent = sig(W('W_f') + U(h_parent, 'U_f'))
        cjpt = f_j_k * c_k
        cjp = cjpt.sum(axis=1, keepdims=True)
        c_j = i_j * u_j + (cjp - cjpt + f_parent * c_parent)
        h_j = o_j * tanh(c_j)
        out = jnp.concatenate([h_j, c_j], -1).reshape(P_ * n_, SIZE)
        flat_children = children.reshape(-1)
        z_parent = z_parent.at[flat_children].set(out)
        z_ctxt_outside = z_ctxt_outside.at[flat_children].set(out[:, :CHUNK])

    h = jnp.concatenate([z_ctxt_inside, z_ctxt_outside], -1)
    return h.reshape(batch_size, length, SIZE)


if __name__ == "__main__":
    key = jax.random.PRNGKey(0)
    ks = jax.random.split(key, 16)

    def init(k, shape, scale=0.1):
        return (scale * jax.random.normal(k, shape)).astype(jnp.float32)

    params = {
        'embed': init(ks[0], (VOCAB, EMBED_DIM)),
        'W_node': init(ks[1], (EMBED_DIM, SIZE)),
        'W_i': init(ks[2], (SIZE, CHUNK)), 'U_i_w': init(ks[3], (CHUNK, CHUNK)), 'U_i_b': init(ks[4], (1, CHUNK)),
        'W_f': init(ks[5], (SIZE, CHUNK)), 'U_f_w': init(ks[6], (CHUNK, CHUNK)), 'U_f_b': init(ks[7], (1, CHUNK)),
        'W_o': init(ks[8], (SIZE, CHUNK)), 'U_o_w': init(ks[9], (CHUNK, CHUNK)), 'U_o_b': init(ks[10], (1, CHUNK)),
        'W_u': init(ks[11], (SIZE, CHUNK)), 'U_u_w': init(ks[12], (CHUNK, CHUNK)), 'U_u_b': init(ks[13], (1, CHUNK)),
    }

    # batch of 2 complete binary trees, 7 nodes each (nodes 0 and 7 are the roots).
    batch_size, length = 2, 7
    N = batch_size * length
    node_tokens = jax.random.randint(ks[14], (N,), 0, VOCAB)
    node_ids = jnp.arange(N, dtype=jnp.int32)
    leaf_ids = jnp.array([3, 4, 5, 6, 10, 11, 12, 13], dtype=jnp.int32)
    levels = [   # bottom-up: (parents [P], children [P, n_children])
        (jnp.array([1, 2, 8, 9], dtype=jnp.int32),
         jnp.array([[3, 4], [5, 6], [10, 11], [12, 13]], dtype=jnp.int32)),
        (jnp.array([0, 7], dtype=jnp.int32),
         jnp.array([[1, 2], [8, 9]], dtype=jnp.int32)),
    ]

    output, labels, labels_mask, label_node_ids = tree_encoder_forward(
        params, node_tokens, node_ids, levels, leaf_ids, batch_size, length)
    jax.block_until_ready(output)

    ref = ref_forward(params, node_tokens, node_ids, levels, leaf_ids,
                      batch_size, length)
    err = float(jnp.max(jnp.abs(output - ref)))
    assert output.shape == (batch_size, length, SIZE), output.shape
    assert labels.shape == (batch_size, length)
    assert labels_mask.shape == (batch_size, length)
    assert label_node_ids.shape == (batch_size, length)
    assert err < 1e-4, err
    print("KERNEL_OK")
</pallas_src>

<mosaic_0001>
module attributes {stable_mosaic.version = 11 : i64} {
  func.func @_tree_encoder_kernel(%arg0: memref<14x32xf32, #tpu.memory_space<vmem>>, %arg1: memref<32x64xf32, #tpu.memory_space<vmem>>, %arg2: memref<64x128xf32, #tpu.memory_space<vmem>>, %arg3: memref<32x128xf32, #tpu.memory_space<vmem>>, %arg4: memref<1x128xf32, #tpu.memory_space<vmem>>, %arg5: memref<14x1xf32, #tpu.memory_space<vmem>>, %arg6: memref<8x14xf32, #tpu.memory_space<vmem>>, %arg7: memref<14x8xf32, #tpu.memory_space<vmem>>, %arg8: memref<8x14xf32, #tpu.memory_space<vmem>>, %arg9: memref<8x14xf32, #tpu.memory_space<vmem>>, %arg10: memref<14x8xf32, #tpu.memory_space<vmem>>, %arg11: memref<14x8xf32, #tpu.memory_space<vmem>>, %arg12: memref<8x14xf32, #tpu.memory_space<vmem>>, %arg13: memref<14x8xf32, #tpu.memory_space<vmem>>, %arg14: memref<8x14xf32, #tpu.memory_space<vmem>>, %arg15: memref<8x14xf32, #tpu.memory_space<vmem>>, %arg16: memref<14x8xf32, #tpu.memory_space<vmem>>, %arg17: memref<14x8xf32, #tpu.memory_space<vmem>>, %arg18: memref<14x64xf32, #tpu.memory_space<vmem>>) attributes {dimension_semantics = [], scalar_prefetch = 0 : i64, scratch_operands = 0 : i64, tpu.core_type = #tpu.core_type<tc>} {
    %c0 = arith.constant 0 : index
    %c0_0 = arith.constant 0 : index
    %0 = vector.load %arg2[%c0, %c0_0] : memref<64x128xf32, #tpu.memory_space<vmem>>, vector<64x128xf32>
    %c0_1 = arith.constant 0 : index
    %c0_2 = arith.constant 0 : index
    %1 = vector.load %arg3[%c0_1, %c0_2] : memref<32x128xf32, #tpu.memory_space<vmem>>, vector<32x128xf32>
    %c0_3 = arith.constant 0 : index
    %c0_4 = arith.constant 0 : index
    %2 = vector.load %arg4[%c0_3, %c0_4] : memref<1x128xf32, #tpu.memory_space<vmem>>, vector<1x128xf32>
    %c0_5 = arith.constant 0 : index
    %c0_6 = arith.constant 0 : index
    %3 = vector.load %arg0[%c0_5, %c0_6] : memref<14x32xf32, #tpu.memory_space<vmem>>, vector<14x32xf32>
    %c0_7 = arith.constant 0 : index
    %c0_8 = arith.constant 0 : index
    %4 = vector.load %arg1[%c0_7, %c0_8] : memref<32x64xf32, #tpu.memory_space<vmem>>, vector<32x64xf32>
    %cst = arith.constant dense<0.000000e+00> : vector<14x64xf32>
    %5 = tpu.matmul %3, %4, %cst {dimension_numbers = #tpu.dot_dimension_numbers<[1], [0], [0], [1], [0, 0, 1, 1], [], []>} : vector<14x32xf32>, vector<32x64xf32>, vector<14x64xf32> -> vector<14x64xf32>
    %c0_9 = arith.constant 0 : index
    %c0_10 = arith.constant 0 : index
    %6 = vector.load %arg5[%c0_9, %c0_10] : memref<14x1xf32, #tpu.memory_space<vmem>>, vector<14x1xf32>
    %7 = math.tanh %5 : vector<14x64xf32>
    %8 = vector.broadcast %6 : vector<14x1xf32> to vector<14x64xf32>
    %9 = arith.mulf %8, %7 : vector<14x64xf32>
    %cst_11 = arith.constant 0.000000e+00 : f32
    %10 = vector.broadcast %cst_11 : f32 to vector<14x32xf32>
    %c0_12 = arith.constant 0 : index
    %c0_13 = arith.constant 0 : index
    %11 = vector.load %arg6[%c0_12, %c0_13] : memref<8x14xf32, #tpu.memory_space<vmem>>, vector<8x14xf32>
    %c0_14 = arith.constant 0 : index
    %c0_15 = arith.constant 0 : index
    %12 = vector.load %arg7[%c0_14, %c0_15] : memref<14x8xf32, #tpu.memory_space<vmem>>, vector<14x8xf32>
    %c0_16 = arith.constant 0 : index
    %c0_17 = arith.constant 0 : index
    %13 = vector.load %arg8[%c0_16, %c0_17] : memref<8x14xf32, #tpu.memory_space<vmem>>, vector<8x14xf32>
    %c0_18 = arith.constant 0 : index
    %c0_19 = arith.constant 0 : index
    %14 = vector.load %arg9[%c0_18, %c0_19] : memref<8x14xf32, #tpu.memory_space<vmem>>, vector<8x14xf32>
    %c0_20 = arith.constant 0 : index
    %c0_21 = arith.constant 0 : index
    %15 = vector.load %arg10[%c0_20, %c0_21] : memref<14x8xf32, #tpu.memory_space<vmem>>, vector<14x8xf32>
    %c0_22 = arith.constant 0 : index
    %c0_23 = arith.constant 0 : index
    %16 = vector.load %arg11[%c0_22, %c0_23] : memref<14x8xf32, #tpu.memory_space<vmem>>, vector<14x8xf32>
    %c0_24 = arith.constant 0 : index
    %c0_25 = arith.constant 0 : index
    %17 = vector.load %arg12[%c0_24, %c0_25] : memref<8x14xf32, #tpu.memory_space<vmem>>, vector<8x14xf32>
    %c0_26 = arith.constant 0 : index
    %c0_27 = arith.constant 0 : index
    %18 = vector.load %arg13[%c0_26, %c0_27] : memref<14x8xf32, #tpu.memory_space<vmem>>, vector<14x8xf32>
    %c0_28 = arith.constant 0 : index
    %c0_29 = arith.constant 0 : index
    %19 = vector.load %arg14[%c0_28, %c0_29] : memref<8x14xf32, #tpu.memory_space<vmem>>, vector<8x14xf32>
    %c0_30 = arith.constant 0 : index
    %c0_31 = arith.constant 0 : index
    %20 = vector.load %arg15[%c0_30, %c0_31] : memref<8x14xf32, #tpu.memory_space<vmem>>, vector<8x14xf32>
    %c0_32 = arith.constant 0 : index
    %c0_33 = arith.constant 0 : index
    %21 = vector.load %arg16[%c0_32, %c0_33] : memref<14x8xf32, #tpu.memory_space<vmem>>, vector<14x8xf32>
    %c0_34 = arith.constant 0 : index
    %c0_35 = arith.constant 0 : index
    %22 = vector.load %arg17[%c0_34, %c0_35] : memref<14x8xf32, #tpu.memory_space<vmem>>, vector<14x8xf32>
    %cst_36 = arith.constant dense<0.000000e+00> : vector<8x64xf32>
    %23 = tpu.matmul %11, %5, %cst_36 {dimension_numbers = #tpu.dot_dimension_numbers<[1], [0], [0], [1], [0, 0, 1, 1], [], []>} : vector<8x14xf32>, vector<14x64xf32>, vector<8x64xf32> -> vector<8x64xf32>
    %cst_37 = arith.constant dense<0.000000e+00> : vector<8x128xf32>
    %24 = tpu.matmul %23, %0, %cst_37 {dimension_numbers = #tpu.dot_dimension_numbers<[1], [0], [0], [1], [0, 0, 1, 1], [], []>} : vector<8x64xf32>, vector<64x128xf32>, vector<8x128xf32> -> vector<8x128xf32>
    %cst_38 = arith.constant dense<0.000000e+00> : vector<8x64xf32>
    %25 = tpu.matmul %13, %9, %cst_38 {dimension_numbers = #tpu.dot_dimension_numbers<[1], [0], [0], [1], [0, 0, 1, 1], [], []>} : vector<8x14xf32>, vector<14x64xf32>, vector<8x64xf32> -> vector<8x64xf32>
    %cst_39 = arith.constant dense<0.000000e+00> : vector<8x64xf32>
    %26 = tpu.matmul %14, %9, %cst_39 {dimension_numbers = #tpu.dot_dimension_numbers<[1], [0], [0], [1], [0, 0, 1, 1], [], []>} : vector<8x14xf32>, vector<14x64xf32>, vector<8x64xf32> -> vector<8x64xf32>
    %27 = vector.extract_strided_slice %25 {offsets = [0, 0], sizes = [8, 32], strides = [1, 1]} : vector<8x64xf32> to vector<8x32xf32>
    %28 = vector.extract_strided_slice %26 {offsets = [0, 0], sizes = [8, 32], strides = [1, 1]} : vector<8x64xf32> to vector<8x32xf32>
    %29 = vector.extract_strided_slice %25 {offsets = [0, 32], sizes = [8, 32], strides = [1, 1]} : vector<8x64xf32> to vector<8x32xf32>
    %30 = vector.extract_strided_slice %26 {offsets = [0, 32], sizes = [8, 32], strides = [1, 1]} : vector<8x64xf32> to vector<8x32xf32>
    %31 = arith.addf %27, %28 : vector<8x32xf32>
    %cst_40 = arith.constant dense<0.000000e+00> : vector<8x128xf32>
    %32 = tpu.matmul %31, %1, %cst_40 {dimension_numbers = #tpu.dot_dimension_numbers<[1], [0], [0], [1], [0, 0, 1, 1], [], []>} : vector<8x32xf32>, vector<32x128xf32>, vector<8x128xf32> -> vector<8x128xf32>
    %33 = vector.broadcast %2 : vector<1x128xf32> to vector<8x128xf32>
    %34 = arith.addf %32, %33 : vector<8x128xf32>
    %35 = vector.extract_strided_slice %24 {offsets = [0, 0], sizes = [8, 32], strides = [1, 1]} : vector<8x128xf32> to vector<8x32xf32>
    %36 = vector.extract_strided_slice %34 {offsets = [0, 0], sizes = [8, 32], strides = [1, 1]} : vector<8x128xf32> to vector<8x32xf32>
    %37 = arith.addf %35, %36 : vector<8x32xf32>
    %38 = arith.negf %37 : vector<8x32xf32>
    %39 = math.exp %38 : vector<8x32xf32>
    %cst_41 = arith.constant 1.000000e+00 : f32
    %40 = vector.broadcast %cst_41 : f32 to vector<8x32xf32>
    %41 = arith.addf %40, %39 : vector<8x32xf32>
    %42 = arith.divf %40, %41 : vector<8x32xf32>
    %43 = vector.extract_strided_slice %24 {offsets = [0, 64], sizes = [8, 32], strides = [1, 1]} : vector<8x128xf32> to vector<8x32xf32>
    %44 = vector.extract_strided_slice %34 {offsets = [0, 64], sizes = [8, 32], strides = [1, 1]} : vector<8x128xf32> to vector<8x32xf32>
    %45 = arith.addf %43, %44 : vector<8x32xf32>
    %46 = arith.negf %45 : vector<8x32xf32>
    %47 = math.exp %46 : vector<8x32xf32>
    %cst_42 = arith.constant 1.000000e+00 : f32
    %48 = vector.broadcast %cst_42 : f32 to vector<8x32xf32>
    %49 = arith.addf %48, %47 : vector<8x32xf32>
    %50 = arith.divf %48, %49 : vector<8x32xf32>
    %51 = vector.extract_strided_slice %34 {offsets = [0, 96], sizes = [8, 32], strides = [1, 1]} : vector<8x128xf32> to vector<8x32xf32>
    %52 = vector.extract_strided_slice %24 {offsets = [0, 96], sizes = [8, 32], strides = [1, 1]} : vector<8x128xf32> to vector<8x32xf32>
    %53 = arith.addf %52, %51 : vector<8x32xf32>
    %54 = math.tanh %53 : vector<8x32xf32>
    %55 = tpu.concatenate %27, %28 in 0 : vector<8x32xf32>, vector<8x32xf32> -> vector<16x32xf32>
    %cst_43 = arith.constant dense<0.000000e+00> : vector<16x128xf32>
    %56 = tpu.matmul %55, %1, %cst_43 {dimension_numbers = #tpu.dot_dimension_numbers<[1], [0], [0], [1], [0, 0, 1, 1], [], []>} : vector<16x32xf32>, vector<32x128xf32>, vector<16x128xf32> -> vector<16x128xf32>
    %57 = vector.broadcast %2 : vector<1x128xf32> to vector<16x128xf32>
    %58 = arith.addf %56, %57 : vector<16x128xf32>
    %59 = vector.extract_strided_slice %24 {offsets = [0, 32], sizes = [8, 32], strides = [1, 1]} : vector<8x128xf32> to vector<8x32xf32>
    %cst_44 = arith.constant 0.000000e+00 : f32
    %60 = vector.broadcast %cst_44 : f32 to vector<8x32xf32>
    %61 = vector.extract_strided_slice %58 {offsets = [0, 0], sizes = [8, 128], strides = [1, 1]} : vector<16x128xf32> to vector<8x128xf32>
    %62 = vector.extract_strided_slice %61 {offsets = [0, 32], sizes = [8, 32], strides = [1, 1]} : vector<8x128xf32> to vector<8x32xf32>
    %63 = arith.addf %59, %62 : vector<8x32xf32>
    %64 = arith.negf %63 : vector<8x32xf32>
    %65 = math.exp %64 : vector<8x32xf32>
    %cst_45 = arith.constant 1.000000e+00 : f32
    %66 = vector.broadcast %cst_45 : f32 to vector<8x32xf32>
    %67 = arith.addf %66, %65 : vector<8x32xf32>
    %68 = arith.divf %66, %67 : vector<8x32xf32>
    %69 = arith.mulf %68, %29 : vector<8x32xf32>
    %70 = arith.addf %60, %69 : vector<8x32xf32>
    %71 = vector.extract_strided_slice %58 {offsets = [8, 0], sizes = [8, 128], strides = [1, 1]} : vector<16x128xf32> to vector<8x128xf32>
    %72 = vector.extract_strided_slice %71 {offsets = [0, 32], sizes = [8, 32], strides = [1, 1]} : vector<8x128xf32> to vector<8x32xf32>
    %73 = arith.addf %59, %72 : vector<8x32xf32>
    %74 = arith.negf %73 : vector<8x32xf32>
    %75 = math.exp %74 : vector<8x32xf32>
    %cst_46 = arith.constant 1.000000e+00 : f32
    %76 = vector.broadcast %cst_46 : f32 to vector<8x32xf32>
    %77 = arith.addf %76, %75 : vector<8x32xf32>
    %78 = arith.divf %76, %77 : vector<8x32xf32>
    %79 = arith.mulf %78, %30 : vector<8x32xf32>
    %80 = arith.addf %70, %79 : vector<8x32xf32>
    %81 = arith.mulf %42, %54 : vector<8x32xf32>
    %82 = arith.addf %81, %80 : vector<8x32xf32>
    %83 = math.tanh %82 : vector<8x32xf32>
    %84 = arith.mulf %50, %83 : vector<8x32xf32>
    %85 = tpu.concatenate %84, %82 in 1 : vector<8x32xf32>, vector<8x32xf32> -> vector<8x64xf32>
    %cst_47 = arith.constant dense<0.000000e+00> : vector<14xf32>
    %86 = vector.multi_reduction <add>, %12, %cst_47 [1] : vector<14x8xf32> to vector<14xf32>
    %87 = vector.shape_cast %86 : vector<14xf32> to vector<14x1xf32>
    %cst_48 = arith.constant 1.000000e+00 : f32
    %88 = vector.broadcast %cst_48 : f32 to vector<14x1xf32>
    %89 = arith.subf %88, %87 : vector<14x1xf32>
    %90 = vector.broadcast %89 : vector<14x1xf32> to vector<14x64xf32>
    %91 = arith.mulf %9, %90 : vector<14x64xf32>
    %cst_49 = arith.constant dense<0.000000e+00> : vector<14x64xf32>
    %92 = tpu.matmul %12, %85, %cst_49 {dimension_numbers = #tpu.dot_dimension_numbers<[1], [0], [0], [1], [0, 0, 1, 1], [], []>} : vector<14x8xf32>, vector<8x64xf32>, vector<14x64xf32> -> vector<14x64xf32>
    %93 = arith.addf %91, %92 : vector<14x64xf32>
    %cst_50 = arith.constant 1.000000e+00 : f32
    %94 = vector.broadcast %cst_50 : f32 to vector<14x1xf32>
    %95 = arith.subf %94, %87 : vector<14x1xf32>
    %96 = vector.broadcast %95 : vector<14x1xf32> to vector<14x32xf32>
    %97 = arith.mulf %10, %96 : vector<14x32xf32>
    %98 = math.tanh %51 : vector<8x32xf32>
    %cst_51 = arith.constant dense<0.000000e+00> : vector<14x32xf32>
    %99 = tpu.matmul %12, %98, %cst_51 {dimension_numbers = #tpu.dot_dimension_numbers<[1], [0], [0], [1], [0, 0, 1, 1], [], []>} : vector<14x8xf32>, vector<8x32xf32>, vector<14x32xf32> -> vector<14x32xf32>
    %100 = arith.addf %97, %99 : vector<14x32xf32>
    %cst_52 = arith.constant dense<0.000000e+00> : vector<8x64xf32>
    %101 = tpu.matmul %17, %5, %cst_52 {dimension_numbers = #tpu.dot_dimension_numbers<[1], [0], [0], [1], [0, 0, 1, 1], [], []>} : vector<8x14xf32>, vector<14x64xf32>, vector<8x64xf32> -> vector<8x64xf32>
    %cst_53 = arith.constant dense<0.000000e+00> : vector<8x128xf32>
    %102 = tpu.matmul %101, %0, %cst_53 {dimension_numbers = #tpu.dot_dimension_numbers<[1], [0], [0], [1], [0, 0, 1, 1], [], []>} : vector<8x64xf32>, vector<64x128xf32>, vector<8x128xf32> -> vector<8x128xf32>
    %cst_54 = arith.constant dense<0.000000e+00> : vector<8x64xf32>
    %103 = tpu.matmul %19, %93, %cst_54 {dimension_numbers = #tpu.dot_dimension_numbers<[1], [0], [0], [1], [0, 0, 1, 1], [], []>} : vector<8x14xf32>, vector<14x64xf32>, vector<8x64xf32> -> vector<8x64xf32>
    %cst_55 = arith.constant dense<0.000000e+00> : vector<8x64xf32>
    %104 = tpu.matmul %20, %93, %cst_55 {dimension_numbers = #tpu.dot_dimension_numbers<[1], [0], [0], [1], [0, 0, 1, 1], [], []>} : vector<8x14xf32>, vector<14x64xf32>, vector<8x64xf32> -> vector<8x64xf32>
    %105 = vector.extract_strided_slice %103 {offsets = [0, 0], sizes = [8, 32], strides = [1, 1]} : vector<8x64xf32> to vector<8x32xf32>
    %106 = vector.extract_strided_slice %104 {offsets = [0, 0], sizes = [8, 32], strides = [1, 1]} : vector<8x64xf32> to vector<8x32xf32>
    %107 = vector.extract_strided_slice %103 {offsets = [0, 32], sizes = [8, 32], strides = [1, 1]} : vector<8x64xf32> to vector<8x32xf32>
    %108 = vector.extract_strided_slice %104 {offsets = [0, 32], sizes = [8, 32], strides = [1, 1]} : vector<8x64xf32> to vector<8x32xf32>
    %109 = arith.addf %105, %106 : vector<8x32xf32>
    %cst_56 = arith.constant dense<0.000000e+00> : vector<8x128xf32>
    %110 = tpu.matmul %109, %1, %cst_56 {dimension_numbers = #tpu.dot_dimension_numbers<[1], [0], [0], [1], [0, 0, 1, 1], [], []>} : vector<8x32xf32>, vector<32x128xf32>, vector<8x128xf32> -> vector<8x128xf32>
    %111 = vector.broadcast %2 : vector<1x128xf32> to vector<8x128xf32>
    %112 = arith.addf %110, %111 : vector<8x128xf32>
    %113 = vector.extract_strided_slice %102 {offsets = [0, 0], sizes = [8, 32], strides = [1, 1]} : vector<8x128xf32> to vector<8x32xf32>
    %114 = vector.extract_strided_slice %112 {offsets = [0, 0], sizes = [8, 32], strides = [1, 1]} : vector<8x128xf32> to vector<8x32xf32>
    %115 = arith.addf %113, %114 : vector<8x32xf32>
    %116 = arith.negf %115 : vector<8x32xf32>
    %117 = math.exp %116 : vector<8x32xf32>
    %cst_57 = arith.constant 1.000000e+00 : f32
    %118 = vector.broadcast %cst_57 : f32 to vector<8x32xf32>
    %119 = arith.addf %118, %117 : vector<8x32xf32>
    %120 = arith.divf %118, %119 : vector<8x32xf32>
    %121 = vector.extract_strided_slice %102 {offsets = [0, 64], sizes = [8, 32], strides = [1, 1]} : vector<8x128xf32> to vector<8x32xf32>
    %122 = vector.extract_strided_slice %112 {offsets = [0, 64], sizes = [8, 32], strides = [1, 1]} : vector<8x128xf32> to vector<8x32xf32>
    %123 = arith.addf %121, %122 : vector<8x32xf32>
    %124 = arith.negf %123 : vector<8x32xf32>
    %125 = math.exp %124 : vector<8x32xf32>
    %cst_58 = arith.constant 1.000000e+00 : f32
    %126 = vector.broadcast %cst_58 : f32 to vector<8x32xf32>
    %127 = arith.addf %126, %125 : vector<8x32xf32>
    %128 = arith.divf %126, %127 : vector<8x32xf32>
    %129 = vector.extract_strided_slice %112 {offsets = [0, 96], sizes = [8, 32], strides = [1, 1]} : vector<8x128xf32> to vector<8x32xf32>
    %130 = vector.extract_strided_slice %102 {offsets = [0, 96], sizes = [8, 32], strides = [1, 1]} : vector<8x128xf32> to vector<8x32xf32>
    %131 = arith.addf %130, %129 : vector<8x32xf32>
    %132 = math.tanh %131 : vector<8x32xf32>
    %133 = tpu.concatenate %105, %106 in 0 : vector<8x32xf32>, vector<8x32xf32> -> vector<16x32xf32>
    %cst_59 = arith.constant dense<0.000000e+00> : vector<16x128xf32>
    %134 = tpu.matmul %133, %1, %cst_59 {dimension_numbers = #tpu.dot_dimension_numbers<[1], [0], [0], [1], [0, 0, 1, 1], [], []>} : vector<16x32xf32>, vector<32x128xf32>, vector<16x128xf32> -> vector<16x128xf32>
    %135 = vector.broadcast %2 : vector<1x128xf32> to vector<16x128xf32>
    %136 = arith.addf %134, %135 : vector<16x128xf32>
    %137 = vector.extract_strided_slice %102 {offsets = [0, 32], sizes = [8, 32], strides = [1, 1]} : vector<8x128xf32> to vector<8x32xf32>
    %cst_60 = arith.constant 0.000000e+00 : f32
    %138 = vector.broadcast %cst_60 : f32 to vector<8x32xf32>
    %139 = vector.extract_strided_slice %136 {offsets = [0, 0], sizes = [8, 128], strides = [1, 1]} : vector<16x128xf32> to vector<8x128xf32>
    %140 = vector.extract_strided_slice %139 {offsets = [0, 32], sizes = [8, 32], strides = [1, 1]} : vector<8x128xf32> to vector<8x32xf32>
    %141 = arith.addf %137, %140 : vector<8x32xf32>
    %142 = arith.negf %141 : vector<8x32xf32>
    %143 = math.exp %142 : vector<8x32xf32>
    %cst_61 = arith.constant 1.000000e+00 : f32
    %144 = vector.broadcast %cst_61 : f32 to vector<8x32xf32>
    %145 = arith.addf %144, %143 : vector<8x32xf32>
    %146 = arith.divf %144, %145 : vector<8x32xf32>
    %147 = arith.mulf %146, %107 : vector<8x32xf32>
    %148 = arith.addf %138, %147 : vector<8x32xf32>
    %149 = vector.extract_strided_slice %136 {offsets = [8, 0], sizes = [8, 128], strides = [1, 1]} : vector<16x128xf32> to vector<8x128xf32>
    %150 = vector.extract_strided_slice %149 {offsets = [0, 32], sizes = [8, 32], strides = [1, 1]} : vector<8x128xf32> to vector<8x32xf32>
    %151 = arith.addf %137, %150 : vector<8x32xf32>
    %152 = arith.negf %151 : vector<8x32xf32>
    %153 = math.exp %152 : vector<8x32xf32>
    %cst_62 = arith.constant 1.000000e+00 : f32
    %154 = vector.broadcast %cst_62 : f32 to vector<8x32xf32>
    %155 = arith.addf %154, %153 : vector<8x32xf32>
    %156 = arith.divf %154, %155 : vector<8x32xf32>
    %157 = arith.mulf %156, %108 : vector<8x32xf32>
    %158 = arith.addf %148, %157 : vector<8x32xf32>
    %159 = arith.mulf %120, %132 : vector<8x32xf32>
    %160 = arith.addf %159, %158 : vector<8x32xf32>
    %161 = math.tanh %160 : vector<8x32xf32>
    %162 = arith.mulf %128, %161 : vector<8x32xf32>
    %163 = tpu.concatenate %162, %160 in 1 : vector<8x32xf32>, vector<8x32xf32> -> vector<8x64xf32>
    %cst_63 = arith.constant dense<0.000000e+00> : vector<14xf32>
    %164 = vector.multi_reduction <add>, %18, %cst_63 [1] : vector<14x8xf32> to vector<14xf32>
    %165 = vector.shape_cast %164 : vector<14xf32> to vector<14x1xf32>
    %cst_64 = arith.constant 1.000000e+00 : f32
    %166 = vector.broadcast %cst_64 : f32 to vector<14x1xf32>
    %167 = arith.subf %166, %165 : vector<14x1xf32>
    %168 = vector.broadcast %167 : vector<14x1xf32> to vector<14x64xf32>
    %169 = arith.mulf %93, %168 : vector<14x64xf32>
    %cst_65 = arith.constant dense<0.000000e+00> : vector<14x64xf32>
    %170 = tpu.matmul %18, %163, %cst_65 {dimension_numbers = #tpu.dot_dimension_numbers<[1], [0], [0], [1], [0, 0, 1, 1], [], []>} : vector<14x8xf32>, vector<8x64xf32>, vector<14x64xf32> -> vector<14x64xf32>
    %171 = arith.addf %169, %170 : vector<14x64xf32>
    %cst_66 = arith.constant 1.000000e+00 : f32
    %172 = vector.broadcast %cst_66 : f32 to vector<14x1xf32>
    %173 = arith.subf %172, %165 : vector<14x1xf32>
    %174 = vector.broadcast %173 : vector<14x1xf32> to vector<14x32xf32>
    %175 = arith.mulf %100, %174 : vector<14x32xf32>
    %176 = math.tanh %129 : vector<8x32xf32>
    %cst_67 = arith.constant dense<0.000000e+00> : vector<14x32xf32>
    %177 = tpu.matmul %18, %176, %cst_67 {dimension_numbers = #tpu.dot_dimension_numbers<[1], [0], [0], [1], [0, 0, 1, 1], [], []>} : vector<14x8xf32>, vector<8x32xf32>, vector<14x32xf32> -> vector<14x32xf32>
    %178 = arith.addf %175, %177 : vector<14x32xf32>
    %cst_68 = arith.constant 0.000000e+00 : f32
    %179 = vector.broadcast %cst_68 : f32 to vector<14x64xf32>
    %cst_69 = arith.constant 0.000000e+00 : f32
    %180 = vector.broadcast %cst_69 : f32 to vector<14x32xf32>
    %cst_70 = arith.constant dense<0.000000e+00> : vector<8x64xf32>
    %181 = tpu.matmul %17, %5, %cst_70 {dimension_numbers = #tpu.dot_dimension_numbers<[1], [0], [0], [1], [0, 0, 1, 1], [], []>} : vector<8x14xf32>, vector<14x64xf32>, vector<8x64xf32> -> vector<8x64xf32>
    %cst_71 = arith.constant dense<0.000000e+00> : vector<8x128xf32>
    %182 = tpu.matmul %181, %0, %cst_71 {dimension_numbers = #tpu.dot_dimension_numbers<[1], [0], [0], [1], [0, 0, 1, 1], [], []>} : vector<8x64xf32>, vector<64x128xf32>, vector<8x128xf32> -> vector<8x128xf32>
    %cst_72 = arith.constant dense<0.000000e+00> : vector<8x64xf32>
    %183 = tpu.matmul %17, %179, %cst_72 {dimension_numbers = #tpu.dot_dimension_numbers<[1], [0], [0], [1], [0, 0, 1, 1], [], []>} : vector<8x14xf32>, vector<14x64xf32>, vector<8x64xf32> -> vector<8x64xf32>
    %184 = vector.extract_strided_slice %183 {offsets = [0, 0], sizes = [8, 32], strides = [1, 1]} : vector<8x64xf32> to vector<8x32xf32>
    %185 = vector.extract_strided_slice %183 {offsets = [0, 32], sizes = [8, 32], strides = [1, 1]} : vector<8x64xf32> to vector<8x32xf32>
    %cst_73 = arith.constant dense<0.000000e+00> : vector<8x64xf32>
    %186 = tpu.matmul %19, %171, %cst_73 {dimension_numbers = #tpu.dot_dimension_numbers<[1], [0], [0], [1], [0, 0, 1, 1], [], []>} : vector<8x14xf32>, vector<14x64xf32>, vector<8x64xf32> -> vector<8x64xf32>
    %cst_74 = arith.constant dense<0.000000e+00> : vector<8x64xf32>
    %187 = tpu.matmul %20, %171, %cst_74 {dimension_numbers = #tpu.dot_dimension_numbers<[1], [0], [0], [1], [0, 0, 1, 1], [], []>} : vector<8x14xf32>, vector<14x64xf32>, vector<8x64xf32> -> vector<8x64xf32>
    %188 = vector.extract_strided_slice %186 {offsets = [0, 0], sizes = [8, 32], strides = [1, 1]} : vector<8x64xf32> to vector<8x32xf32>
    %189 = vector.extract_strided_slice %187 {offsets = [0, 0], sizes = [8, 32], strides = [1, 1]} : vector<8x64xf32> to vector<8x32xf32>
    %190 = vector.extract_strided_slice %186 {offsets = [0, 32], sizes = [8, 32], strides = [1, 1]} : vector<8x64xf32> to vector<8x32xf32>
    %191 = vector.extract_strided_slice %187 {offsets = [0, 32], sizes = [8, 32], strides = [1, 1]} : vector<8x64xf32> to vector<8x32xf32>
    %192 = arith.addf %188, %189 : vector<8x32xf32>
    %193 = tpu.concatenate %188, %189, %184 in 0 : vector<8x32xf32>, vector<8x32xf32>, vector<8x32xf32> -> vector<24x32xf32>
    %cst_75 = arith.constant dense<0.000000e+00> : vector<24x128xf32>
    %194 = tpu.matmul %193, %1, %cst_75 {dimension_numbers = #tpu.dot_dimension_numbers<[1], [0], [0], [1], [0, 0, 1, 1], [], []>} : vector<24x32xf32>, vector<32x128xf32>, vector<24x128xf32> -> vector<24x128xf32>
    %195 = vector.broadcast %2 : vector<1x128xf32> to vector<24x128xf32>
    %196 = arith.addf %194, %195 : vector<24x128xf32>
    %197 = vector.extract_strided_slice %182 {offsets = [0, 32], sizes = [8, 32], strides = [1, 1]} : vector<8x128xf32> to vector<8x32xf32>
    %198 = vector.extract_strided_slice %196 {offsets = [0, 0], sizes = [8, 128], strides = [1, 1]} : vector<24x128xf32> to vector<8x128xf32>
    %199 = vector.extract_strided_slice %198 {offsets = [0, 32], sizes = [8, 32], strides = [1, 1]} : vector<8x128xf32> to vector<8x32xf32>
    %200 = arith.addf %197, %199 : vector<8x32xf32>
    %201 = arith.negf %200 : vector<8x32xf32>
    %202 = math.exp %201 : vector<8x32xf32>
    %cst_76 = arith.constant 1.000000e+00 : f32
    %203 = vector.broadcast %cst_76 : f32 to vector<8x32xf32>
    %204 = arith.addf %203, %202 : vector<8x32xf32>
    %205 = arith.divf %203, %204 : vector<8x32xf32>
    %206 = vector.extract_strided_slice %196 {offsets = [8, 0], sizes = [8, 128], strides = [1, 1]} : vector<24x128xf32> to vector<8x128xf32>
    %207 = vector.extract_strided_slice %206 {offsets = [0, 32], sizes = [8, 32], strides = [1, 1]} : vector<8x128xf32> to vector<8x32xf32>
    %208 = arith.addf %197, %207 : vector<8x32xf32>
    %209 = arith.negf %208 : vector<8x32xf32>
    %210 = math.exp %209 : vector<8x32xf32>
    %cst_77 = arith.constant 1.000000e+00 : f32
    %211 = vector.broadcast %cst_77 : f32 to vector<8x32xf32>
    %212 = arith.addf %211, %210 : vector<8x32xf32>
    %213 = arith.divf %211, %212 : vector<8x32xf32>
    %214 = vector.extract_strided_slice %196 {offsets = [16, 0], sizes = [8, 128], strides = [1, 1]} : vector<24x128xf32> to vector<8x128xf32>
    %215 = vector.extract_strided_slice %214 {offsets = [0, 32], sizes = [8, 32], strides = [1, 1]} : vector<8x128xf32> to vector<8x32xf32>
    %216 = arith.addf %197, %215 : vector<8x32xf32>
    %217 = arith.negf %216 : vector<8x32xf32>
    %218 = math.exp %217 : vector<8x32xf32>
    %cst_78 = arith.constant 1.000000e+00 : f32
    %219 = vector.broadcast %cst_78 : f32 to vector<8x32xf32>
    %220 = arith.addf %219, %218 : vector<8x32xf32>
    %221 = arith.divf %219, %220 : vector<8x32xf32>
    %222 = arith.mulf %205, %190 : vector<8x32xf32>
    %223 = arith.mulf %213, %191 : vector<8x32xf32>
    %224 = arith.addf %222, %223 : vector<8x32xf32>
    %225 = arith.mulf %221, %185 : vector<8x32xf32>
    %226 = arith.subf %192, %188 : vector<8x32xf32>
    %227 = arith.addf %226, %184 : vector<8x32xf32>
    %228 = arith.subf %192, %189 : vector<8x32xf32>
    %229 = arith.addf %228, %184 : vector<8x32xf32>
    %230 = tpu.concatenate %227, %229 in 0 : vector<8x32xf32>, vector<8x32xf32> -> vector<16x32xf32>
    %cst_79 = arith.constant dense<0.000000e+00> : vector<16x128xf32>
    %231 = tpu.matmul %230, %1, %cst_79 {dimension_numbers = #tpu.dot_dimension_numbers<[1], [0], [0], [1], [0, 0, 1, 1], [], []>} : vector<16x32xf32>, vector<32x128xf32>, vector<16x128xf32> -> vector<16x128xf32>
    %232 = vector.broadcast %2 : vector<1x128xf32> to vector<16x128xf32>
    %233 = arith.addf %231, %232 : vector<16x128xf32>
    %234 = vector.extract_strided_slice %182 {offsets = [0, 0], sizes = [8, 32], strides = [1, 1]} : vector<8x128xf32> to vector<8x32xf32>
    %235 = vector.extract_strided_slice %182 {offsets = [0, 64], sizes = [8, 32], strides = [1, 1]} : vector<8x128xf32> to vector<8x32xf32>
    %236 = vector.extract_strided_slice %182 {offsets = [0, 96], sizes = [8, 32], strides = [1, 1]} : vector<8x128xf32> to vector<8x32xf32>
    %237 = vector.extract_strided_slice %233 {offsets = [0, 0], sizes = [8, 128], strides = [1, 1]} : vector<16x128xf32> to vector<8x128xf32>
    %238 = vector.extract_strided_slice %237 {offsets = [0, 0], sizes = [8, 32], strides = [1, 1]} : vector<8x128xf32> to vector<8x32xf32>
    %239 = arith.addf %234, %238 : vector<8x32xf32>
    %240 = arith.negf %239 : vector<8x32xf32>
    %241 = math.exp %240 : vector<8x32xf32>
    %cst_80 = arith.constant 1.000000e+00 : f32
    %242 = vector.broadcast %cst_80 : f32 to vector<8x32xf32>
    %243 = arith.addf %242, %241 : vector<8x32xf32>
    %244 = arith.divf %242, %243 : vector<8x32xf32>
    %245 = vector.extract_strided_slice %237 {offsets = [0, 64], sizes = [8, 32], strides = [1, 1]} : vector<8x128xf32> to vector<8x32xf32>
    %246 = arith.addf %235, %245 : vector<8x32xf32>
    %247 = arith.negf %246 : vector<8x32xf32>
    %248 = math.exp %247 : vector<8x32xf32>
    %cst_81 = arith.constant 1.000000e+00 : f32
    %249 = vector.broadcast %cst_81 : f32 to vector<8x32xf32>
    %250 = arith.addf %249, %248 : vector<8x32xf32>
    %251 = arith.divf %249, %250 : vector<8x32xf32>
    %252 = vector.extract_strided_slice %237 {offsets = [0, 96], sizes = [8, 32], strides = [1, 1]} : vector<8x128xf32> to vector<8x32xf32>
    %253 = arith.addf %236, %252 : vector<8x32xf32>
    %254 = math.tanh %253 : vector<8x32xf32>
    %255 = arith.mulf %244, %254 : vector<8x32xf32>
    %256 = arith.subf %224, %222 : vector<8x32xf32>
    %257 = arith.addf %256, %225 : vector<8x32xf32>
    %258 = arith.addf %255, %257 : vector<8x32xf32>
    %259 = math.tanh %258 : vector<8x32xf32>
    %260 = arith.mulf %251, %259 : vector<8x32xf32>
    %261 = tpu.concatenate %260, %258 in 1 : vector<8x32xf32>, vector<8x32xf32> -> vector<8x64xf32>
    %cst_82 = arith.constant dense<0.000000e+00> : vector<14xf32>
    %262 = vector.multi_reduction <add>, %21, %cst_82 [1] : vector<14x8xf32> to vector<14xf32>
    %263 = vector.shape_cast %262 : vector<14xf32> to vector<14x1xf32>
    %cst_83 = arith.constant 1.000000e+00 : f32
    %264 = vector.broadcast %cst_83 : f32 to vector<14x1xf32>
    %265 = arith.subf %264, %263 : vector<14x1xf32>
    %266 = vector.broadcast %265 : vector<14x1xf32> to vector<14x64xf32>
    %267 = arith.mulf %179, %266 : vector<14x64xf32>
    %cst_84 = arith.constant dense<0.000000e+00> : vector<14x64xf32>
    %268 = tpu.matmul %21, %261, %cst_84 {dimension_numbers = #tpu.dot_dimension_numbers<[1], [0], [0], [1], [0, 0, 1, 1], [], []>} : vector<14x8xf32>, vector<8x64xf32>, vector<14x64xf32> -> vector<14x64xf32>
    %269 = arith.addf %267, %268 : vector<14x64xf32>
    %cst_85 = arith.constant 1.000000e+00 : f32
    %270 = vector.broadcast %cst_85 : f32 to vector<14x1xf32>
    %271 = arith.subf %270, %263 : vector<14x1xf32>
    %272 = vector.broadcast %271 : vector<14x1xf32> to vector<14x32xf32>
    %273 = arith.mulf %180, %272 : vector<14x32xf32>
    %cst_86 = arith.constant dense<0.000000e+00> : vector<14x32xf32>
    %274 = tpu.matmul %21, %260, %cst_86 {dimension_numbers = #tpu.dot_dimension_numbers<[1], [0], [0], [1], [0, 0, 1, 1], [], []>} : vector<14x8xf32>, vector<8x32xf32>, vector<14x32xf32> -> vector<14x32xf32>
    %275 = arith.addf %273, %274 : vector<14x32xf32>
    %276 = vector.extract_strided_slice %233 {offsets = [8, 0], sizes = [8, 128], strides = [1, 1]} : vector<16x128xf32> to vector<8x128xf32>
    %277 = vector.extract_strided_slice %276 {offsets = [0, 0], sizes = [8, 32], strides = [1, 1]} : vector<8x128xf32> to vector<8x32xf32>
    %278 = arith.addf %234, %277 : vector<8x32xf32>
    %279 = arith.negf %278 : vector<8x32xf32>
    %280 = math.exp %279 : vector<8x32xf32>
    %cst_87 = arith.constant 1.000000e+00 : f32
    %281 = vector.broadcast %cst_87 : f32 to vector<8x32xf32>
    %282 = arith.addf %281, %280 : vector<8x32xf32>
    %283 = arith.divf %281, %282 : vector<8x32xf32>
    %284 = vector.extract_strided_slice %276 {offsets = [0, 64], sizes = [8, 32], strides = [1, 1]} : vector<8x128xf32> to vector<8x32xf32>
    %285 = arith.addf %235, %284 : vector<8x32xf32>
    %286 = arith.negf %285 : vector<8x32xf32>
    %287 = math.exp %286 : vector<8x32xf32>
    %cst_88 = arith.constant 1.000000e+00 : f32
    %288 = vector.broadcast %cst_88 : f32 to vector<8x32xf32>
    %289 = arith.addf %288, %287 : vector<8x32xf32>
    %290 = arith.divf %288, %289 : vector<8x32xf32>
    %291 = vector.extract_strided_slice %276 {offsets = [0, 96], sizes = [8, 32], strides = [1, 1]} : vector<8x128xf32> to vector<8x32xf32>
    %292 = arith.addf %236, %291 : vector<8x32xf32>
    %293 = math.tanh %292 : vector<8x32xf32>
    %294 = arith.mulf %283, %293 : vector<8x32xf32>
    %295 = arith.subf %224, %223 : vector<8x32xf32>
    %296 = arith.addf %295, %225 : vector<8x32xf32>
    %297 = arith.addf %294, %296 : vector<8x32xf32>
    %298 = math.tanh %297 : vector<8x32xf32>
    %299 = arith.mulf %290, %298 : vector<8x32xf32>
    %300 = tpu.concatenate %299, %297 in 1 : vector<8x32xf32>, vector<8x32xf32> -> vector<8x64xf32>
    %cst_89 = arith.constant dense<0.000000e+00> : vector<14xf32>
    %301 = vector.multi_reduction <add>, %22, %cst_89 [1] : vector<14x8xf32> to vector<14xf32>
    %302 = vector.shape_cast %301 : vector<14xf32> to vector<14x1xf32>
    %cst_90 = arith.constant 1.000000e+00 : f32
    %303 = vector.broadcast %cst_90 : f32 to vector<14x1xf32>
    %304 = arith.subf %303, %302 : vector<14x1xf32>
    %305 = vector.broadcast %304 : vector<14x1xf32> to vector<14x64xf32>
    %306 = arith.mulf %269, %305 : vector<14x64xf32>
    %cst_91 = arith.constant dense<0.000000e+00> : vector<14x64xf32>
    %307 = tpu.matmul %22, %300, %cst_91 {dimension_numbers = #tpu.dot_dimension_numbers<[1], [0], [0], [1], [0, 0, 1, 1], [], []>} : vector<14x8xf32>, vector<8x64xf32>, vector<14x64xf32> -> vector<14x64xf32>
    %308 = arith.addf %306, %307 : vector<14x64xf32>
    %cst_92 = arith.constant 1.000000e+00 : f32
    %309 = vector.broadcast %cst_92 : f32 to vector<14x1xf32>
    %310 = arith.subf %309, %302 : vector<14x1xf32>
    %311 = vector.broadcast %310 : vector<14x1xf32> to vector<14x32xf32>
    %312 = arith.mulf %275, %311 : vector<14x32xf32>
    %cst_93 = arith.constant dense<0.000000e+00> : vector<14x32xf32>
    %313 = tpu.matmul %22, %299, %cst_93 {dimension_numbers = #tpu.dot_dimension_numbers<[1], [0], [0], [1], [0, 0, 1, 1], [], []>} : vector<14x8xf32>, vector<8x32xf32>, vector<14x32xf32> -> vector<14x32xf32>
    %314 = arith.addf %312, %313 : vector<14x32xf32>
    %cst_94 = arith.constant dense<0.000000e+00> : vector<8x64xf32>
    %315 = tpu.matmul %11, %5, %cst_94 {dimension_numbers = #tpu.dot_dimension_numbers<[1], [0], [0], [1], [0, 0, 1, 1], [], []>} : vector<8x14xf32>, vector<14x64xf32>, vector<8x64xf32> -> vector<8x64xf32>
    %cst_95 = arith.constant dense<0.000000e+00> : vector<8x128xf32>
    %316 = tpu.matmul %315, %0, %cst_95 {dimension_numbers = #tpu.dot_dimension_numbers<[1], [0], [0], [1], [0, 0, 1, 1], [], []>} : vector<8x64xf32>, vector<64x128xf32>, vector<8x128xf32> -> vector<8x128xf32>
    %cst_96 = arith.constant dense<0.000000e+00> : vector<8x64xf32>
    %317 = tpu.matmul %11, %308, %cst_96 {dimension_numbers = #tpu.dot_dimension_numbers<[1], [0], [0], [1], [0, 0, 1, 1], [], []>} : vector<8x14xf32>, vector<14x64xf32>, vector<8x64xf32> -> vector<8x64xf32>
    %318 = vector.extract_strided_slice %317 {offsets = [0, 0], sizes = [8, 32], strides = [1, 1]} : vector<8x64xf32> to vector<8x32xf32>
    %319 = vector.extract_strided_slice %317 {offsets = [0, 32], sizes = [8, 32], strides = [1, 1]} : vector<8x64xf32> to vector<8x32xf32>
    %cst_97 = arith.constant dense<0.000000e+00> : vector<8x64xf32>
    %320 = tpu.matmul %13, %171, %cst_97 {dimension_numbers = #tpu.dot_dimension_numbers<[1], [0], [0], [1], [0, 0, 1, 1], [], []>} : vector<8x14xf32>, vector<14x64xf32>, vector<8x64xf32> -> vector<8x64xf32>
    %cst_98 = arith.constant dense<0.000000e+00> : vector<8x64xf32>
    %321 = tpu.matmul %14, %171, %cst_98 {dimension_numbers = #tpu.dot_dimension_numbers<[1], [0], [0], [1], [0, 0, 1, 1], [], []>} : vector<8x14xf32>, vector<14x64xf32>, vector<8x64xf32> -> vector<8x64xf32>
    %322 = vector.extract_strided_slice %320 {offsets = [0, 0], sizes = [8, 32], strides = [1, 1]} : vector<8x64xf32> to vector<8x32xf32>
    %323 = vector.extract_strided_slice %321 {offsets = [0, 0], sizes = [8, 32], strides = [1, 1]} : vector<8x64xf32> to vector<8x32xf32>
    %324 = vector.extract_strided_slice %320 {offsets = [0, 32], sizes = [8, 32], strides = [1, 1]} : vector<8x64xf32> to vector<8x32xf32>
    %325 = vector.extract_strided_slice %321 {offsets = [0, 32], sizes = [8, 32], strides = [1, 1]} : vector<8x64xf32> to vector<8x32xf32>
    %326 = arith.addf %322, %323 : vector<8x32xf32>
    %327 = tpu.concatenate %322, %323, %318 in 0 : vector<8x32xf32>, vector<8x32xf32>, vector<8x32xf32> -> vector<24x32xf32>
    %cst_99 = arith.constant dense<0.000000e+00> : vector<24x128xf32>
    %328 = tpu.matmul %327, %1, %cst_99 {dimension_numbers = #tpu.dot_dimension_numbers<[1], [0], [0], [1], [0, 0, 1, 1], [], []>} : vector<24x32xf32>, vector<32x128xf32>, vector<24x128xf32> -> vector<24x128xf32>
    %329 = vector.broadcast %2 : vector<1x128xf32> to vector<24x128xf32>
    %330 = arith.addf %328, %329 : vector<24x128xf32>
    %331 = vector.extract_strided_slice %316 {offsets = [0, 32], sizes = [8, 32], strides = [1, 1]} : vector<8x128xf32> to vector<8x32xf32>
    %332 = vector.extract_strided_slice %330 {offsets = [0, 0], sizes = [8, 128], strides = [1, 1]} : vector<24x128xf32> to vector<8x128xf32>
    %333 = vector.extract_strided_slice %332 {offsets = [0, 32], sizes = [8, 32], strides = [1, 1]} : vector<8x128xf32> to vector<8x32xf32>
    %334 = arith.addf %331, %333 : vector<8x32xf32>
    %335 = arith.negf %334 : vector<8x32xf32>
    %336 = math.exp %335 : vector<8x32xf32>
    %cst_100 = arith.constant 1.000000e+00 : f32
    %337 = vector.broadcast %cst_100 : f32 to vector<8x32xf32>
    %338 = arith.addf %337, %336 : vector<8x32xf32>
    %339 = arith.divf %337, %338 : vector<8x32xf32>
    %340 = vector.extract_strided_slice %330 {offsets = [8, 0], sizes = [8, 128], strides = [1, 1]} : vector<24x128xf32> to vector<8x128xf32>
    %341 = vector.extract_strided_slice %340 {offsets = [0, 32], sizes = [8, 32], strides = [1, 1]} : vector<8x128xf32> to vector<8x32xf32>
    %342 = arith.addf %331, %341 : vector<8x32xf32>
    %343 = arith.negf %342 : vector<8x32xf32>
    %344 = math.exp %343 : vector<8x32xf32>
    %cst_101 = arith.constant 1.000000e+00 : f32
    %345 = vector.broadcast %cst_101 : f32 to vector<8x32xf32>
    %346 = arith.addf %345, %344 : vector<8x32xf32>
    %347 = arith.divf %345, %346 : vector<8x32xf32>
    %348 = vector.extract_strided_slice %330 {offsets = [16, 0], sizes = [8, 128], strides = [1, 1]} : vector<24x128xf32> to vector<8x128xf32>
    %349 = vector.extract_strided_slice %348 {offsets = [0, 32], sizes = [8, 32], strides = [1, 1]} : vector<8x128xf32> to vector<8x32xf32>
    %350 = arith.addf %331, %349 : vector<8x32xf32>
    %351 = arith.negf %350 : vector<8x32xf32>
    %352 = math.exp %351 : vector<8x32xf32>
    %cst_102 = arith.constant 1.000000e+00 : f32
    %353 = vector.broadcast %cst_102 : f32 to vector<8x32xf32>
    %354 = arith.addf %353, %352 : vector<8x32xf32>
    %355 = arith.divf %353, %354 : vector<8x32xf32>
    %356 = arith.mulf %339, %324 : vector<8x32xf32>
    %357 = arith.mulf %347, %325 : vector<8x32xf32>
    %358 = arith.addf %356, %357 : vector<8x32xf32>
    %359 = arith.mulf %355, %319 : vector<8x32xf32>
    %360 = arith.subf %326, %322 : vector<8x32xf32>
    %361 = arith.addf %360, %318 : vector<8x32xf32>
    %362 = arith.subf %326, %323 : vector<8x32xf32>
    %363 = arith.addf %362, %318 : vector<8x32xf32>
    %364 = tpu.concatenate %361, %363 in 0 : vector<8x32xf32>, vector<8x32xf32> -> vector<16x32xf32>
    %cst_103 = arith.constant dense<0.000000e+00> : vector<16x128xf32>
    %365 = tpu.matmul %364, %1, %cst_103 {dimension_numbers = #tpu.dot_dimension_numbers<[1], [0], [0], [1], [0, 0, 1, 1], [], []>} : vector<16x32xf32>, vector<32x128xf32>, vector<16x128xf32> -> vector<16x128xf32>
    %366 = vector.broadcast %2 : vector<1x128xf32> to vector<16x128xf32>
    %367 = arith.addf %365, %366 : vector<16x128xf32>
    %368 = vector.extract_strided_slice %316 {offsets = [0, 0], sizes = [8, 32], strides = [1, 1]} : vector<8x128xf32> to vector<8x32xf32>
    %369 = vector.extract_strided_slice %316 {offsets = [0, 64], sizes = [8, 32], strides = [1, 1]} : vector<8x128xf32> to vector<8x32xf32>
    %370 = vector.extract_strided_slice %316 {offsets = [0, 96], sizes = [8, 32], strides = [1, 1]} : vector<8x128xf32> to vector<8x32xf32>
    %371 = vector.extract_strided_slice %367 {offsets = [0, 0], sizes = [8, 128], strides = [1, 1]} : vector<16x128xf32> to vector<8x128xf32>
    %372 = vector.extract_strided_slice %371 {offsets = [0, 0], sizes = [8, 32], strides = [1, 1]} : vector<8x128xf32> to vector<8x32xf32>
    %373 = arith.addf %368, %372 : vector<8x32xf32>
    %374 = arith.negf %373 : vector<8x32xf32>
    %375 = math.exp %374 : vector<8x32xf32>
    %cst_104 = arith.constant 1.000000e+00 : f32
    %376 = vector.broadcast %cst_104 : f32 to vector<8x32xf32>
    %377 = arith.addf %376, %375 : vector<8x32xf32>
    %378 = arith.divf %376, %377 : vector<8x32xf32>
    %379 = vector.extract_strided_slice %371 {offsets = [0, 64], sizes = [8, 32], strides = [1, 1]} : vector<8x128xf32> to vector<8x32xf32>
    %380 = arith.addf %369, %379 : vector<8x32xf32>
    %381 = arith.negf %380 : vector<8x32xf32>
    %382 = math.exp %381 : vector<8x32xf32>
    %cst_105 = arith.constant 1.000000e+00 : f32
    %383 = vector.broadcast %cst_105 : f32 to vector<8x32xf32>
    %384 = arith.addf %383, %382 : vector<8x32xf32>
    %385 = arith.divf %383, %384 : vector<8x32xf32>
    %386 = vector.extract_strided_slice %371 {offsets = [0, 96], sizes = [8, 32], strides = [1, 1]} : vector<8x128xf32> to vector<8x32xf32>
    %387 = arith.addf %370, %386 : vector<8x32xf32>
    %388 = math.tanh %387 : vector<8x32xf32>
    %389 = arith.mulf %378, %388 : vector<8x32xf32>
    %390 = arith.subf %358, %356 : vector<8x32xf32>
    %391 = arith.addf %390, %359 : vector<8x32xf32>
    %392 = arith.addf %389, %391 : vector<8x32xf32>
    %393 = math.tanh %392 : vector<8x32xf32>
    %394 = arith.mulf %385, %393 : vector<8x32xf32>
    %cst_106 = arith.constant dense<0.000000e+00> : vector<14xf32>
    %395 = vector.multi_reduction <add>, %15, %cst_106 [1] : vector<14x8xf32> to vector<14xf32>
    %396 = vector.shape_cast %395 : vector<14xf32> to vector<14x1xf32>
    %cst_107 = arith.constant 1.000000e+00 : f32
    %397 = vector.broadcast %cst_107 : f32 to vector<14x1xf32>
    %398 = arith.subf %397, %396 : vector<14x1xf32>
    %399 = vector.broadcast %398 : vector<14x1xf32> to vector<14x32xf32>
    %400 = arith.mulf %314, %399 : vector<14x32xf32>
    %cst_108 = arith.constant dense<0.000000e+00> : vector<14x32xf32>
    %401 = tpu.matmul %15, %394, %cst_108 {dimension_numbers = #tpu.dot_dimension_numbers<[1], [0], [0], [1], [0, 0, 1, 1], [], []>} : vector<14x8xf32>, vector<8x32xf32>, vector<14x32xf32> -> vector<14x32xf32>
    %402 = arith.addf %400, %401 : vector<14x32xf32>
    %403 = vector.extract_strided_slice %367 {offsets = [8, 0], sizes = [8, 128], strides = [1, 1]} : vector<16x128xf32> to vector<8x128xf32>
    %404 = vector.extract_strided_slice %403 {offsets = [0, 0], sizes = [8, 32], strides = [1, 1]} : vector<8x128xf32> to vector<8x32xf32>
    %405 = arith.addf %368, %404 : vector<8x32xf32>
    %406 = arith.negf %405 : vector<8x32xf32>
    %407 = math.exp %406 : vector<8x32xf32>
    %cst_109 = arith.constant 1.000000e+00 : f32
    %408 = vector.broadcast %cst_109 : f32 to vector<8x32xf32>
    %409 = arith.addf %408, %407 : vector<8x32xf32>
    %410 = arith.divf %408, %409 : vector<8x32xf32>
    %411 = vector.extract_strided_slice %403 {offsets = [0, 64], sizes = [8, 32], strides = [1, 1]} : vector<8x128xf32> to vector<8x32xf32>
    %412 = arith.addf %369, %411 : vector<8x32xf32>
    %413 = arith.negf %412 : vector<8x32xf32>
    %414 = math.exp %413 : vector<8x32xf32>
    %cst_110 = arith.constant 1.000000e+00 : f32
    %415 = vector.broadcast %cst_110 : f32 to vector<8x32xf32>
    %416 = arith.addf %415, %414 : vector<8x32xf32>
    %417 = arith.divf %415, %416 : vector<8x32xf32>
    %418 = vector.extract_strided_slice %403 {offsets = [0, 96], sizes = [8, 32], strides = [1, 1]} : vector<8x128xf32> to vector<8x32xf32>
    %419 = arith.addf %370, %418 : vector<8x32xf32>
    %420 = math.tanh %419 : vector<8x32xf32>
    %421 = arith.mulf %410, %420 : vector<8x32xf32>
    %422 = arith.subf %358, %357 : vector<8x32xf32>
    %423 = arith.addf %422, %359 : vector<8x32xf32>
    %424 = arith.addf %421, %423 : vector<8x32xf32>
    %425 = math.tanh %424 : vector<8x32xf32>
    %426 = arith.mulf %417, %425 : vector<8x32xf32>
    %cst_111 = arith.constant dense<0.000000e+00> : vector<14xf32>
    %427 = vector.multi_reduction <add>, %16, %cst_111 [1] : vector<14x8xf32> to vector<14xf32>
    %428 = vector.shape_cast %427 : vector<14xf32> to vector<14x1xf32>
    %cst_112 = arith.constant 1.000000e+00 : f32
    %429 = vector.broadcast %cst_112 : f32 to vector<14x1xf32>
    %430 = arith.subf %429, %428 : vector<14x1xf32>
    %431 = vector.broadcast %430 : vector<14x1xf32> to vector<14x32xf32>
    %432 = arith.mulf %402, %431 : vector<14x32xf32>
    %cst_113 = arith.constant dense<0.000000e+00> : vector<14x32xf32>
    %433 = tpu.matmul %16, %426, %cst_113 {dimension_numbers = #tpu.dot_dimension_numbers<[1], [0], [0], [1], [0, 0, 1, 1], [], []>} : vector<14x8xf32>, vector<8x32xf32>, vector<14x32xf32> -> vector<14x32xf32>
    %434 = arith.addf %432, %433 : vector<14x32xf32>
    %435 = tpu.concatenate %178, %434 in 1 : vector<14x32xf32>, vector<14x32xf32> -> vector<14x64xf32>
    %c0_114 = arith.constant 0 : index
    %c0_115 = arith.constant 0 : index
    %436 = vector.load %arg18[%c0_114, %c0_115] : memref<14x64xf32, #tpu.memory_space<vmem>>, vector<14x64xf32>
    tpu.vector_store %arg18[%c0_114, %c0_115], %435 {strides = array<i32>} : memref<14x64xf32, #tpu.memory_space<vmem>>, vector<14x64xf32>,
    return
  }
}

</mosaic_0001>

<llo_original>
// kernel: tpu_custom_call.1
$region0: #{tpu_custom_call.1}
  #allocation0 [shape = 'u32[]', space=smem, size = 0x4, offset = 0x4, fixed_abs, tag = 'smem constant byte address 0x4 - core index']
  #allocation1 [shape = 'u32[144,128]{1,0:T(1,128)}', space=vmem, size = 0x12000, scoped, tag = 'internal scratch']
  %s0 = inlined_call_operand.vmem [shape: f32[14,32], index: 0, kind: input, shape index: {}]
  %s1 = inlined_call_operand.vmem [shape: f32[32,64], index: 1, kind: input, shape index: {}]
  %s2 = inlined_call_operand.vmem [shape: f32[64,128], index: 2, kind: input, shape index: {}]
  %s3 = inlined_call_operand.vmem [shape: f32[32,128], index: 3, kind: input, shape index: {}]
  %s4 = inlined_call_operand.hbm [shape: f32[1,128], index: 4, kind: input, shape index: {}]
  %s5 = inlined_call_operand.vmem [shape: f32[14,1], index: 5, kind: input, shape index: {}]
  %s6 = inlined_call_operand.hbm [shape: f32[8,14], index: 6, kind: input, shape index: {}]
  %s7 = inlined_call_operand.vmem [shape: f32[14,8], index: 7, kind: input, shape index: {}]
  %s8 = inlined_call_operand.hbm [shape: f32[8,14], index: 8, kind: input, shape index: {}]
  %s9 = inlined_call_operand.hbm [shape: f32[8,14], index: 9, kind: input, shape index: {}]
  %s10 = inlined_call_operand.vmem [shape: f32[14,8], index: 10, kind: input, shape index: {}]
  %s11 = inlined_call_operand.vmem [shape: f32[14,8], index: 11, kind: input, shape index: {}]
  %s12 = inlined_call_operand.vmem [shape: f32[8,14], index: 12, kind: input, shape index: {}]
  %s13 = inlined_call_operand.vmem [shape: f32[14,8], index: 13, kind: input, shape index: {}]
  %s14 = inlined_call_operand.vmem [shape: f32[8,14], index: 14, kind: input, shape index: {}]
  %s15 = inlined_call_operand.vmem [shape: f32[8,14], index: 15, kind: input, shape index: {}]
  %s16 = inlined_call_operand.vmem [shape: f32[14,8], index: 16, kind: input, shape index: {}]
  %s17 = inlined_call_operand.vmem [shape: f32[14,8], index: 17, kind: input, shape index: {}]
  %s18 = inlined_call_operand.hbm [shape: f32[14,64], index: 18, kind: output, shape index: {}]
  %s19 = sld [smem:[#allocation0]]
  $region98: #{tpu_custom_call.1} parent=0
    _
  %s21 = ssub.s32 1, %s19
  %s22 = scalar_select 0, %s21, %s19
  $region1: #{tpu_custom_call.1} parent=0
    #allocation2 [shape = 'u8[512]{0}', space=vmem, size = 0x400, scoped, tag = 'input window, operand 4, single buffered']
    #allocation3 [shape = 's32[1]{0}', space=sflag, size = 0x4, scoped, tag = 'scoped memory for tpu_custom_call.1']
    #allocation4 [shape = 's32[1]{0}', space=sflag, size = 0x4, scoped, tag = 'scoped memory for tpu_custom_call.1']
    #allocation5 [shape = 'u8[4096]{0}', space=vmem, size = 0x1000, scoped, tag = 'input window, operand 6, single buffered']
    #allocation6 [shape = 's32[1]{0}', space=sflag, size = 0x4, scoped, tag = 'scoped memory for tpu_custom_call.1']
    #allocation7 [shape = 'u8[4096]{0}', space=vmem, size = 0x1000, scoped, tag = 'input window, operand 8, single buffered']
    #allocation8 [shape = 'u8[4096]{0}', space=vmem, size = 0x1000, scoped, tag = 'input window, operand 9, single buffered']
    #allocation9 [shape = 's32[1]{0}', space=sflag, size = 0x4, scoped, tag = 'scoped memory for tpu_custom_call.1']
    #allocation10 [shape = 'u8[8192]{0}', space=vmem, size = 0x2000, scoped, tag = 'output window, operand 0, single buffered']
    %23 = vsyncpa [#allocation3], 0
    %24 = vsyncpa [#allocation6], 0
    %25 = vsyncpa [#allocation9], 0
    %26 = vsyncpa [#allocation4], 0
    // Predicated region
    $region2: #{tpu_custom_call.1} parent=1 // pred_check
      _
    $region3: #{tpu_custom_call.1} parent=1 // pred_check_branch
      %28 = sbr.rel (0) target = $region5
    $region4: #{tpu_custom_call.1} parent=1 // pred_region
      _
    $region5: #{tpu_custom_call.1} parent=1 // pred_fallthru
      _
    // Predicated region
    $region6: #{tpu_custom_call.1} parent=1 // pred_check
      _
    $region7: #{tpu_custom_call.1} parent=1 // pred_check_branch
      %30 = sbr.rel (0) target = $region9
    $region8: #{tpu_custom_call.1} parent=1 // pred_region
      _
    $region9: #{tpu_custom_call.1} parent=1 // pred_fallthru
      _
    // Predicated region
    $region10: #{tpu_custom_call.1} parent=1 // pred_check
      _
    $region11: #{tpu_custom_call.1} parent=1 // pred_check_branch
      %32 = sbr.rel (0) target = $region13
    $region12: #{tpu_custom_call.1} parent=1 // pred_region
      _
    $region13: #{tpu_custom_call.1} parent=1 // pred_fallthru
      _
    // Predicated region
    $region14: #{tpu_custom_call.1} parent=1 // pred_check
      _
    $region15: #{tpu_custom_call.1} parent=1 // pred_check_branch
      %34 = sbr.rel (0) target = $region17
    $region16: #{tpu_custom_call.1} parent=1 // pred_region
      _
    $region17: #{tpu_custom_call.1} parent=1 // pred_fallthru
      _
    // Predicated region
    $region18: #{tpu_custom_call.1} parent=1 // pred_check
      _
    $region19: #{tpu_custom_call.1} parent=1 // pred_check_branch
      %36 = sbr.rel (0) target = $region21
    $region20: #{tpu_custom_call.1} parent=1 // pred_region
      %s38 = ssub.s32 16, 16
      %39 = vsyncadd [#allocation3], %s38
      %s41 = sshll.u32 [#allocation2], 4
      %s42 = int_to_ptr.vmem [resolvable:$true] %s41
      %44 = dma.hbm_to_vmem [thread:$0]  %s4, 16, %s42, [#allocation3]
    $region21: #{tpu_custom_call.1} parent=1 // pred_fallthru
      _
    // Predicated region
    $region22: #{tpu_custom_call.1} parent=1 // pred_check
      _
    $region23: #{tpu_custom_call.1} parent=1 // pred_check_branch
      %46 = sbr.rel (0) target = $region25
    $region24: #{tpu_custom_call.1} parent=1 // pred_region
      _
    $region25: #{tpu_custom_call.1} parent=1 // pred_fallthru
      _
    // Predicated region
    $region26: #{tpu_custom_call.1} parent=1 // pred_check
      _
    $region27: #{tpu_custom_call.1} parent=1 // pred_check_branch
      %48 = sbr.rel (0) target = $region29
    $region28: #{tpu_custom_call.1} parent=1 // pred_region
      %s50 = ssub.s32 128, 128
      %51 = vsyncadd [#allocation6], %s50
      %s53 = sshll.u32 [#allocation5], 4
      %s54 = int_to_ptr.vmem [resolvable:$true] %s53
      %56 = dma.hbm_to_vmem [thread:$0]  %s6, 128, %s54, [#allocation6]
    $region29: #{tpu_custom_call.1} parent=1 // pred_fallthru
      _
    // Predicated region
    $region30: #{tpu_custom_call.1} parent=1 // pred_check
      _
    $region31: #{tpu_custom_call.1} parent=1 // pred_check_branch
      %58 = sbr.rel (0) target = $region33
    $region32: #{tpu_custom_call.1} parent=1 // pred_region
      _
    $region33: #{tpu_custom_call.1} parent=1 // pred_fallthru
      _
    // Predicated region
    $region34: #{tpu_custom_call.1} parent=1 // pred_check
      _
    $region35: #{tpu_custom_call.1} parent=1 // pred_check_branch
      %60 = sbr.rel (0) target = $region37
    $region36: #{tpu_custom_call.1} parent=1 // pred_region
      %s62 = ssub.s32 128, 128
      %63 = vsyncadd [#allocation6], %s62
      %s65 = sshll.u32 [#allocation7], 4
      %s66 = int_to_ptr.vmem [resolvable:$true] %s65
      %68 = dma.hbm_to_vmem [thread:$0]  %s8, 128, %s66, [#allocation6]
    $region37: #{tpu_custom_call.1} parent=1 // pred_fallthru
      _
    // Predicated region
    $region38: #{tpu_custom_call.1} parent=1 // pred_check
      _
    $region39: #{tpu_custom_call.1} parent=1 // pred_check_branch
      %70 = sbr.rel (0) target = $region41
    $region40: #{tpu_custom_call.1} parent=1 // pred_region
      %s72 = ssub.s32 128, 128
      %73 = vsyncadd [#allocation9], %s72
      %s75 = sshll.u32 [#allocation8], 4
      %s76 = int_to_ptr.vmem [resolvable:$true] %s75
      %78 = dma.hbm_to_vmem [thread:$0]  %s9, 128, %s76, [#allocation9]
    $region41: #{tpu_custom_call.1} parent=1 // pred_fallthru
      _
    // Predicated region
    $region42: #{tpu_custom_call.1} parent=1 // pred_check
      _
    $region43: #{tpu_custom_call.1} parent=1 // pred_check_branch
      %80 = sbr.rel (0) target = $region45
    $region44: #{tpu_custom_call.1} parent=1 // pred_region
      _
    $region45: #{tpu_custom_call.1} parent=1 // pred_fallthru
      _
    // Predicated region
    $region46: #{tpu_custom_call.1} parent=1 // pred_check
      _
    $region47: #{tpu_custom_call.1} parent=1 // pred_check_branch
      %82 = sbr.rel (0) target = $region49
    $region48: #{tpu_custom_call.1} parent=1 // pred_region
      _
    $region49: #{tpu_custom_call.1} parent=1 // pred_fallthru
      _
    // Predicated region
    $region50: #{tpu_custom_call.1} parent=1 // pred_check
      _
    $region51: #{tpu_custom_call.1} parent=1 // pred_check_branch
      %84 = sbr.rel (0) target = $region53
    $region52: #{tpu_custom_call.1} parent=1 // pred_region
      _
    $region53: #{tpu_custom_call.1} parent=1 // pred_fallthru
      _
    // Predicated region
    $region54: #{tpu_custom_call.1} parent=1 // pred_check
      _
    $region55: #{tpu_custom_call.1} parent=1 // pred_check_branch
      %86 = sbr.rel (0) target = $region57
    $region56: #{tpu_custom_call.1} parent=1 // pred_region
      _
    $region57: #{tpu_custom_call.1} parent=1 // pred_fallthru
      _
    // Predicated region
    $region58: #{tpu_custom_call.1} parent=1 // pred_check
      _
    $region59: #{tpu_custom_call.1} parent=1 // pred_check_branch
      %88 = sbr.rel (0) target = $region61
    $region60: #{tpu_custom_call.1} parent=1 // pred_region
      _
    $region61: #{tpu_custom_call.1} parent=1 // pred_fallthru
      _
    // Predicated region
    $region62: #{tpu_custom_call.1} parent=1 // pred_check
      _
    $region63: #{tpu_custom_call.1} parent=1 // pred_check_branch
      %90 = sbr.rel (0) target = $region65
    $region64: #{tpu_custom_call.1} parent=1 // pred_region
      _
    $region65: #{tpu_custom_call.1} parent=1 // pred_fallthru
      _
    // Predicated region
    $region66: #{tpu_custom_call.1} parent=1 // pred_check
      _
    $region67: #{tpu_custom_call.1} parent=1 // pred_check_branch
      %92 = sbr.rel (0) target = $region69
    $region68: #{tpu_custom_call.1} parent=1 // pred_region
      _
    $region69: #{tpu_custom_call.1} parent=1 // pred_fallthru
      _
    // Predicated region
    $region70: #{tpu_custom_call.1} parent=1 // pred_check
      _
    $region71: #{tpu_custom_call.1} parent=1 // pred_check_branch
      %94 = sbr.rel (0) target = $region73
    $region72: #{tpu_custom_call.1} parent=1 // pred_region
      _
    $region73: #{tpu_custom_call.1} parent=1 // pred_fallthru
      _
    // Predicated region
    $region74: #{tpu_custom_call.1} parent=1 // pred_check
      _
    $region75: #{tpu_custom_call.1} parent=1 // pred_check_branch
      %96 = sbr.rel (0) target = $region77
    $region76: #{tpu_custom_call.1} parent=1 // pred_region
      %97 = dma.done [#allocation3], 16
    $region77: #{tpu_custom_call.1} parent=1 // pred_fallthru
      _
    // Predicated region
    $region78: #{tpu_custom_call.1} parent=1 // pred_check
      _
    $region79: #{tpu_custom_call.1} parent=1 // pred_check_branch
      %99 = sbr.rel (0) target = $region81
    $region80: #{tpu_custom_call.1} parent=1 // pred_region
      %100 = dma.done [#allocation6], 128
    $region81: #{tpu_custom_call.1} parent=1 // pred_fallthru
      _
    // Predicated region
    $region82: #{tpu_custom_call.1} parent=1 // pred_check
      _
    $region83: #{tpu_custom_call.1} parent=1 // pred_check_branch
      %102 = sbr.rel (0) target = $region85
    $region84: #{tpu_custom_call.1} parent=1 // pred_region
      %103 = dma.done [#allocation6], 128
    $region85: #{tpu_custom_call.1} parent=1 // pred_fallthru
      _
    // Predicated region
    $region86: #{tpu_custom_call.1} parent=1 // pred_check
      _
    $region87: #{tpu_custom_call.1} parent=1 // pred_check_branch
      %105 = sbr.rel (0) target = $region89
    $region88: #{tpu_custom_call.1} parent=1 // pred_region
      %106 = dma.done [#allocation9], 128
    $region89: #{tpu_custom_call.1} parent=1 // pred_fallthru
      _
    %v107 = vld [vmem:[%s2] sm:$0xff]
    %v108 = vld [vmem:[%s2 + $0x8] sm:$0xff]
    %v109 = vld [vmem:[%s2 + $0x10] sm:$0xff]
    %v110 = vld [vmem:[%s2 + $0x18] sm:$0xff]
    %v111 = vld [vmem:[%s2 + $0x20] sm:$0xff]
    %v112 = vld [vmem:[%s2 + $0x28] sm:$0xff]
    %v113 = vld [vmem:[%s2 + $0x30] sm:$0xff]
    %v114 = vld [vmem:[%s2 + $0x38] sm:$0xff]
    %v115 = vld [vmem:[%s3] sm:$0xff]
    %v116 = vld [vmem:[%s3 + $0x8] sm:$0xff]
    %v117 = vld [vmem:[%s3 + $0x10] sm:$0xff]
    %v118 = vld [vmem:[%s3 + $0x18] sm:$0xff]
    %v119 = vld [vmem:[#allocation2] sm:$0x1]
    %v120 = vld [vmem:[%s0] sm:$0xff]
    %v121 = vld [vmem:[%s0 + $0x8] sm:$0x3f]
    %v122 = vld [vmem:[%s1] sm:$0xff]
    %v123 = vld [vmem:[%s1 + $0x8] sm:$0xff]
    %v124 = vld [vmem:[%s1 + $0x10] sm:$0xff]
    %v125 = vld [vmem:[%s1 + $0x18] sm:$0xff]
    %vm126 = vcmask 261120
    %v128 = vsel %vm126, %v120, 0
    %v131 = vsel %vm126, %v121, 0
    %133 = vmatprep.subr.mxu0 0.0
    %134 = vmatpush1.msra.mxu0 %v122
    %135 = vmatprep.subr.mxu0 0.0
    %136 = vmatpush1.msra.mxu0 %v123
    %137 = vmatprep.subr.mxu0 0.0
    %138 = vmatpush1.msra.mxu0 %v124
    %139 = vmatprep.subr.mxu0 0.0
    %140 = vmatpush1.msra.mxu0 %v125
    %141 = vmatprep.subr.mxu0 0.0
    %142 = vmatpush1.msra.mxu0 0.0
    %143 = vmatprep.subr.mxu0 0.0
    %144 = vmatpush1.msra.mxu0 0.0
    %145 = vmatprep.subr.mxu0 0.0
    %146 = vmatpush1.msra.mxu0 0.0
    %147 = vmatprep.subr.mxu0 0.0
    %148 = vmatpush1.msra.mxu0 0.0
    %149 = vmatprep.subr.mxu0 0.0
    %150 = vmatpush1.msra.mxu0 0.0
    %151 = vmatprep.subr.mxu0 0.0
    %152 = vmatpush1.msra.mxu0 0.0
    %153 = vmatprep.subr.mxu0 0.0
    %154 = vmatpush1.msra.mxu0 0.0
    %155 = vmatprep.subr.mxu0 0.0
    %156 = vmatpush1.msra.mxu0 0.0
    %157 = vmatprep.subr.mxu0 0.0
    %158 = vmatpush1.msra.mxu0 0.0
    %159 = vmatprep.subr.mxu0 0.0
    %160 = vmatpush1.msra.mxu0 0.0
    %161 = vmatprep.subr.mxu0 0.0
    %162 = vmatpush1.msra.mxu0 0.0
    %163 = vmatprep.subr.mxu0 0.0
    %164 = vmatpush1.msra.mxu0 0.0
    %165 = vmatprep.subr.mxu0 0.0
    %166 = vmatpush1.msra.mxu0 0.0
    %167 = vmatprep.subr.mxu0 0.0
    %168 = vmatpush1.msra.mxu0 0.0
    %169 = vmatprep.subr.mxu0 0.0
    %170 = vmatpush1.msra.mxu0 0.0
    %171 = vmatprep.subr.mxu0 0.0
    %172 = vmatpush1.msra.mxu0 0.0
    %173 = vmatprep.subr.mxu0 0.0
    %174 = vmatpush1.msra.mxu0 0.0
    %175 = vmatprep.subr.mxu0 0.0
    %176 = vmatpush1.msra.mxu0 0.0
    %177 = vmatprep.subr.mxu0 0.0
    %178 = vmatpush1.msra.mxu0 0.0
    %179 = vmatprep.subr.mxu0 0.0
    %180 = vmatpush1.msra.mxu0 0.0
    %181 = vmatprep.subr.mxu0 0.0
    %182 = vmatpush1.msra.mxu0 0.0
    %183 = vmatprep.subr.mxu0 0.0
    %184 = vmatpush1.msra.mxu0 0.0
    %185 = vmatprep.subr.mxu0 0.0
    %186 = vmatpush1.msra.mxu0 0.0
    %187 = vmatprep.subr.mxu0 0.0
    %188 = vmatpush1.msra.mxu0 0.0
    %189 = vmatprep.subr.mxu0 0.0
    %190 = vmatpush1.msra.mxu0 0.0
    %191 = vmatprep.subr.mxu0 0.0
    %192 = vmatpush1.msra.mxu0 0.0
    %193 = vmatprep.subr.mxu0 0.0
    %194 = vmatpush1.msra.mxu0 0.0
    %195 = vmatprep.subr.mxu0 0.0
    %196 = vmatpush1.msra.mxu0 0.0
    %197 = vmatprep.mubr.f32.mxu0 0.0
    %198 = vmatmul.mubr.f32.gmra.mrb[0].mxu0 %v128
    %v199 = vpop.f32.mrb[0].mxu0
    %v200 = vadd.f32 0.0, %v199
    %v201 = vpop.f32.mrb[0].mxu0
    %202 = vmatprep.mubr.f32.mxu0 0.0
    %203 = vmatmul.mubr.f32.gmra.mrb[0].mxu0 %v131
    %v204 = vpop.f32.mrb[0].mxu0
    %v205 = vadd.f32 0.0, %v204
    %v206 = vpop.f32.mrb[0].mxu0
    %207 = vdwg.mxu0
    %v208 = vld [vmem:[%s5] sm:$0xff]
    %v209 = vld [vmem:[%s5 + $0x8] sm:$0x3f]
    %v210 = vtanh.pop %v200
    %v211 = vtanh.pop %v205
    %213 = vset.pattern.permute.xlu0 0
    %214 = vperm.xlu0 %213, %v208
    %v215 = vpop.permute.xlu0 %214
    %218 = vset.pattern.permute.xlu0 0
    %219 = vperm.xlu0 %218, %v209
    %v220 = vpop.permute.xlu0 %219
    %v222 = vmul.f32 %v215, %v210
    %v223 = vmul.f32 %v220, %v211
    %v224 = vld [vmem:[#allocation5] sm:$0xff]
    %v225 = vld [vmem:[%s7] sm:$0xff]
    %v226 = vld [vmem:[%s7 + $0x8] sm:$0x3f]
    %v227 = vld [vmem:[#allocation7] sm:$0xff]
    %v228 = vld [vmem:[#allocation8] sm:$0xff]
    %v229 = vld [vmem:[%s10] sm:$0xff]
    %v230 = vld [vmem:[%s10 + $0x8] sm:$0x3f]
    %v231 = vld [vmem:[%s11] sm:$0xff]
    %v232 = vld [vmem:[%s11 + $0x8] sm:$0x3f]
    %v233 = vld [vmem:[%s12] sm:$0xff]
    %v234 = vld [vmem:[%s13] sm:$0xff]
    %v235 = vld [vmem:[%s13 + $0x8] sm:$0x3f]
    %v236 = vld [vmem:[%s14] sm:$0xff]
    %v237 = vld [vmem:[%s15] sm:$0xff]
    %v238 = vld [vmem:[%s16] sm:$0xff]
    %v239 = vld [vmem:[%s16 + $0x8] sm:$0x3f]
    %v240 = vld [vmem:[%s17] sm:$0xff]
    %v241 = vld [vmem:[%s17 + $0x8] sm:$0x3f]
    %vm242 = vcmask 113664
    %v244 = vsel %vm242, %v224, 0
    %vm246 = vcmask 1045504
    %v248 = vsel %vm246, %v205, 0
    %250 = vmatprep.subr.mxu0 0.0
    %251 = vmatpush1.msra.mxu0 %v200
    %252 = vmatprep.subr.mxu0 0.0
    %253 = vmatpush1.msra.mxu0 %v248
    %254 = vmatprep.subr.mxu0 0.0
    %255 = vmatpush1.msra.mxu0 0.0
    %256 = vmatprep.subr.mxu0 0.0
    %257 = vmatpush1.msra.mxu0 0.0
    %258 = vmatprep.subr.mxu0 0.0
    %259 = vmatpush1.msra.mxu0 0.0
    %260 = vmatprep.subr.mxu0 0.0
    %261 = vmatpush1.msra.mxu0 0.0
    %262 = vmatprep.subr.mxu0 0.0
    %263 = vmatpush1.msra.mxu0 0.0
    %264 = vmatprep.subr.mxu0 0.0
    %265 = vmatpush1.msra.mxu0 0.0
    %266 = vmatprep.subr.mxu0 0.0
    %267 = vmatpush1.msra.mxu0 0.0
    %268 = vmatprep.subr.mxu0 0.0
    %269 = vmatpush1.msra.mxu0 0.0
    %270 = vmatprep.subr.mxu0 0.0
    %271 = vmatpush1.msra.mxu0 0.0
    %272 = vmatprep.subr.mxu0 0.0
    %273 = vmatpush1.msra.mxu0 0.0
    %274 = vmatprep.subr.mxu0 0.0
    %275 = vmatpush1.msra.mxu0 0.0
    %276 = vmatprep.subr.mxu0 0.0
    %277 = vmatpush1.msra.mxu0 0.0
    %278 = vmatprep.subr.mxu0 0.0
    %279 = vmatpush1.msra.mxu0 0.0
    %280 = vmatprep.subr.mxu0 0.0
    %281 = vmatpush1.msra.mxu0 0.0
    %282 = vmatprep.subr.mxu0 0.0
    %283 = vmatpush1.msra.mxu0 0.0
    %284 = vmatprep.subr.mxu0 0.0
    %285 = vmatpush1.msra.mxu0 0.0
    %286 = vmatprep.subr.mxu0 0.0
    %287 = vmatpush1.msra.mxu0 0.0
    %288 = vmatprep.subr.mxu0 0.0
    %289 = vmatpush1.msra.mxu0 0.0
    %290 = vmatprep.subr.mxu0 0.0
    %291 = vmatpush1.msra.mxu0 0.0
    %292 = vmatprep.subr.mxu0 0.0
    %293 = vmatpush1.msra.mxu0 0.0
    %294 = vmatprep.subr.mxu0 0.0
    %295 = vmatpush1.msra.mxu0 0.0
    %296 = vmatprep.subr.mxu0 0.0
    %297 = vmatpush1.msra.mxu0 0.0
    %298 = vmatprep.subr.mxu0 0.0
    %299 = vmatpush1.msra.mxu0 0.0
    %300 = vmatprep.subr.mxu0 0.0
    %301 = vmatpush1.msra.mxu0 0.0
    %302 = vmatprep.subr.mxu0 0.0
    %303 = vmatpush1.msra.mxu0 0.0
    %304 = vmatprep.subr.mxu0 0.0
    %305 = vmatpush1.msra.mxu0 0.0
    %306 = vmatprep.subr.mxu0 0.0
    %307 = vmatpush1.msra.mxu0 0.0
    %308 = vmatprep.subr.mxu0 0.0
    %309 = vmatpush1.msra.mxu0 0.0
    %310 = vmatprep.subr.mxu0 0.0
    %311 = vmatpush1.msra.mxu0 0.0
    %312 = vmatprep.subr.mxu0 0.0
    %313 = vmatpush1.msra.mxu0 0.0
    %314 = vmatprep.mubr.f32.mxu0 0.0
    %315 = vmatmul.mubr.f32.gmra.mrb[0].mxu0 %v244
    %v316 = vpop.f32.mrb[0].mxu0
    %v317 = vadd.f32 0.0, %v316
    %v318 = vpop.f32.mrb[0].mxu0
    %319 = vdwg.mxu0
    %vm320 = vcmask 523264
    %v322 = vsel %vm320, %v317, 0
    %324 = vmatprep.subr.mxu0 0.0
    %325 = vmatpush1.msra.mxu0 %v107
    %326 = vmatprep.subr.mxu0 0.0
    %327 = vmatpush1.msra.mxu0 %v108
    %328 = vmatprep.subr.mxu0 0.0
    %329 = vmatpush1.msra.mxu0 %v109
    %330 = vmatprep.subr.mxu0 0.0
    %331 = vmatpush1.msra.mxu0 %v110
    %332 = vmatprep.subr.mxu0 0.0
    %333 = vmatpush1.msra.mxu0 %v111
    %334 = vmatprep.subr.mxu0 0.0
    %335 = vmatpush1.msra.mxu0 %v112
    %336 = vmatprep.subr.mxu0 0.0
    %337 = vmatpush1.msra.mxu0 %v113
    %338 = vmatprep.subr.mxu0 0.0
    %339 = vmatpush1.msra.mxu0 %v114
    %340 = vmatprep.subr.mxu0 0.0
    %341 = vmatpush1.msra.mxu0 0.0
    %342 = vmatprep.subr.mxu0 0.0
    %343 = vmatpush1.msra.mxu0 0.0
    %344 = vmatprep.subr.mxu0 0.0
    %345 = vmatpush1.msra.mxu0 0.0
    %346 = vmatprep.subr.mxu0 0.0
    %347 = vmatpush1.msra.mxu0 0.0
    %348 = vmatprep.subr.mxu0 0.0
    %349 = vmatpush1.msra.mxu0 0.0
    %350 = vmatprep.subr.mxu0 0.0
    %351 = vmatpush1.msra.mxu0 0.0
    %352 = vmatprep.subr.mxu0 0.0
    %353 = vmatpush1.msra.mxu0 0.0
    %354 = vmatprep.subr.mxu0 0.0
    %355 = vmatpush1.msra.mxu0 0.0
    %356 = vmatprep.subr.mxu0 0.0
    %357 = vmatpush1.msra.mxu0 0.0
    %358 = vmatprep.subr.mxu0 0.0
    %359 = vmatpush1.msra.mxu0 0.0
    %360 = vmatprep.subr.mxu0 0.0
    %361 = vmatpush1.msra.mxu0 0.0
    %362 = vmatprep.subr.mxu0 0.0
    %363 = vmatpush1.msra.mxu0 0.0
    %364 = vmatprep.subr.mxu0 0.0
    %365 = vmatpush1.msra.mxu0 0.0
    %366 = vmatprep.subr.mxu0 0.0
    %367 = vmatpush1.msra.mxu0 0.0
    %368 = vmatprep.subr.mxu0 0.0
    %369 = vmatpush1.msra.mxu0 0.0
    %370 = vmatprep.subr.mxu0 0.0
    %371 = vmatpush1.msra.mxu0 0.0
    %372 = vmatprep.subr.mxu0 0.0
    %373 = vmatpush1.msra.mxu0 0.0
    %374 = vmatprep.subr.mxu0 0.0
    %375 = vmatpush1.msra.mxu0 0.0
    %376 = vmatprep.subr.mxu0 0.0
    %377 = vmatpush1.msra.mxu0 0.0
    %378 = vmatprep.subr.mxu0 0.0
    %379 = vmatpush1.msra.mxu0 0.0
    %380 = vmatprep.subr.mxu0 0.0
    %381 = vmatpush1.msra.mxu0 0.0
    %382 = vmatprep.subr.mxu0 0.0
    %383 = vmatpush1.msra.mxu0 0.0
    %384 = vmatprep.subr.mxu0 0.0
    %385 = vmatpush1.msra.mxu0 0.0
    %386 = vmatprep.subr.mxu0 0.0
    %387 = vmatpush1.msra.mxu0 0.0
    %388 = vmatprep.mubr.f32.mxu0 0.0
    %389 = vmatmul.mubr.f32.gmra.mrb[0].mxu0 %v322
    %v390 = vpop.f32.mrb[0].mxu0
    %v391 = vadd.f32 0.0, %v390
    %v392 = vpop.f32.mrb[0].mxu0
    %393 = vdwg.mxu0
    %v395 = vsel %vm242, %v227, 0
    %v398 = vsel %vm246, %v223, 0
    %400 = vmatprep.subr.mxu0 0.0
    %401 = vmatpush1.msra.mxu0 %v222
    %402 = vmatprep.subr.mxu0 0.0
    %403 = vmatpush1.msra.mxu0 %v398
    %404 = vmatprep.subr.mxu0 0.0
    %405 = vmatpush1.msra.mxu0 0.0
    %406 = vmatprep.subr.mxu0 0.0
    %407 = vmatpush1.msra.mxu0 0.0
    %408 = vmatprep.subr.mxu0 0.0
    %409 = vmatpush1.msra.mxu0 0.0
    %410 = vmatprep.subr.mxu0 0.0
    %411 = vmatpush1.msra.mxu0 0.0
    %412 = vmatprep.subr.mxu0 0.0
    %413 = vmatpush1.msra.mxu0 0.0
    %414 = vmatprep.subr.mxu0 0.0
    %415 = vmatpush1.msra.mxu0 0.0
    %416 = vmatprep.subr.mxu0 0.0
    %417 = vmatpush1.msra.mxu0 0.0
    %418 = vmatprep.subr.mxu0 0.0
    %419 = vmatpush1.msra.mxu0 0.0
    %420 = vmatprep.subr.mxu0 0.0
    %421 = vmatpush1.msra.mxu0 0.0
    %422 = vmatprep.subr.mxu0 0.0
    %423 = vmatpush1.msra.mxu0 0.0
    %424 = vmatprep.subr.mxu0 0.0
    %425 = vmatpush1.msra.mxu0 0.0
    %426 = vmatprep.subr.mxu0 0.0
    %427 = vmatpush1.msra.mxu0 0.0
    %428 = vmatprep.subr.mxu0 0.0
    %429 = vmatpush1.msra.mxu0 0.0
    %430 = vmatprep.subr.mxu0 0.0
    %431 = vmatpush1.msra.mxu0 0.0
    %432 = vmatprep.subr.mxu0 0.0
    %433 = vmatpush1.msra.mxu0 0.0
    %434 = vmatprep.subr.mxu0 0.0
    %435 = vmatpush1.msra.mxu0 0.0
    %436 = vmatprep.subr.mxu0 0.0
    %437 = vmatpush1.msra.mxu0 0.0
    %438 = vmatprep.subr.mxu0 0.0
    %439 = vmatpush1.msra.mxu0 0.0
    %440 = vmatprep.subr.mxu0 0.0
    %441 = vmatpush1.msra.mxu0 0.0
    %442 = vmatprep.subr.mxu0 0.0
    %443 = vmatpush1.msra.mxu0 0.0
    %444 = vmatprep.subr.mxu0 0.0
    %445 = vmatpush1.msra.mxu0 0.0
    %446 = vmatprep.subr.mxu0 0.0
    %447 = vmatpush1.msra.mxu0 0.0
    %448 = vmatprep.subr.mxu0 0.0
    %449 = vmatpush1.msra.mxu0 0.0
    %450 = vmatprep.subr.mxu0 0.0
    %451 = vmatpush1.msra.mxu0 0.0
    %452 = vmatprep.subr.mxu0 0.0
    %453 = vmatpush1.msra.mxu0 0.0
    %454 = vmatprep.subr.mxu0 0.0
    %455 = vmatpush1.msra.mxu0 0.0
    %456 = vmatprep.subr.mxu0 0.0
    %457 = vmatpush1.msra.mxu0 0.0
    %458 = vmatprep.subr.mxu0 0.0
    %459 = vmatpush1.msra.mxu0 0.0
    %460 = vmatprep.subr.mxu0 0.0
    %461 = vmatpush1.msra.mxu0 0.0
    %462 = vmatprep.subr.mxu0 0.0
    %463 = vmatpush1.msra.mxu0 0.0
    %464 = vmatprep.mubr.f32.mxu0 0.0
    %465 = vmatmul.mubr.f32.gmra.mrb[0].mxu0 %v395
    %v466 = vpop.f32.mrb[0].mxu0
    %v467 = vadd.f32 0.0, %v466
    %v468 = vpop.f32.mrb[0].mxu0
    %469 = vdwg.mxu0
    %v471 = vsel %vm242, %v228, 0
    %473 = vmatprep.subr.mxu0 0.0
    %474 = vmatpush1.msra.mxu0 %v222
    %475 = vmatprep.subr.mxu0 0.0
    %476 = vmatpush1.msra.mxu0 %v398
    %477 = vmatprep.subr.mxu0 0.0
    %478 = vmatpush1.msra.mxu0 0.0
    %479 = vmatprep.subr.mxu0 0.0
    %480 = vmatpush1.msra.mxu0 0.0
    %481 = vmatprep.subr.mxu0 0.0
    %482 = vmatpush1.msra.mxu0 0.0
    %483 = vmatprep.subr.mxu0 0.0
    %484 = vmatpush1.msra.mxu0 0.0
    %485 = vmatprep.subr.mxu0 0.0
    %486 = vmatpush1.msra.mxu0 0.0
    %487 = vmatprep.subr.mxu0 0.0
    %488 = vmatpush1.msra.mxu0 0.0
    %489 = vmatprep.subr.mxu0 0.0
    %490 = vmatpush1.msra.mxu0 0.0
    %491 = vmatprep.subr.mxu0 0.0
    %492 = vmatpush1.msra.mxu0 0.0
    %493 = vmatprep.subr.mxu0 0.0
    %494 = vmatpush1.msra.mxu0 0.0
    %495 = vmatprep.subr.mxu0 0.0
    %496 = vmatpush1.msra.mxu0 0.0
    %497 = vmatprep.subr.mxu0 0.0
    %498 = vmatpush1.msra.mxu0 0.0
    %499 = vmatprep.subr.mxu0 0.0
    %500 = vmatpush1.msra.mxu0 0.0
    %501 = vmatprep.subr.mxu0 0.0
    %502 = vmatpush1.msra.mxu0 0.0
    %503 = vmatprep.subr.mxu0 0.0
    %504 = vmatpush1.msra.mxu0 0.0
    %505 = vmatprep.subr.mxu0 0.0
    %506 = vmatpush1.msra.mxu0 0.0
    %507 = vmatprep.subr.mxu0 0.0
    %508 = vmatpush1.msra.mxu0 0.0
    %509 = vmatprep.subr.mxu0 0.0
    %510 = vmatpush1.msra.mxu0 0.0
    %511 = vmatprep.subr.mxu0 0.0
    %512 = vmatpush1.msra.mxu0 0.0
    %513 = vmatprep.subr.mxu0 0.0
    %514 = vmatpush1.msra.mxu0 0.0
    %515 = vmatprep.subr.mxu0 0.0
    %516 = vmatpush1.msra.mxu0 0.0
    %517 = vmatprep.subr.mxu0 0.0
    %518 = vmatpush1.msra.mxu0 0.0
    %519 = vmatprep.subr.mxu0 0.0
    %520 = vmatpush1.msra.mxu0 0.0
    %521 = vmatprep.subr.mxu0 0.0
    %522 = vmatpush1.msra.mxu0 0.0
    %523 = vmatprep.subr.mxu0 0.0
    %524 = vmatpush1.msra.mxu0 0.0
    %525 = vmatprep.subr.mxu0 0.0
    %526 = vmatpush1.msra.mxu0 0.0
    %527 = vmatprep.subr.mxu0 0.0
    %528 = vmatpush1.msra.mxu0 0.0
    %529 = vmatprep.subr.mxu0 0.0
    %530 = vmatpush1.msra.mxu0 0.0
    %531 = vmatprep.subr.mxu0 0.0
    %532 = vmatpush1.msra.mxu0 0.0
    %533 = vmatprep.subr.mxu0 0.0
    %534 = vmatpush1.msra.mxu0 0.0
    %535 = vmatprep.subr.mxu0 0.0
    %536 = vmatpush1.msra.mxu0 0.0
    %537 = vmatprep.mubr.f32.mxu0 0.0
    %538 = vmatmul.mubr.f32.gmra.mrb[0].mxu0 %v471
    %v539 = vpop.f32.mrb[0].mxu0
    %v540 = vadd.f32 0.0, %v539
    %v541 = vpop.f32.mrb[0].mxu0
    %542 = vdwg.mxu0
    %v543 = vadd.f32 %v467, %v540
    %v545 = vlaneseq
    %v546 = vshrl.u32 %v545, 7
    %v547 = vsub.s32 0, %v546
    %v548 = vrot.slane %v119, %v547
    %v551 = vsel %vm126, %v543, 0
    %553 = vmatprep.subr.mxu0 0.0
    %554 = vmatpush1.msra.mxu0 %v115
    %555 = vmatprep.subr.mxu0 0.0
    %556 = vmatpush1.msra.mxu0 %v116
    %557 = vmatprep.subr.mxu0 0.0
    %558 = vmatpush1.msra.mxu0 %v117
    %559 = vmatprep.subr.mxu0 0.0
    %560 = vmatpush1.msra.mxu0 %v118
    %561 = vmatprep.subr.mxu0 0.0
    %562 = vmatpush1.msra.mxu0 0.0
    %563 = vmatprep.subr.mxu0 0.0
    %564 = vmatpush1.msra.mxu0 0.0
    %565 = vmatprep.subr.mxu0 0.0
    %566 = vmatpush1.msra.mxu0 0.0
    %567 = vmatprep.subr.mxu0 0.0
    %568 = vmatpush1.msra.mxu0 0.0
    %569 = vmatprep.subr.mxu0 0.0
    %570 = vmatpush1.msra.mxu0 0.0
    %571 = vmatprep.subr.mxu0 0.0
    %572 = vmatpush1.msra.mxu0 0.0
    %573 = vmatprep.subr.mxu0 0.0
    %574 = vmatpush1.msra.mxu0 0.0
    %575 = vmatprep.subr.mxu0 0.0
    %576 = vmatpush1.msra.mxu0 0.0
    %577 = vmatprep.subr.mxu0 0.0
    %578 = vmatpush1.msra.mxu0 0.0
    %579 = vmatprep.subr.mxu0 0.0
    %580 = vmatpush1.msra.mxu0 0.0
    %581 = vmatprep.subr.mxu0 0.0
    %582 = vmatpush1.msra.mxu0 0.0
    %583 = vmatprep.subr.mxu0 0.0
    %584 = vmatpush1.msra.mxu0 0.0
    %585 = vmatprep.subr.mxu0 0.0
    %586 = vmatpush1.msra.mxu0 0.0
    %587 = vmatprep.subr.mxu0 0.0
    %588 = vmatpush1.msra.mxu0 0.0
    %589 = vmatprep.subr.mxu0 0.0
    %590 = vmatpush1.msra.mxu0 0.0
    %591 = vmatprep.subr.mxu0 0.0
    %592 = vmatpush1.msra.mxu0 0.0
    %593 = vmatprep.subr.mxu0 0.0
    %594 = vmatpush1.msra.mxu0 0.0
    %595 = vmatprep.subr.mxu0 0.0
    %596 = vmatpush1.msra.mxu0 0.0
    %597 = vmatprep.subr.mxu0 0.0
    %598 = vmatpush1.msra.mxu0 0.0
    %599 = vmatprep.subr.mxu0 0.0
    %600 = vmatpush1.msra.mxu0 0.0
    %601 = vmatprep.subr.mxu0 0.0
    %602 = vmatpush1.msra.mxu0 0.0
    %603 = vmatprep.subr.mxu0 0.0
    %604 = vmatpush1.msra.mxu0 0.0
    %605 = vmatprep.subr.mxu0 0.0
    %606 = vmatpush1.msra.mxu0 0.0
    %607 = vmatprep.subr.mxu0 0.0
    %608 = vmatpush1.msra.mxu0 0.0
    %609 = vmatprep.subr.mxu0 0.0
    %610 = vmatpush1.msra.mxu0 0.0
    %611 = vmatprep.subr.mxu0 0.0
    %612 = vmatpush1.msra.mxu0 0.0
    %613 = vmatprep.subr.mxu0 0.0
    %614 = vmatpush1.msra.mxu0 0.0
    %615 = vmatprep.subr.mxu0 0.0
    %616 = vmatpush1.msra.mxu0 0.0
    %617 = vmatprep.mubr.f32.mxu0 0.0
    %618 = vmatmul.mubr.f32.gmra.mrb[0].mxu0 %v551
    %v619 = vpop.f32.mrb[0].mxu0
    %v620 = vadd.f32 %v548, %v619
    %v621 = vpop.f32.mrb[0].mxu0
    %622 = vdwg.mxu0
    %v623 = vadd.f32 %v391, %v620
    %v624 = vxor.u32 %v623, 2147483648
    %v625 = vmul.f32 %v624, 1.442695
    %v626 = vpow.pop %v625
    %v627 = vadd.f32 %v626, 1.0
    %v628 = vrcp.pop %v627
    %v629 = vmul.f32 1.0, %v628
    %v630 = vtanh.pop %v623
    %v632 = vsel %vm126, %v467, 0
    %v635 = vsel %vm126, %v540, 0
    %637 = vmatprep.subr.mxu0 0.0
    %638 = vmatpush1.msra.mxu0 %v115
    %639 = vmatprep.subr.mxu0 0.0
    %640 = vmatpush1.msra.mxu0 %v116
    %641 = vmatprep.subr.mxu0 0.0
    %642 = vmatpush1.msra.mxu0 %v117
    %643 = vmatprep.subr.mxu0 0.0
    %644 = vmatpush1.msra.mxu0 %v118
    %645 = vmatprep.subr.mxu0 0.0
    %646 = vmatpush1.msra.mxu0 0.0
    %647 = vmatprep.subr.mxu0 0.0
    %648 = vmatpush1.msra.mxu0 0.0
    %649 = vmatprep.subr.mxu0 0.0
    %650 = vmatpush1.msra.mxu0 0.0
    %651 = vmatprep.subr.mxu0 0.0
    %652 = vmatpush1.msra.mxu0 0.0
    %653 = vmatprep.subr.mxu0 0.0
    %654 = vmatpush1.msra.mxu0 0.0
    %655 = vmatprep.subr.mxu0 0.0
    %656 = vmatpush1.msra.mxu0 0.0
    %657 = vmatprep.subr.mxu0 0.0
    %658 = vmatpush1.msra.mxu0 0.0
    %659 = vmatprep.subr.mxu0 0.0
    %660 = vmatpush1.msra.mxu0 0.0
    %661 = vmatprep.subr.mxu0 0.0
    %662 = vmatpush1.msra.mxu0 0.0
    %663 = vmatprep.subr.mxu0 0.0
    %664 = vmatpush1.msra.mxu0 0.0
    %665 = vmatprep.subr.mxu0 0.0
    %666 = vmatpush1.msra.mxu0 0.0
    %667 = vmatprep.subr.mxu0 0.0
    %668 = vmatpush1.msra.mxu0 0.0
    %669 = vmatprep.subr.mxu0 0.0
    %670 = vmatpush1.msra.mxu0 0.0
    %671 = vmatprep.subr.mxu0 0.0
    %672 = vmatpush1.msra.mxu0 0.0
    %673 = vmatprep.subr.mxu0 0.0
    %674 = vmatpush1.msra.mxu0 0.0
    %675 = vmatprep.subr.mxu0 0.0
    %676 = vmatpush1.msra.mxu0 0.0
    %677 = vmatprep.subr.mxu0 0.0
    %678 = vmatpush1.msra.mxu0 0.0
    %679 = vmatprep.subr.mxu0 0.0
    %680 = vmatpush1.msra.mxu0 0.0
    %681 = vmatprep.subr.mxu0 0.0
    %682 = vmatpush1.msra.mxu0 0.0
    %683 = vmatprep.subr.mxu0 0.0
    %684 = vmatpush1.msra.mxu0 0.0
    %685 = vmatprep.subr.mxu0 0.0
    %686 = vmatpush1.msra.mxu0 0.0
    %687 = vmatprep.subr.mxu0 0.0
    %688 = vmatpush1.msra.mxu0 0.0
    %689 = vmatprep.subr.mxu0 0.0
    %690 = vmatpush1.msra.mxu0 0.0
    %691 = vmatprep.subr.mxu0 0.0
    %692 = vmatpush1.msra.mxu0 0.0
    %693 = vmatprep.subr.mxu0 0.0
    %694 = vmatpush1.msra.mxu0 0.0
    %695 = vmatprep.subr.mxu0 0.0
    %696 = vmatpush1.msra.mxu0 0.0
    %697 = vmatprep.subr.mxu0 0.0
    %698 = vmatpush1.msra.mxu0 0.0
    %699 = vmatprep.subr.mxu0 0.0
    %700 = vmatpush1.msra.mxu0 0.0
    %701 = vmatprep.mubr.f32.mxu0 0.0
    %702 = vmatmul.mubr.f32.gmra.mrb[0].mxu0 %v632
    %v703 = vpop.f32.mrb[0].mxu0
    %v704 = vadd.f32 %v548, %v703
    %v705 = vpop.f32.mrb[0].mxu0
    %706 = vmatprep.mubr.f32.mxu0 0.0
    %707 = vmatmul.mubr.f32.gmra.mrb[0].mxu0 %v635
    %v708 = vpop.f32.mrb[0].mxu0
    %v709 = vadd.f32 %v548, %v708
    %v710 = vpop.f32.mrb[0].mxu0
    %711 = vdwg.mxu0
    %v712 = vadd.f32 %v391, %v704
    %v713 = vxor.u32 %v712, 2147483648
    %v714 = vmul.f32 %v713, 1.442695
    %v715 = vpow.pop %v714
    %v716 = vadd.f32 %v715, 1.0
    %v717 = vrcp.pop %v716
    %v718 = vmul.f32 1.0, %v717
    %v719 = vmul.f32 %v718, %v467
    %v720 = vadd.f32 %v719, 0.0
    %v721 = vadd.f32 %v391, %v709
    %v722 = vxor.u32 %v721, 2147483648
    %v723 = vmul.f32 %v722, 1.442695
    %v724 = vpow.pop %v723
    %v725 = vadd.f32 %v724, 1.0
    %v726 = vrcp.pop %v725
    %v727 = vmul.f32 1.0, %v726
    %v728 = vmul.f32 %v727, %v540
    %v729 = vadd.f32 %v720, %v728
    %731 = vrot.lane.b32.xlu0 %v630, 32
    %v732 = vpop.permute.xlu0 %731
    %v734 = vmul.f32 %v629, %v732
    %736 = vrot.lane.b32.xlu0 %v729, 96
    %v737 = vpop.permute.xlu0 %736
    %v739 = vadd.f32 %v734, %v737
    %v740 = vtanh.pop %v739
    %742 = vrot.lane.b32.xlu0 %v740, 64
    %v743 = vpop.permute.xlu0 %742
    %v745 = vmul.f32 %v629, %v743
    %747 = vrot.lane.b32.xlu0 %v745, 64
    %v748 = vpop.permute.xlu0 %747
    %751 = vrot.lane.b32.xlu0 %v739, 32
    %v752 = vpop.permute.xlu0 %751
    %v754 = vsel %vm126, %v748, %v752
    %vm755 = vcmask 64512
    %v756 = vsel %vm755, %v225, 0.0
    %757 = vadd.xlane.f32.xlu0 %v756
    %v758 = vpop.xlane.xlu0 %757
    %vm759 = vcmask 62464
    %v760 = vsel %vm759, %v226, 0.0
    %761 = vadd.xlane.f32.xlu0 %v760
    %v762 = vpop.xlane.xlu0 %761
    %v763 = vsub.f32 1.0, %v758
    %v764 = vsub.f32 1.0, %v762
    %v765 = vmul.f32 %v222, %v763
    %v766 = vmul.f32 %v223, %v764
    %v768 = vsel %vm755, %v225, 0
    %v771 = vsel %vm755, %v226, 0
    %773 = vmatprep.subr.mxu0 0.0
    %774 = vmatpush1.msra.mxu0 %v754
    %775 = vmatprep.subr.mxu0 0.0
    %776 = vmatpush1.msra.mxu0 0.0
    %777 = vmatprep.subr.mxu0 0.0
    %778 = vmatpush1.msra.mxu0 0.0
    %779 = vmatprep.subr.mxu0 0.0
    %780 = vmatpush1.msra.mxu0 0.0
    %781 = vmatprep.subr.mxu0 0.0
    %782 = vmatpush1.msra.mxu0 0.0
    %783 = vmatprep.subr.mxu0 0.0
    %784 = vmatpush1.msra.mxu0 0.0
    %785 = vmatprep.subr.mxu0 0.0
    %786 = vmatpush1.msra.mxu0 0.0
    %787 = vmatprep.subr.mxu0 0.0
    %788 = vmatpush1.msra.mxu0 0.0
    %789 = vmatprep.subr.mxu0 0.0
    %790 = vmatpush1.msra.mxu0 0.0
    %791 = vmatprep.subr.mxu0 0.0
    %792 = vmatpush1.msra.mxu0 0.0
    %793 = vmatprep.subr.mxu0 0.0
    %794 = vmatpush1.msra.mxu0 0.0
    %795 = vmatprep.subr.mxu0 0.0
    %796 = vmatpush1.msra.mxu0 0.0
    %797 = vmatprep.subr.mxu0 0.0
    %798 = vmatpush1.msra.mxu0 0.0
    %799 = vmatprep.subr.mxu0 0.0
    %800 = vmatpush1.msra.mxu0 0.0
    %801 = vmatprep.subr.mxu0 0.0
    %802 = vmatpush1.msra.mxu0 0.0
    %803 = vmatprep.subr.mxu0 0.0
    %804 = vmatpush1.msra.mxu0 0.0
    %805 = vmatprep.subr.mxu0 0.0
    %806 = vmatpush1.msra.mxu0 0.0
    %807 = vmatprep.subr.mxu0 0.0
    %808 = vmatpush1.msra.mxu0 0.0
    %809 = vmatprep.subr.mxu0 0.0
    %810 = vmatpush1.msra.mxu0 0.0
    %811 = vmatprep.subr.mxu0 0.0
    %812 = vmatpush1.msra.mxu0 0.0
    %813 = vmatprep.subr.mxu0 0.0
    %814 = vmatpush1.msra.mxu0 0.0
    %815 = vmatprep.subr.mxu0 0.0
    %816 = vmatpush1.msra.mxu0 0.0
    %817 = vmatprep.subr.mxu0 0.0
    %818 = vmatpush1.msra.mxu0 0.0
    %819 = vmatprep.subr.mxu0 0.0
    %820 = vmatpush1.msra.mxu0 0.0
    %821 = vmatprep.subr.mxu0 0.0
    %822 = vmatpush1.msra.mxu0 0.0
    %823 = vmatprep.subr.mxu0 0.0
    %824 = vmatpush1.msra.mxu0 0.0
    %825 = vmatprep.subr.mxu0 0.0
    %826 = vmatpush1.msra.mxu0 0.0
    %827 = vmatprep.subr.mxu0 0.0
    %828 = vmatpush1.msra.mxu0 0.0
    %829 = vmatprep.subr.mxu0 0.0
    %830 = vmatpush1.msra.mxu0 0.0
    %831 = vmatprep.subr.mxu0 0.0
    %832 = vmatpush1.msra.mxu0 0.0
    %833 = vmatprep.subr.mxu0 0.0
    %834 = vmatpush1.msra.mxu0 0.0
    %835 = vmatprep.subr.mxu0 0.0
    %836 = vmatpush1.msra.mxu0 0.0
    %837 = vmatprep.mubr.f32.mxu0 0.0
    %838 = vmatmul.mubr.f32.gmra.mrb[0].mxu0 %v768
    %v839 = vpop.f32.mrb[0].mxu0
    %v840 = vadd.f32 0.0, %v839
    %v841 = vpop.f32.mrb[0].mxu0
    %842 = vmatprep.mubr.f32.mxu0 0.0
    %843 = vmatmul.mubr.f32.gmra.mrb[0].mxu0 %v771
    %v844 = vpop.f32.mrb[0].mxu0
    %v845 = vadd.f32 0.0, %v844
    %v846 = vpop.f32.mrb[0].mxu0
    %847 = vdwg.mxu0
    %v848 = vadd.f32 %v765, %v840
    %v849 = vadd.f32 %v766, %v845
    %v850 = vmul.f32 %v763, 0.0
    %v851 = vmul.f32 %v764, 0.0
    %v852 = vtanh.pop %v620
    %854 = vrot.lane.b32.xlu0 %v852, 32
    %v855 = vpop.permute.xlu0 %854
    %857 = vmatprep.subr.mxu0 0.0
    %858 = vmatpush1.msra.mxu0 %v855
    %859 = vmatprep.subr.mxu0 0.0
    %860 = vmatpush1.msra.mxu0 0.0
    %861 = vmatprep.subr.mxu0 0.0
    %862 = vmatpush1.msra.mxu0 0.0
    %863 = vmatprep.subr.mxu0 0.0
    %864 = vmatpush1.msra.mxu0 0.0
    %865 = vmatprep.subr.mxu0 0.0
    %866 = vmatpush1.msra.mxu0 0.0
    %867 = vmatprep.subr.mxu0 0.0
    %868 = vmatpush1.msra.mxu0 0.0
    %869 = vmatprep.subr.mxu0 0.0
    %870 = vmatpush1.msra.mxu0 0.0
    %871 = vmatprep.subr.mxu0 0.0
    %872 = vmatpush1.msra.mxu0 0.0
    %873 = vmatprep.subr.mxu0 0.0
    %874 = vmatpush1.msra.mxu0 0.0
    %875 = vmatprep.subr.mxu0 0.0
    %876 = vmatpush1.msra.mxu0 0.0
    %877 = vmatprep.subr.mxu0 0.0
    %878 = vmatpush1.msra.mxu0 0.0
    %879 = vmatprep.subr.mxu0 0.0
    %880 = vmatpush1.msra.mxu0 0.0
    %881 = vmatprep.subr.mxu0 0.0
    %882 = vmatpush1.msra.mxu0 0.0
    %883 = vmatprep.subr.mxu0 0.0
    %884 = vmatpush1.msra.mxu0 0.0
    %885 = vmatprep.subr.mxu0 0.0
    %886 = vmatpush1.msra.mxu0 0.0
    %887 = vmatprep.subr.mxu0 0.0
    %888 = vmatpush1.msra.mxu0 0.0
    %889 = vmatprep.subr.mxu0 0.0
    %890 = vmatpush1.msra.mxu0 0.0
    %891 = vmatprep.subr.mxu0 0.0
    %892 = vmatpush1.msra.mxu0 0.0
    %893 = vmatprep.subr.mxu0 0.0
    %894 = vmatpush1.msra.mxu0 0.0
    %895 = vmatprep.subr.mxu0 0.0
    %896 = vmatpush1.msra.mxu0 0.0
    %897 = vmatprep.subr.mxu0 0.0
    %898 = vmatpush1.msra.mxu0 0.0
    %899 = vmatprep.subr.mxu0 0.0
    %900 = vmatpush1.msra.mxu0 0.0
    %901 = vmatprep.subr.mxu0 0.0
    %902 = vmatpush1.msra.mxu0 0.0
    %903 = vmatprep.subr.mxu0 0.0
    %904 = vmatpush1.msra.mxu0 0.0
    %905 = vmatprep.subr.mxu0 0.0
    %906 = vmatpush1.msra.mxu0 0.0
    %907 = vmatprep.subr.mxu0 0.0
    %908 = vmatpush1.msra.mxu0 0.0
    %909 = vmatprep.subr.mxu0 0.0
    %910 = vmatpush1.msra.mxu0 0.0
    %911 = vmatprep.subr.mxu0 0.0
    %912 = vmatpush1.msra.mxu0 0.0
    %913 = vmatprep.subr.mxu0 0.0
    %914 = vmatpush1.msra.mxu0 0.0
    %915 = vmatprep.subr.mxu0 0.0
    %916 = vmatpush1.msra.mxu0 0.0
    %917 = vmatprep.subr.mxu0 0.0
    %918 = vmatpush1.msra.mxu0 0.0
    %919 = vmatprep.subr.mxu0 0.0
    %920 = vmatpush1.msra.mxu0 0.0
    %921 = vmatprep.mubr.f32.mxu0 0.0
    %922 = vmatmul.mubr.f32.gmra.mrb[0].mxu0 %v768
    %v923 = vpop.f32.mrb[0].mxu0
    %v924 = vadd.f32 0.0, %v923
    %v925 = vpop.f32.mrb[0].mxu0
    %926 = vmatprep.mubr.f32.mxu0 0.0
    %927 = vmatmul.mubr.f32.gmra.mrb[0].mxu0 %v771
    %v928 = vpop.f32.mrb[0].mxu0
    %v929 = vadd.f32 0.0, %v928
    %v930 = vpop.f32.mrb[0].mxu0
    %931 = vdwg.mxu0
    %v932 = vadd.f32 %v850, %v924
    %v933 = vadd.f32 %v851, %v929
    %v935 = vsel %vm242, %v233, 0
    %937 = vmatprep.subr.mxu0 0.0
    %938 = vmatpush1.msra.mxu0 %v200
    %939 = vmatprep.subr.mxu0 0.0
    %940 = vmatpush1.msra.mxu0 %v248
    %941 = vmatprep.subr.mxu0 0.0
    %942 = vmatpush1.msra.mxu0 0.0
    %943 = vmatprep.subr.mxu0 0.0
    %944 = vmatpush1.msra.mxu0 0.0
    %945 = vmatprep.subr.mxu0 0.0
    %946 = vmatpush1.msra.mxu0 0.0
    %947 = vmatprep.subr.mxu0 0.0
    %948 = vmatpush1.msra.mxu0 0.0
    %949 = vmatprep.subr.mxu0 0.0
    %950 = vmatpush1.msra.mxu0 0.0
    %951 = vmatprep.subr.mxu0 0.0
    %952 = vmatpush1.msra.mxu0 0.0
    %953 = vmatprep.subr.mxu0 0.0
    %954 = vmatpush1.msra.mxu0 0.0
    %955 = vmatprep.subr.mxu0 0.0
    %956 = vmatpush1.msra.mxu0 0.0
    %957 = vmatprep.subr.mxu0 0.0
    %958 = vmatpush1.msra.mxu0 0.0
    %959 = vmatprep.subr.mxu0 0.0
    %960 = vmatpush1.msra.mxu0 0.0
    %961 = vmatprep.subr.mxu0 0.0
    %962 = vmatpush1.msra.mxu0 0.0
    %963 = vmatprep.subr.mxu0 0.0
    %964 = vmatpush1.msra.mxu0 0.0
    %965 = vmatprep.subr.mxu0 0.0
    %966 = vmatpush1.msra.mxu0 0.0
    %967 = vmatprep.subr.mxu0 0.0
    %968 = vmatpush1.msra.mxu0 0.0
    %969 = vmatprep.subr.mxu0 0.0
    %970 = vmatpush1.msra.mxu0 0.0
    %971 = vmatprep.subr.mxu0 0.0
    %972 = vmatpush1.msra.mxu0 0.0
    %973 = vmatprep.subr.mxu0 0.0
    %974 = vmatpush1.msra.mxu0 0.0
    %975 = vmatprep.subr.mxu0 0.0
    %976 = vmatpush1.msra.mxu0 0.0
    %977 = vmatprep.subr.mxu0 0.0
    %978 = vmatpush1.msra.mxu0 0.0
    %979 = vmatprep.subr.mxu0 0.0
    %980 = vmatpush1.msra.mxu0 0.0
    %981 = vmatprep.subr.mxu0 0.0
    %982 = vmatpush1.msra.mxu0 0.0
    %983 = vmatprep.subr.mxu0 0.0
    %984 = vmatpush1.msra.mxu0 0.0
    %985 = vmatprep.subr.mxu0 0.0
    %986 = vmatpush1.msra.mxu0 0.0
    %987 = vmatprep.subr.mxu0 0.0
    %988 = vmatpush1.msra.mxu0 0.0
    %989 = vmatprep.subr.mxu0 0.0
    %990 = vmatpush1.msra.mxu0 0.0
    %991 = vmatprep.subr.mxu0 0.0
    %992 = vmatpush1.msra.mxu0 0.0
    %993 = vmatprep.subr.mxu0 0.0
    %994 = vmatpush1.msra.mxu0 0.0
    %995 = vmatprep.subr.mxu0 0.0
    %996 = vmatpush1.msra.mxu0 0.0
    %997 = vmatprep.subr.mxu0 0.0
    %998 = vmatpush1.msra.mxu0 0.0
    %999 = vmatprep.subr.mxu0 0.0
    %1000 = vmatpush1.msra.mxu0 0.0
    %1001 = vmatprep.mubr.f32.mxu0 0.0
    %1002 = vmatmul.mubr.f32.gmra.mrb[0].mxu0 %v935
    %v1003 = vpop.f32.mrb[0].mxu0
    %v1004 = vadd.f32 0.0, %v1003
    %v1005 = vpop.f32.mrb[0].mxu0
    %1006 = vdwg.mxu0
    %v1008 = vsel %vm320, %v1004, 0
    %1010 = vmatprep.subr.mxu0 0.0
    %1011 = vmatpush1.msra.mxu0 %v107
    %1012 = vmatprep.subr.mxu0 0.0
    %1013 = vmatpush1.msra.mxu0 %v108
    %1014 = vmatprep.subr.mxu0 0.0
    %1015 = vmatpush1.msra.mxu0 %v109
    %1016 = vmatprep.subr.mxu0 0.0
    %1017 = vmatpush1.msra.mxu0 %v110
    %1018 = vmatprep.subr.mxu0 0.0
    %1019 = vmatpush1.msra.mxu0 %v111
    %1020 = vmatprep.subr.mxu0 0.0
    %1021 = vmatpush1.msra.mxu0 %v112
    %1022 = vmatprep.subr.mxu0 0.0
    %1023 = vmatpush1.msra.mxu0 %v113
    %1024 = vmatprep.subr.mxu0 0.0
    %1025 = vmatpush1.msra.mxu0 %v114
    %1026 = vmatprep.subr.mxu0 0.0
    %1027 = vmatpush1.msra.mxu0 0.0
    %1028 = vmatprep.subr.mxu0 0.0
    %1029 = vmatpush1.msra.mxu0 0.0
    %1030 = vmatprep.subr.mxu0 0.0
    %1031 = vmatpush1.msra.mxu0 0.0
    %1032 = vmatprep.subr.mxu0 0.0
    %1033 = vmatpush1.msra.mxu0 0.0
    %1034 = vmatprep.subr.mxu0 0.0
    %1035 = vmatpush1.msra.mxu0 0.0
    %1036 = vmatprep.subr.mxu0 0.0
    %1037 = vmatpush1.msra.mxu0 0.0
    %1038 = vmatprep.subr.mxu0 0.0
    %1039 = vmatpush1.msra.mxu0 0.0
    %1040 = vmatprep.subr.mxu0 0.0
    %1041 = vmatpush1.msra.mxu0 0.0
    %1042 = vmatprep.subr.mxu0 0.0
    %1043 = vmatpush1.msra.mxu0 0.0
    %1044 = vmatprep.subr.mxu0 0.0
    %1045 = vmatpush1.msra.mxu0 0.0
    %1046 = vmatprep.subr.mxu0 0.0
    %1047 = vmatpush1.msra.mxu0 0.0
    %1048 = vmatprep.subr.mxu0 0.0
    %1049 = vmatpush1.msra.mxu0 0.0
    %1050 = vmatprep.subr.mxu0 0.0
    %1051 = vmatpush1.msra.mxu0 0.0
    %1052 = vmatprep.subr.mxu0 0.0
    %1053 = vmatpush1.msra.mxu0 0.0
    %1054 = vmatprep.subr.mxu0 0.0
    %1055 = vmatpush1.msra.mxu0 0.0
    %1056 = vmatprep.subr.mxu0 0.0
    %1057 = vmatpush1.msra.mxu0 0.0
    %1058 = vmatprep.subr.mxu0 0.0
    %1059 = vmatpush1.msra.mxu0 0.0
    %1060 = vmatprep.subr.mxu0 0.0
    %1061 = vmatpush1.msra.mxu0 0.0
    %1062 = vmatprep.subr.mxu0 0.0
    %1063 = vmatpush1.msra.mxu0 0.0
    %1064 = vmatprep.subr.mxu0 0.0
    %1065 = vmatpush1.msra.mxu0 0.0
    %1066 = vmatprep.subr.mxu0 0.0
    %1067 = vmatpush1.msra.mxu0 0.0
    %1068 = vmatprep.subr.mxu0 0.0
    %1069 = vmatpush1.msra.mxu0 0.0
    %1070 = vmatprep.subr.mxu0 0.0
    %1071 = vmatpush1.msra.mxu0 0.0
    %1072 = vmatprep.subr.mxu0 0.0
    %1073 = vmatpush1.msra.mxu0 0.0
    %1074 = vmatprep.mubr.f32.mxu0 0.0
    %1075 = vmatmul.mubr.f32.gmra.mrb[0].mxu0 %v1008
    %v1076 = vpop.f32.mrb[0].mxu0
    %v1077 = vadd.f32 0.0, %v1076
    %v1078 = vpop.f32.mrb[0].mxu0
    %1079 = vdwg.mxu0
    %v1081 = vsel %vm242, %v236, 0
    %v1084 = vsel %vm246, %v849, 0
    %1086 = vmatprep.subr.mxu0 0.0
    %1087 = vmatpush1.msra.mxu0 %v848
    %1088 = vmatprep.subr.mxu0 0.0
    %1089 = vmatpush1.msra.mxu0 %v1084
    %1090 = vmatprep.subr.mxu0 0.0
    %1091 = vmatpush1.msra.mxu0 0.0
    %1092 = vmatprep.subr.mxu0 0.0
    %1093 = vmatpush1.msra.mxu0 0.0
    %1094 = vmatprep.subr.mxu0 0.0
    %1095 = vmatpush1.msra.mxu0 0.0
    %1096 = vmatprep.subr.mxu0 0.0
    %1097 = vmatpush1.msra.mxu0 0.0
    %1098 = vmatprep.subr.mxu0 0.0
    %1099 = vmatpush1.msra.mxu0 0.0
    %1100 = vmatprep.subr.mxu0 0.0
    %1101 = vmatpush1.msra.mxu0 0.0
    %1102 = vmatprep.subr.mxu0 0.0
    %1103 = vmatpush1.msra.mxu0 0.0
    %1104 = vmatprep.subr.mxu0 0.0
    %1105 = vmatpush1.msra.mxu0 0.0
    %1106 = vmatprep.subr.mxu0 0.0
    %1107 = vmatpush1.msra.mxu0 0.0
    %1108 = vmatprep.subr.mxu0 0.0
    %1109 = vmatpush1.msra.mxu0 0.0
    %1110 = vmatprep.subr.mxu0 0.0
    %1111 = vmatpush1.msra.mxu0 0.0
    %1112 = vmatprep.subr.mxu0 0.0
    %1113 = vmatpush1.msra.mxu0 0.0
    %1114 = vmatprep.subr.mxu0 0.0
    %1115 = vmatpush1.msra.mxu0 0.0
    %1116 = vmatprep.subr.mxu0 0.0
    %1117 = vmatpush1.msra.mxu0 0.0
    %1118 = vmatprep.subr.mxu0 0.0
    %1119 = vmatpush1.msra.mxu0 0.0
    %1120 = vmatprep.subr.mxu0 0.0
    %1121 = vmatpush1.msra.mxu0 0.0
    %1122 = vmatprep.subr.mxu0 0.0
    %1123 = vmatpush1.msra.mxu0 0.0
    %1124 = vmatprep.subr.mxu0 0.0
    %1125 = vmatpush1.msra.mxu0 0.0
    %1126 = vmatprep.subr.mxu0 0.0
    %1127 = vmatpush1.msra.mxu0 0.0
    %1128 = vmatprep.subr.mxu0 0.0
    %1129 = vmatpush1.msra.mxu0 0.0
    %1130 = vmatprep.subr.mxu0 0.0
    %1131 = vmatpush1.msra.mxu0 0.0
    %1132 = vmatprep.subr.mxu0 0.0
    %1133 = vmatpush1.msra.mxu0 0.0
    %1134 = vmatprep.subr.mxu0 0.0
    %1135 = vmatpush1.msra.mxu0 0.0
    %1136 = vmatprep.subr.mxu0 0.0
    %1137 = vmatpush1.msra.mxu0 0.0
    %1138 = vmatprep.subr.mxu0 0.0
    %1139 = vmatpush1.msra.mxu0 0.0
    %1140 = vmatprep.subr.mxu0 0.0
    %1141 = vmatpush1.msra.mxu0 0.0
    %1142 = vmatprep.subr.mxu0 0.0
    %1143 = vmatpush1.msra.mxu0 0.0
    %1144 = vmatprep.subr.mxu0 0.0
    %1145 = vmatpush1.msra.mxu0 0.0
    %1146 = vmatprep.subr.mxu0 0.0
    %1147 = vmatpush1.msra.mxu0 0.0
    %1148 = vmatprep.subr.mxu0 0.0
    %1149 = vmatpush1.msra.mxu0 0.0
    %1150 = vmatprep.mubr.f32.mxu0 0.0
    %1151 = vmatmul.mubr.f32.gmra.mrb[0].mxu0 %v1081
    %v1152 = vpop.f32.mrb[0].mxu0
    %v1153 = vadd.f32 0.0, %v1152
    %v1154 = vpop.f32.mrb[0].mxu0
    %1155 = vdwg.mxu0
    %v1157 = vsel %vm242, %v237, 0
    %1159 = vmatprep.subr.mxu0 0.0
    %1160 = vmatpush1.msra.mxu0 %v848
    %1161 = vmatprep.subr.mxu0 0.0
    %1162 = vmatpush1.msra.mxu0 %v1084
    %1163 = vmatprep.subr.mxu0 0.0
    %1164 = vmatpush1.msra.mxu0 0.0
    %1165 = vmatprep.subr.mxu0 0.0
    %1166 = vmatpush1.msra.mxu0 0.0
    %1167 = vmatprep.subr.mxu0 0.0
    %1168 = vmatpush1.msra.mxu0 0.0
    %1169 = vmatprep.subr.mxu0 0.0
    %1170 = vmatpush1.msra.mxu0 0.0
    %1171 = vmatprep.subr.mxu0 0.0
    %1172 = vmatpush1.msra.mxu0 0.0
    %1173 = vmatprep.subr.mxu0 0.0
    %1174 = vmatpush1.msra.mxu0 0.0
    %1175 = vmatprep.subr.mxu0 0.0
    %1176 = vmatpush1.msra.mxu0 0.0
    %1177 = vmatprep.subr.mxu0 0.0
    %1178 = vmatpush1.msra.mxu0 0.0
    %1179 = vmatprep.subr.mxu0 0.0
    %1180 = vmatpush1.msra.mxu0 0.0
    %1181 = vmatprep.subr.mxu0 0.0
    %1182 = vmatpush1.msra.mxu0 0.0
    %1183 = vmatprep.subr.mxu0 0.0
    %1184 = vmatpush1.msra.mxu0 0.0
    %1185 = vmatprep.subr.mxu0 0.0
    %1186 = vmatpush1.msra.mxu0 0.0
    %1187 = vmatprep.subr.mxu0 0.0
    %1188 = vmatpush1.msra.mxu0 0.0
    %1189 = vmatprep.subr.mxu0 0.0
    %1190 = vmatpush1.msra.mxu0 0.0
    %1191 = vmatprep.subr.mxu0 0.0
    %1192 = vmatpush1.msra.mxu0 0.0
    %1193 = vmatprep.subr.mxu0 0.0
    %1194 = vmatpush1.msra.mxu0 0.0
    %1195 = vmatprep.subr.mxu0 0.0
    %1196 = vmatpush1.msra.mxu0 0.0
    %1197 = vmatprep.subr.mxu0 0.0
    %1198 = vmatpush1.msra.mxu0 0.0
    %1199 = vmatprep.subr.mxu0 0.0
    %1200 = vmatpush1.msra.mxu0 0.0
    %1201 = vmatprep.subr.mxu0 0.0
    %1202 = vmatpush1.msra.mxu0 0.0
    %1203 = vmatprep.subr.mxu0 0.0
    %1204 = vmatpush1.msra.mxu0 0.0
    %1205 = vmatprep.subr.mxu0 0.0
    %1206 = vmatpush1.msra.mxu0 0.0
    %1207 = vmatprep.subr.mxu0 0.0
    %1208 = vmatpush1.msra.mxu0 0.0
    %1209 = vmatprep.subr.mxu0 0.0
    %1210 = vmatpush1.msra.mxu0 0.0
    %1211 = vmatprep.subr.mxu0 0.0
    %1212 = vmatpush1.msra.mxu0 0.0
    %1213 = vmatprep.subr.mxu0 0.0
    %1214 = vmatpush1.msra.mxu0 0.0
    %1215 = vmatprep.subr.mxu0 0.0
    %1216 = vmatpush1.msra.mxu0 0.0
    %1217 = vmatprep.subr.mxu0 0.0
    %1218 = vmatpush1.msra.mxu0 0.0
    %1219 = vmatprep.subr.mxu0 0.0
    %1220 = vmatpush1.msra.mxu0 0.0
    %1221 = vmatprep.subr.mxu0 0.0
    %1222 = vmatpush1.msra.mxu0 0.0
    %1223 = vmatprep.mubr.f32.mxu0 0.0
    %1224 = vmatmul.mubr.f32.gmra.mrb[0].mxu0 %v1157
    %v1225 = vpop.f32.mrb[0].mxu0
    %v1226 = vadd.f32 0.0, %v1225
    %v1227 = vpop.f32.mrb[0].mxu0
    %1228 = vdwg.mxu0
    %v1229 = vadd.f32 %v1153, %v1226
    %v1231 = vsel %vm126, %v1229, 0
    %1233 = vmatprep.subr.mxu0 0.0
    %1234 = vmatpush1.msra.mxu0 %v115
    %1235 = vmatprep.subr.mxu0 0.0
    %1236 = vmatpush1.msra.mxu0 %v116
    %1237 = vmatprep.subr.mxu0 0.0
    %1238 = vmatpush1.msra.mxu0 %v117
    %1239 = vmatprep.subr.mxu0 0.0
    %1240 = vmatpush1.msra.mxu0 %v118
    %1241 = vmatprep.subr.mxu0 0.0
    %1242 = vmatpush1.msra.mxu0 0.0
    %1243 = vmatprep.subr.mxu0 0.0
    %1244 = vmatpush1.msra.mxu0 0.0
    %1245 = vmatprep.subr.mxu0 0.0
    %1246 = vmatpush1.msra.mxu0 0.0
    %1247 = vmatprep.subr.mxu0 0.0
    %1248 = vmatpush1.msra.mxu0 0.0
    %1249 = vmatprep.subr.mxu0 0.0
    %1250 = vmatpush1.msra.mxu0 0.0
    %1251 = vmatprep.subr.mxu0 0.0
    %1252 = vmatpush1.msra.mxu0 0.0
    %1253 = vmatprep.subr.mxu0 0.0
    %1254 = vmatpush1.msra.mxu0 0.0
    %1255 = vmatprep.subr.mxu0 0.0
    %1256 = vmatpush1.msra.mxu0 0.0
    %1257 = vmatprep.subr.mxu0 0.0
    %1258 = vmatpush1.msra.mxu0 0.0
    %1259 = vmatprep.subr.mxu0 0.0
    %1260 = vmatpush1.msra.mxu0 0.0
    %1261 = vmatprep.subr.mxu0 0.0
    %1262 = vmatpush1.msra.mxu0 0.0
    %1263 = vmatprep.subr.mxu0 0.0
    %1264 = vmatpush1.msra.mxu0 0.0
    %1265 = vmatprep.subr.mxu0 0.0
    %1266 = vmatpush1.msra.mxu0 0.0
    %1267 = vmatprep.subr.mxu0 0.0
    %1268 = vmatpush1.msra.mxu0 0.0
    %1269 = vmatprep.subr.mxu0 0.0
    %1270 = vmatpush1.msra.mxu0 0.0
    %1271 = vmatprep.subr.mxu0 0.0
    %1272 = vmatpush1.msra.mxu0 0.0
    %1273 = vmatprep.subr.mxu0 0.0
    %1274 = vmatpush1.msra.mxu0 0.0
    %1275 = vmatprep.subr.mxu0 0.0
    %1276 = vmatpush1.msra.mxu0 0.0
    %1277 = vmatprep.subr.mxu0 0.0
    %1278 = vmatpush1.msra.mxu0 0.0
    %1279 = vmatprep.subr.mxu0 0.0
    %1280 = vmatpush1.msra.mxu0 0.0
    %1281 = vmatprep.subr.mxu0 0.0
    %1282 = vmatpush1.msra.mxu0 0.0
    %1283 = vmatprep.subr.mxu0 0.0
    %1284 = vmatpush1.msra.mxu0 0.0
    %1285 = vmatprep.subr.mxu0 0.0
    %1286 = vmatpush1.msra.mxu0 0.0
    %1287 = vmatprep.subr.mxu0 0.0
    %1288 = vmatpush1.msra.mxu0 0.0
    %1289 = vmatprep.subr.mxu0 0.0
    %1290 = vmatpush1.msra.mxu0 0.0
    %1291 = vmatprep.subr.mxu0 0.0
    %1292 = vmatpush1.msra.mxu0 0.0
    %1293 = vmatprep.subr.mxu0 0.0
    %1294 = vmatpush1.msra.mxu0 0.0
    %1295 = vmatprep.subr.mxu0 0.0
    %1296 = vmatpush1.msra.mxu0 0.0
    %1297 = vmatprep.mubr.f32.mxu0 0.0
    %1298 = vmatmul.mubr.f32.gmra.mrb[0].mxu0 %v1231
    %v1299 = vpop.f32.mrb[0].mxu0
    %v1300 = vadd.f32 %v548, %v1299
    %v1301 = vpop.f32.mrb[0].mxu0
    %1302 = vdwg.mxu0
    %v1303 = vadd.f32 %v1077, %v1300
    %v1304 = vxor.u32 %v1303, 2147483648
    %v1305 = vmul.f32 %v1304, 1.442695
    %v1306 = vpow.pop %v1305
    %v1307 = vadd.f32 %v1306, 1.0
    %v1308 = vrcp.pop %v1307
    %v1309 = vmul.f32 1.0, %v1308
    %v1310 = vtanh.pop %v1303
    %v1312 = vsel %vm126, %v1153, 0
    %v1315 = vsel %vm126, %v1226, 0
    %1317 = vmatprep.subr.mxu0 0.0
    %1318 = vmatpush1.msra.mxu0 %v115
    %1319 = vmatprep.subr.mxu0 0.0
    %1320 = vmatpush1.msra.mxu0 %v116
    %1321 = vmatprep.subr.mxu0 0.0
    %1322 = vmatpush1.msra.mxu0 %v117
    %1323 = vmatprep.subr.mxu0 0.0
    %1324 = vmatpush1.msra.mxu0 %v118
    %1325 = vmatprep.subr.mxu0 0.0
    %1326 = vmatpush1.msra.mxu0 0.0
    %1327 = vmatprep.subr.mxu0 0.0
    %1328 = vmatpush1.msra.mxu0 0.0
    %1329 = vmatprep.subr.mxu0 0.0
    %1330 = vmatpush1.msra.mxu0 0.0
    %1331 = vmatprep.subr.mxu0 0.0
    %1332 = vmatpush1.msra.mxu0 0.0
    %1333 = vmatprep.subr.mxu0 0.0
    %1334 = vmatpush1.msra.mxu0 0.0
    %1335 = vmatprep.subr.mxu0 0.0
    %1336 = vmatpush1.msra.mxu0 0.0
    %1337 = vmatprep.subr.mxu0 0.0
    %1338 = vmatpush1.msra.mxu0 0.0
    %1339 = vmatprep.subr.mxu0 0.0
    %1340 = vmatpush1.msra.mxu0 0.0
    %1341 = vmatprep.subr.mxu0 0.0
    %1342 = vmatpush1.msra.mxu0 0.0
    %1343 = vmatprep.subr.mxu0 0.0
    %1344 = vmatpush1.msra.mxu0 0.0
    %1345 = vmatprep.subr.mxu0 0.0
    %1346 = vmatpush1.msra.mxu0 0.0
    %1347 = vmatprep.subr.mxu0 0.0
    %1348 = vmatpush1.msra.mxu0 0.0
    %1349 = vmatprep.subr.mxu0 0.0
    %1350 = vmatpush1.msra.mxu0 0.0
    %1351 = vmatprep.subr.mxu0 0.0
    %1352 = vmatpush1.msra.mxu0 0.0
    %1353 = vmatprep.subr.mxu0 0.0
    %1354 = vmatpush1.msra.mxu0 0.0
    %1355 = vmatprep.subr.mxu0 0.0
    %1356 = vmatpush1.msra.mxu0 0.0
    %1357 = vmatprep.subr.mxu0 0.0
    %1358 = vmatpush1.msra.mxu0 0.0
    %1359 = vmatprep.subr.mxu0 0.0
    %1360 = vmatpush1.msra.mxu0 0.0
    %1361 = vmatprep.subr.mxu0 0.0
    %1362 = vmatpush1.msra.mxu0 0.0
    %1363 = vmatprep.subr.mxu0 0.0
    %1364 = vmatpush1.msra.mxu0 0.0
    %1365 = vmatprep.subr.mxu0 0.0
    %1366 = vmatpush1.msra.mxu0 0.0
    %1367 = vmatprep.subr.mxu0 0.0
    %1368 = vmatpush1.msra.mxu0 0.0
    %1369 = vmatprep.subr.mxu0 0.0
    %1370 = vmatpush1.msra.mxu0 0.0
    %1371 = vmatprep.subr.mxu0 0.0
    %1372 = vmatpush1.msra.mxu0 0.0
    %1373 = vmatprep.subr.mxu0 0.0
    %1374 = vmatpush1.msra.mxu0 0.0
    %1375 = vmatprep.subr.mxu0 0.0
    %1376 = vmatpush1.msra.mxu0 0.0
    %1377 = vmatprep.subr.mxu0 0.0
    %1378 = vmatpush1.msra.mxu0 0.0
    %1379 = vmatprep.subr.mxu0 0.0
    %1380 = vmatpush1.msra.mxu0 0.0
    %1381 = vmatprep.mubr.f32.mxu0 0.0
    %1382 = vmatmul.mubr.f32.gmra.mrb[0].mxu0 %v1312
    %v1383 = vpop.f32.mrb[0].mxu0
    %v1384 = vadd.f32 %v548, %v1383
    %v1385 = vpop.f32.mrb[0].mxu0
    %1386 = vmatprep.mubr.f32.mxu0 0.0
    %1387 = vmatmul.mubr.f32.gmra.mrb[0].mxu0 %v1315
    %v1388 = vpop.f32.mrb[0].mxu0
    %v1389 = vadd.f32 %v548, %v1388
    %v1390 = vpop.f32.mrb[0].mxu0
    %1391 = vdwg.mxu0
    %v1392 = vadd.f32 %v1077, %v1384
    %v1393 = vxor.u32 %v1392, 2147483648
    %v1394 = vmul.f32 %v1393, 1.442695
    %v1395 = vpow.pop %v1394
    %v1396 = vadd.f32 %v1395, 1.0
    %v1397 = vrcp.pop %v1396
    %v1398 = vmul.f32 1.0, %v1397
    %v1399 = vmul.f32 %v1398, %v1153
    %v1400 = vadd.f32 %v1399, 0.0
    %v1401 = vadd.f32 %v1077, %v1389
    %v1402 = vxor.u32 %v1401, 2147483648
    %v1403 = vmul.f32 %v1402, 1.442695
    %v1404 = vpow.pop %v1403
    %v1405 = vadd.f32 %v1404, 1.0
    %v1406 = vrcp.pop %v1405
    %v1407 = vmul.f32 1.0, %v1406
    %v1408 = vmul.f32 %v1407, %v1226
    %v1409 = vadd.f32 %v1400, %v1408
    %1411 = vrot.lane.b32.xlu0 %v1310, 32
    %v1412 = vpop.permute.xlu0 %1411
    %v1414 = vmul.f32 %v1309, %v1412
    %1416 = vrot.lane.b32.xlu0 %v1409, 96
    %v1417 = vpop.permute.xlu0 %1416
    %v1419 = vadd.f32 %v1414, %v1417
    %v1420 = vtanh.pop %v1419
    %1422 = vrot.lane.b32.xlu0 %v1420, 64
    %v1423 = vpop.permute.xlu0 %1422
    %v1425 = vmul.f32 %v1309, %v1423
    %1427 = vrot.lane.b32.xlu0 %v1425, 64
    %v1428 = vpop.permute.xlu0 %1427
    %1431 = vrot.lane.b32.xlu0 %v1419, 32
    %v1432 = vpop.permute.xlu0 %1431
    %v1434 = vsel %vm126, %v1428, %v1432
    %v1435 = vsel %vm755, %v234, 0.0
    %1436 = vadd.xlane.f32.xlu0 %v1435
    %v1437 = vpop.xlane.xlu0 %1436
    %v1438 = vsel %vm759, %v235, 0.0
    %1439 = vadd.xlane.f32.xlu0 %v1438
    %v1440 = vpop.xlane.xlu0 %1439
    %v1441 = vsub.f32 1.0, %v1437
    %v1442 = vsub.f32 1.0, %v1440
    %v1443 = vmul.f32 %v848, %v1441
    %v1444 = vmul.f32 %v849, %v1442
    %v1446 = vsel %vm755, %v234, 0
    %v1449 = vsel %vm755, %v235, 0
    %1451 = vmatprep.subr.mxu0 0.0
    %1452 = vmatpush1.msra.mxu0 %v1434
    %1453 = vmatprep.subr.mxu0 0.0
    %1454 = vmatpush1.msra.mxu0 0.0
    %1455 = vmatprep.subr.mxu0 0.0
    %1456 = vmatpush1.msra.mxu0 0.0
    %1457 = vmatprep.subr.mxu0 0.0
    %1458 = vmatpush1.msra.mxu0 0.0
    %1459 = vmatprep.subr.mxu0 0.0
    %1460 = vmatpush1.msra.mxu0 0.0
    %1461 = vmatprep.subr.mxu0 0.0
    %1462 = vmatpush1.msra.mxu0 0.0
    %1463 = vmatprep.subr.mxu0 0.0
    %1464 = vmatpush1.msra.mxu0 0.0
    %1465 = vmatprep.subr.mxu0 0.0
    %1466 = vmatpush1.msra.mxu0 0.0
    %1467 = vmatprep.subr.mxu0 0.0
    %1468 = vmatpush1.msra.mxu0 0.0
    %1469 = vmatprep.subr.mxu0 0.0
    %1470 = vmatpush1.msra.mxu0 0.0
    %1471 = vmatprep.subr.mxu0 0.0
    %1472 = vmatpush1.msra.mxu0 0.0
    %1473 = vmatprep.subr.mxu0 0.0
    %1474 = vmatpush1.msra.mxu0 0.0
    %1475 = vmatprep.subr.mxu0 0.0
    %1476 = vmatpush1.msra.mxu0 0.0
    %1477 = vmatprep.subr.mxu0 0.0
    %1478 = vmatpush1.msra.mxu0 0.0
    %1479 = vmatprep.subr.mxu0 0.0
    %1480 = vmatpush1.msra.mxu0 0.0
    %1481 = vmatprep.subr.mxu0 0.0
    %1482 = vmatpush1.msra.mxu0 0.0
    %1483 = vmatprep.subr.mxu0 0.0
    %1484 = vmatpush1.msra.mxu0 0.0
    %1485 = vmatprep.subr.mxu0 0.0
    %1486 = vmatpush1.msra.mxu0 0.0
    %1487 = vmatprep.subr.mxu0 0.0
    %1488 = vmatpush1.msra.mxu0 0.0
    %1489 = vmatprep.subr.mxu0 0.0
    %1490 = vmatpush1.msra.mxu0 0.0
    %1491 = vmatprep.subr.mxu0 0.0
    %1492 = vmatpush1.msra.mxu0 0.0
    %1493 = vmatprep.subr.mxu0 0.0
    %1494 = vmatpush1.msra.mxu0 0.0
    %1495 = vmatprep.subr.mxu0 0.0
    %1496 = vmatpush1.msra.mxu0 0.0
    %1497 = vmatprep.subr.mxu0 0.0
    %1498 = vmatpush1.msra.mxu0 0.0
    %1499 = vmatprep.subr.mxu0 0.0
    %1500 = vmatpush1.msra.mxu0 0.0
    %1501 = vmatprep.subr.mxu0 0.0
    %1502 = vmatpush1.msra.mxu0 0.0
    %1503 = vmatprep.subr.mxu0 0.0
    %1504 = vmatpush1.msra.mxu0 0.0
    %1505 = vmatprep.subr.mxu0 0.0
    %1506 = vmatpush1.msra.mxu0 0.0
    %1507 = vmatprep.subr.mxu0 0.0
    %1508 = vmatpush1.msra.mxu0 0.0
    %1509 = vmatprep.subr.mxu0 0.0
    %1510 = vmatpush1.msra.mxu0 0.0
    %1511 = vmatprep.subr.mxu0 0.0
    %1512 = vmatpush1.msra.mxu0 0.0
    %1513 = vmatprep.subr.mxu0 0.0
    %1514 = vmatpush1.msra.mxu0 0.0
    %1515 = vmatprep.mubr.f32.mxu0 0.0
    %1516 = vmatmul.mubr.f32.gmra.mrb[0].mxu0 %v1446
    %v1517 = vpop.f32.mrb[0].mxu0
    %v1518 = vadd.f32 0.0, %v1517
    %v1519 = vpop.f32.mrb[0].mxu0
    %1520 = vmatprep.mubr.f32.mxu0 0.0
    %1521 = vmatmul.mubr.f32.gmra.mrb[0].mxu0 %v1449
    %v1522 = vpop.f32.mrb[0].mxu0
    %v1523 = vadd.f32 0.0, %v1522
    %v1524 = vpop.f32.mrb[0].mxu0
    %1525 = vdwg.mxu0
    %v1526 = vadd.f32 %v1443, %v1518
    %v1527 = vadd.f32 %v1444, %v1523
    %v1528 = vmul.f32 %v932, %v1441
    %v1529 = vmul.f32 %v933, %v1442
    %v1530 = vtanh.pop %v1300
    %1532 = vrot.lane.b32.xlu0 %v1530, 32
    %v1533 = vpop.permute.xlu0 %1532
    %1535 = vmatprep.subr.mxu0 0.0
    %1536 = vmatpush1.msra.mxu0 %v1533
    %1537 = vmatprep.subr.mxu0 0.0
    %1538 = vmatpush1.msra.mxu0 0.0
    %1539 = vmatprep.subr.mxu0 0.0
    %1540 = vmatpush1.msra.mxu0 0.0
    %1541 = vmatprep.subr.mxu0 0.0
    %1542 = vmatpush1.msra.mxu0 0.0
    %1543 = vmatprep.subr.mxu0 0.0
    %1544 = vmatpush1.msra.mxu0 0.0
    %1545 = vmatprep.subr.mxu0 0.0
    %1546 = vmatpush1.msra.mxu0 0.0
    %1547 = vmatprep.subr.mxu0 0.0
    %1548 = vmatpush1.msra.mxu0 0.0
    %1549 = vmatprep.subr.mxu0 0.0
    %1550 = vmatpush1.msra.mxu0 0.0
    %1551 = vmatprep.subr.mxu0 0.0
    %1552 = vmatpush1.msra.mxu0 0.0
    %1553 = vmatprep.subr.mxu0 0.0
    %1554 = vmatpush1.msra.mxu0 0.0
    %1555 = vmatprep.subr.mxu0 0.0
    %1556 = vmatpush1.msra.mxu0 0.0
    %1557 = vmatprep.subr.mxu0 0.0
    %1558 = vmatpush1.msra.mxu0 0.0
    %1559 = vmatprep.subr.mxu0 0.0
    %1560 = vmatpush1.msra.mxu0 0.0
    %1561 = vmatprep.subr.mxu0 0.0
    %1562 = vmatpush1.msra.mxu0 0.0
    %1563 = vmatprep.subr.mxu0 0.0
    %1564 = vmatpush1.msra.mxu0 0.0
    %1565 = vmatprep.subr.mxu0 0.0
    %1566 = vmatpush1.msra.mxu0 0.0
    %1567 = vmatprep.subr.mxu0 0.0
    %1568 = vmatpush1.msra.mxu0 0.0
    %1569 = vmatprep.subr.mxu0 0.0
    %1570 = vmatpush1.msra.mxu0 0.0
    %1571 = vmatprep.subr.mxu0 0.0
    %1572 = vmatpush1.msra.mxu0 0.0
    %1573 = vmatprep.subr.mxu0 0.0
    %1574 = vmatpush1.msra.mxu0 0.0
    %1575 = vmatprep.subr.mxu0 0.0
    %1576 = vmatpush1.msra.mxu0 0.0
    %1577 = vmatprep.subr.mxu0 0.0
    %1578 = vmatpush1.msra.mxu0 0.0
    %1579 = vmatprep.subr.mxu0 0.0
    %1580 = vmatpush1.msra.mxu0 0.0
    %1581 = vmatprep.subr.mxu0 0.0
    %1582 = vmatpush1.msra.mxu0 0.0
    %1583 = vmatprep.subr.mxu0 0.0
    %1584 = vmatpush1.msra.mxu0 0.0
    %1585 = vmatprep.subr.mxu0 0.0
    %1586 = vmatpush1.msra.mxu0 0.0
    %1587 = vmatprep.subr.mxu0 0.0
    %1588 = vmatpush1.msra.mxu0 0.0
    %1589 = vmatprep.subr.mxu0 0.0
    %1590 = vmatpush1.msra.mxu0 0.0
    %1591 = vmatprep.subr.mxu0 0.0
    %1592 = vmatpush1.msra.mxu0 0.0
    %1593 = vmatprep.subr.mxu0 0.0
    %1594 = vmatpush1.msra.mxu0 0.0
    %1595 = vmatprep.subr.mxu0 0.0
    %1596 = vmatpush1.msra.mxu0 0.0
    %1597 = vmatprep.subr.mxu0 0.0
    %1598 = vmatpush1.msra.mxu0 0.0
    %1599 = vmatprep.mubr.f32.mxu0 0.0
    %1600 = vmatmul.mubr.f32.gmra.mrb[0].mxu0 %v1446
    %v1601 = vpop.f32.mrb[0].mxu0
    %v1602 = vadd.f32 0.0, %v1601
    %v1603 = vpop.f32.mrb[0].mxu0
    %1604 = vmatprep.mubr.f32.mxu0 0.0
    %1605 = vmatmul.mubr.f32.gmra.mrb[0].mxu0 %v1449
    %v1606 = vpop.f32.mrb[0].mxu0
    %v1607 = vadd.f32 0.0, %v1606
    %v1608 = vpop.f32.mrb[0].mxu0
    %1609 = vdwg.mxu0
    %v1610 = vadd.f32 %v1528, %v1602
    %v1611 = vadd.f32 %v1529, %v1607
    %v1613 = vsel %vm246, 0.0, 0
    %1615 = vmatprep.subr.mxu0 0.0
    %1616 = vmatpush1.msra.mxu0 0.0
    %1617 = vmatprep.subr.mxu0 0.0
    %1618 = vmatpush1.msra.mxu0 %v1613
    %1619 = vmatprep.subr.mxu0 0.0
    %1620 = vmatpush1.msra.mxu0 0.0
    %1621 = vmatprep.subr.mxu0 0.0
    %1622 = vmatpush1.msra.mxu0 0.0
    %1623 = vmatprep.subr.mxu0 0.0
    %1624 = vmatpush1.msra.mxu0 0.0
    %1625 = vmatprep.subr.mxu0 0.0
    %1626 = vmatpush1.msra.mxu0 0.0
    %1627 = vmatprep.subr.mxu0 0.0
    %1628 = vmatpush1.msra.mxu0 0.0
    %1629 = vmatprep.subr.mxu0 0.0
    %1630 = vmatpush1.msra.mxu0 0.0
    %1631 = vmatprep.subr.mxu0 0.0
    %1632 = vmatpush1.msra.mxu0 0.0
    %1633 = vmatprep.subr.mxu0 0.0
    %1634 = vmatpush1.msra.mxu0 0.0
    %1635 = vmatprep.subr.mxu0 0.0
    %1636 = vmatpush1.msra.mxu0 0.0
    %1637 = vmatprep.subr.mxu0 0.0
    %1638 = vmatpush1.msra.mxu0 0.0
    %1639 = vmatprep.subr.mxu0 0.0
    %1640 = vmatpush1.msra.mxu0 0.0
    %1641 = vmatprep.subr.mxu0 0.0
    %1642 = vmatpush1.msra.mxu0 0.0
    %1643 = vmatprep.subr.mxu0 0.0
    %1644 = vmatpush1.msra.mxu0 0.0
    %1645 = vmatprep.subr.mxu0 0.0
    %1646 = vmatpush1.msra.mxu0 0.0
    %1647 = vmatprep.subr.mxu0 0.0
    %1648 = vmatpush1.msra.mxu0 0.0
    %1649 = vmatprep.subr.mxu0 0.0
    %1650 = vmatpush1.msra.mxu0 0.0
    %1651 = vmatprep.subr.mxu0 0.0
    %1652 = vmatpush1.msra.mxu0 0.0
    %1653 = vmatprep.subr.mxu0 0.0
    %1654 = vmatpush1.msra.mxu0 0.0
    %1655 = vmatprep.subr.mxu0 0.0
    %1656 = vmatpush1.msra.mxu0 0.0
    %1657 = vmatprep.subr.mxu0 0.0
    %1658 = vmatpush1.msra.mxu0 0.0
    %1659 = vmatprep.subr.mxu0 0.0
    %1660 = vmatpush1.msra.mxu0 0.0
    %1661 = vmatprep.subr.mxu0 0.0
    %1662 = vmatpush1.msra.mxu0 0.0
    %1663 = vmatprep.subr.mxu0 0.0
    %1664 = vmatpush1.msra.mxu0 0.0
    %1665 = vmatprep.subr.mxu0 0.0
    %1666 = vmatpush1.msra.mxu0 0.0
    %1667 = vmatprep.subr.mxu0 0.0
    %1668 = vmatpush1.msra.mxu0 0.0
    %1669 = vmatprep.subr.mxu0 0.0
    %1670 = vmatpush1.msra.mxu0 0.0
    %1671 = vmatprep.subr.mxu0 0.0
    %1672 = vmatpush1.msra.mxu0 0.0
    %1673 = vmatprep.subr.mxu0 0.0
    %1674 = vmatpush1.msra.mxu0 0.0
    %1675 = vmatprep.subr.mxu0 0.0
    %1676 = vmatpush1.msra.mxu0 0.0
    %1677 = vmatprep.subr.mxu0 0.0
    %1678 = vmatpush1.msra.mxu0 0.0
    %1679 = vmatprep.mubr.f32.mxu0 0.0
    %1680 = vmatmul.mubr.f32.gmra.mrb[0].mxu0 %v935
    %v1681 = vpop.f32.mrb[0].mxu0
    %v1682 = vadd.f32 0.0, %v1681
    %v1683 = vpop.f32.mrb[0].mxu0
    %1684 = vdwg.mxu0
    %v1686 = vsel %vm246, %v1527, 0
    %1688 = vmatprep.subr.mxu0 0.0
    %1689 = vmatpush1.msra.mxu0 %v1526
    %1690 = vmatprep.subr.mxu0 0.0
    %1691 = vmatpush1.msra.mxu0 %v1686
    %1692 = vmatprep.subr.mxu0 0.0
    %1693 = vmatpush1.msra.mxu0 0.0
    %1694 = vmatprep.subr.mxu0 0.0
    %1695 = vmatpush1.msra.mxu0 0.0
    %1696 = vmatprep.subr.mxu0 0.0
    %1697 = vmatpush1.msra.mxu0 0.0
    %1698 = vmatprep.subr.mxu0 0.0
    %1699 = vmatpush1.msra.mxu0 0.0
    %1700 = vmatprep.subr.mxu0 0.0
    %1701 = vmatpush1.msra.mxu0 0.0
    %1702 = vmatprep.subr.mxu0 0.0
    %1703 = vmatpush1.msra.mxu0 0.0
    %1704 = vmatprep.subr.mxu0 0.0
    %1705 = vmatpush1.msra.mxu0 0.0
    %1706 = vmatprep.subr.mxu0 0.0
    %1707 = vmatpush1.msra.mxu0 0.0
    %1708 = vmatprep.subr.mxu0 0.0
    %1709 = vmatpush1.msra.mxu0 0.0
    %1710 = vmatprep.subr.mxu0 0.0
    %1711 = vmatpush1.msra.mxu0 0.0
    %1712 = vmatprep.subr.mxu0 0.0
    %1713 = vmatpush1.msra.mxu0 0.0
    %1714 = vmatprep.subr.mxu0 0.0
    %1715 = vmatpush1.msra.mxu0 0.0
    %1716 = vmatprep.subr.mxu0 0.0
    %1717 = vmatpush1.msra.mxu0 0.0
    %1718 = vmatprep.subr.mxu0 0.0
    %1719 = vmatpush1.msra.mxu0 0.0
    %1720 = vmatprep.subr.mxu0 0.0
    %1721 = vmatpush1.msra.mxu0 0.0
    %1722 = vmatprep.subr.mxu0 0.0
    %1723 = vmatpush1.msra.mxu0 0.0
    %1724 = vmatprep.subr.mxu0 0.0
    %1725 = vmatpush1.msra.mxu0 0.0
    %1726 = vmatprep.subr.mxu0 0.0
    %1727 = vmatpush1.msra.mxu0 0.0
    %1728 = vmatprep.subr.mxu0 0.0
    %1729 = vmatpush1.msra.mxu0 0.0
    %1730 = vmatprep.subr.mxu0 0.0
    %1731 = vmatpush1.msra.mxu0 0.0
    %1732 = vmatprep.subr.mxu0 0.0
    %1733 = vmatpush1.msra.mxu0 0.0
    %1734 = vmatprep.subr.mxu0 0.0
    %1735 = vmatpush1.msra.mxu0 0.0
    %1736 = vmatprep.subr.mxu0 0.0
    %1737 = vmatpush1.msra.mxu0 0.0
    %1738 = vmatprep.subr.mxu0 0.0
    %1739 = vmatpush1.msra.mxu0 0.0
    %1740 = vmatprep.subr.mxu0 0.0
    %1741 = vmatpush1.msra.mxu0 0.0
    %1742 = vmatprep.subr.mxu0 0.0
    %1743 = vmatpush1.msra.mxu0 0.0
    %1744 = vmatprep.subr.mxu0 0.0
    %1745 = vmatpush1.msra.mxu0 0.0
    %1746 = vmatprep.subr.mxu0 0.0
    %1747 = vmatpush1.msra.mxu0 0.0
    %1748 = vmatprep.subr.mxu0 0.0
    %1749 = vmatpush1.msra.mxu0 0.0
    %1750 = vmatprep.subr.mxu0 0.0
    %1751 = vmatpush1.msra.mxu0 0.0
    %1752 = vmatprep.mubr.f32.mxu0 0.0
    %1753 = vmatmul.mubr.f32.gmra.mrb[0].mxu0 %v1081
    %v1754 = vpop.f32.mrb[0].mxu0
    %v1755 = vadd.f32 0.0, %v1754
    %v1756 = vpop.f32.mrb[0].mxu0
    %1757 = vdwg.mxu0
    %1758 = vmatprep.subr.mxu0 0.0
    %1759 = vmatpush1.msra.mxu0 %v1526
    %1760 = vmatprep.subr.mxu0 0.0
    %1761 = vmatpush1.msra.mxu0 %v1686
    %1762 = vmatprep.subr.mxu0 0.0
    %1763 = vmatpush1.msra.mxu0 0.0
    %1764 = vmatprep.subr.mxu0 0.0
    %1765 = vmatpush1.msra.mxu0 0.0
    %1766 = vmatprep.subr.mxu0 0.0
    %1767 = vmatpush1.msra.mxu0 0.0
    %1768 = vmatprep.subr.mxu0 0.0
    %1769 = vmatpush1.msra.mxu0 0.0
    %1770 = vmatprep.subr.mxu0 0.0
    %1771 = vmatpush1.msra.mxu0 0.0
    %1772 = vmatprep.subr.mxu0 0.0
    %1773 = vmatpush1.msra.mxu0 0.0
    %1774 = vmatprep.subr.mxu0 0.0
    %1775 = vmatpush1.msra.mxu0 0.0
    %1776 = vmatprep.subr.mxu0 0.0
    %1777 = vmatpush1.msra.mxu0 0.0
    %1778 = vmatprep.subr.mxu0 0.0
    %1779 = vmatpush1.msra.mxu0 0.0
    %1780 = vmatprep.subr.mxu0 0.0
    %1781 = vmatpush1.msra.mxu0 0.0
    %1782 = vmatprep.subr.mxu0 0.0
    %1783 = vmatpush1.msra.mxu0 0.0
    %1784 = vmatprep.subr.mxu0 0.0
    %1785 = vmatpush1.msra.mxu0 0.0
    %1786 = vmatprep.subr.mxu0 0.0
    %1787 = vmatpush1.msra.mxu0 0.0
    %1788 = vmatprep.subr.mxu0 0.0
    %1789 = vmatpush1.msra.mxu0 0.0
    %1790 = vmatprep.subr.mxu0 0.0
    %1791 = vmatpush1.msra.mxu0 0.0
    %1792 = vmatprep.subr.mxu0 0.0
    %1793 = vmatpush1.msra.mxu0 0.0
    %1794 = vmatprep.subr.mxu0 0.0
    %1795 = vmatpush1.msra.mxu0 0.0
    %1796 = vmatprep.subr.mxu0 0.0
    %1797 = vmatpush1.msra.mxu0 0.0
    %1798 = vmatprep.subr.mxu0 0.0
    %1799 = vmatpush1.msra.mxu0 0.0
    %1800 = vmatprep.subr.mxu0 0.0
    %1801 = vmatpush1.msra.mxu0 0.0
    %1802 = vmatprep.subr.mxu0 0.0
    %1803 = vmatpush1.msra.mxu0 0.0
    %1804 = vmatprep.subr.mxu0 0.0
    %1805 = vmatpush1.msra.mxu0 0.0
    %1806 = vmatprep.subr.mxu0 0.0
    %1807 = vmatpush1.msra.mxu0 0.0
    %1808 = vmatprep.subr.mxu0 0.0
    %1809 = vmatpush1.msra.mxu0 0.0
    %1810 = vmatprep.subr.mxu0 0.0
    %1811 = vmatpush1.msra.mxu0 0.0
    %1812 = vmatprep.subr.mxu0 0.0
    %1813 = vmatpush1.msra.mxu0 0.0
    %1814 = vmatprep.subr.mxu0 0.0
    %1815 = vmatpush1.msra.mxu0 0.0
    %1816 = vmatprep.subr.mxu0 0.0
    %1817 = vmatpush1.msra.mxu0 0.0
    %1818 = vmatprep.subr.mxu0 0.0
    %1819 = vmatpush1.msra.mxu0 0.0
    %1820 = vmatprep.subr.mxu0 0.0
    %1821 = vmatpush1.msra.mxu0 0.0
    %1822 = vmatprep.mubr.f32.mxu0 0.0
    %1823 = vmatmul.mubr.f32.gmra.mrb[0].mxu0 %v1157
    %v1824 = vpop.f32.mrb[0].mxu0
    %v1825 = vadd.f32 0.0, %v1824
    %v1826 = vpop.f32.mrb[0].mxu0
    %1827 = vdwg.mxu0
    %v1828 = vadd.f32 %v1755, %v1825
    %v1830 = vsel %vm126, %v1755, 0
    %v1833 = vsel %vm126, %v1825, 0
    %v1836 = vsel %vm126, %v1682, 0
    %1838 = vmatprep.subr.mxu0 0.0
    %1839 = vmatpush1.msra.mxu0 %v115
    %1840 = vmatprep.subr.mxu0 0.0
    %1841 = vmatpush1.msra.mxu0 %v116
    %1842 = vmatprep.subr.mxu0 0.0
    %1843 = vmatpush1.msra.mxu0 %v117
    %1844 = vmatprep.subr.mxu0 0.0
    %1845 = vmatpush1.msra.mxu0 %v118
    %1846 = vmatprep.subr.mxu0 0.0
    %1847 = vmatpush1.msra.mxu0 0.0
    %1848 = vmatprep.subr.mxu0 0.0
    %1849 = vmatpush1.msra.mxu0 0.0
    %1850 = vmatprep.subr.mxu0 0.0
    %1851 = vmatpush1.msra.mxu0 0.0
    %1852 = vmatprep.subr.mxu0 0.0
    %1853 = vmatpush1.msra.mxu0 0.0
    %1854 = vmatprep.subr.mxu0 0.0
    %1855 = vmatpush1.msra.mxu0 0.0
    %1856 = vmatprep.subr.mxu0 0.0
    %1857 = vmatpush1.msra.mxu0 0.0
    %1858 = vmatprep.subr.mxu0 0.0
    %1859 = vmatpush1.msra.mxu0 0.0
    %1860 = vmatprep.subr.mxu0 0.0
    %1861 = vmatpush1.msra.mxu0 0.0
    %1862 = vmatprep.subr.mxu0 0.0
    %1863 = vmatpush1.msra.mxu0 0.0
    %1864 = vmatprep.subr.mxu0 0.0
    %1865 = vmatpush1.msra.mxu0 0.0
    %1866 = vmatprep.subr.mxu0 0.0
    %1867 = vmatpush1.msra.mxu0 0.0
    %1868 = vmatprep.subr.mxu0 0.0
    %1869 = vmatpush1.msra.mxu0 0.0
    %1870 = vmatprep.subr.mxu0 0.0
    %1871 = vmatpush1.msra.mxu0 0.0
    %1872 = vmatprep.subr.mxu0 0.0
    %1873 = vmatpush1.msra.mxu0 0.0
    %1874 = vmatprep.subr.mxu0 0.0
    %1875 = vmatpush1.msra.mxu0 0.0
    %1876 = vmatprep.subr.mxu0 0.0
    %1877 = vmatpush1.msra.mxu0 0.0
    %1878 = vmatprep.subr.mxu0 0.0
    %1879 = vmatpush1.msra.mxu0 0.0
    %1880 = vmatprep.subr.mxu0 0.0
    %1881 = vmatpush1.msra.mxu0 0.0
    %1882 = vmatprep.subr.mxu0 0.0
    %1883 = vmatpush1.msra.mxu0 0.0
    %1884 = vmatprep.subr.mxu0 0.0
    %1885 = vmatpush1.msra.mxu0 0.0
    %1886 = vmatprep.subr.mxu0 0.0
    %1887 = vmatpush1.msra.mxu0 0.0
    %1888 = vmatprep.subr.mxu0 0.0
    %1889 = vmatpush1.msra.mxu0 0.0
    %1890 = vmatprep.subr.mxu0 0.0
    %1891 = vmatpush1.msra.mxu0 0.0
    %1892 = vmatprep.subr.mxu0 0.0
    %1893 = vmatpush1.msra.mxu0 0.0
    %1894 = vmatprep.subr.mxu0 0.0
    %1895 = vmatpush1.msra.mxu0 0.0
    %1896 = vmatprep.subr.mxu0 0.0
    %1897 = vmatpush1.msra.mxu0 0.0
    %1898 = vmatprep.subr.mxu0 0.0
    %1899 = vmatpush1.msra.mxu0 0.0
    %1900 = vmatprep.subr.mxu0 0.0
    %1901 = vmatpush1.msra.mxu0 0.0
    %1902 = vmatprep.mubr.f32.mxu0 0.0
    %1903 = vmatmul.mubr.f32.gmra.mrb[0].mxu0 %v1830
    %v1904 = vpop.f32.mrb[0].mxu0
    %v1905 = vadd.f32 %v548, %v1904
    %v1906 = vpop.f32.mrb[0].mxu0
    %1907 = vmatprep.mubr.f32.mxu0 0.0
    %1908 = vmatmul.mubr.f32.gmra.mrb[0].mxu0 %v1833
    %v1909 = vpop.f32.mrb[0].mxu0
    %v1910 = vadd.f32 %v548, %v1909
    %v1911 = vpop.f32.mrb[0].mxu0
    %1912 = vmatprep.mubr.f32.mxu0 0.0
    %1913 = vmatmul.mubr.f32.gmra.mrb[0].mxu0 %v1836
    %v1914 = vpop.f32.mrb[0].mxu0
    %v1915 = vadd.f32 %v548, %v1914
    %v1916 = vpop.f32.mrb[0].mxu0
    %1917 = vdwg.mxu0
    %v1918 = vadd.f32 %v1077, %v1905
    %v1919 = vxor.u32 %v1918, 2147483648
    %v1920 = vmul.f32 %v1919, 1.442695
    %v1921 = vpow.pop %v1920
    %v1922 = vadd.f32 %v1921, 1.0
    %v1923 = vrcp.pop %v1922
    %v1924 = vmul.f32 1.0, %v1923
    %v1925 = vadd.f32 %v1077, %v1910
    %v1926 = vxor.u32 %v1925, 2147483648
    %v1927 = vmul.f32 %v1926, 1.442695
    %v1928 = vpow.pop %v1927
    %v1929 = vadd.f32 %v1928, 1.0
    %v1930 = vrcp.pop %v1929
    %v1931 = vmul.f32 1.0, %v1930
    %v1932 = vadd.f32 %v1077, %v1915
    %v1933 = vxor.u32 %v1932, 2147483648
    %v1934 = vmul.f32 %v1933, 1.442695
    %v1935 = vpow.pop %v1934
    %v1936 = vadd.f32 %v1935, 1.0
    %v1937 = vrcp.pop %v1936
    %v1938 = vmul.f32 1.0, %v1937
    %v1939 = vmul.f32 %v1924, %v1755
    %v1940 = vmul.f32 %v1931, %v1825
    %v1941 = vadd.f32 %v1939, %v1940
    %v1942 = vmul.f32 %v1938, %v1682
    %v1943 = vsub.f32 %v1828, %v1755
    %v1944 = vadd.f32 %v1943, %v1682
    %v1945 = vsub.f32 %v1828, %v1825
    %v1946 = vadd.f32 %v1945, %v1682
    %v1948 = vsel %vm126, %v1944, 0
    %v1951 = vsel %vm126, %v1946, 0
    %1953 = vmatprep.subr.mxu0 0.0
    %1954 = vmatpush1.msra.mxu0 %v115
    %1955 = vmatprep.subr.mxu0 0.0
    %1956 = vmatpush1.msra.mxu0 %v116
    %1957 = vmatprep.subr.mxu0 0.0
    %1958 = vmatpush1.msra.mxu0 %v117
    %1959 = vmatprep.subr.mxu0 0.0
    %1960 = vmatpush1.msra.mxu0 %v118
    %1961 = vmatprep.subr.mxu0 0.0
    %1962 = vmatpush1.msra.mxu0 0.0
    %1963 = vmatprep.subr.mxu0 0.0
    %1964 = vmatpush1.msra.mxu0 0.0
    %1965 = vmatprep.subr.mxu0 0.0
    %1966 = vmatpush1.msra.mxu0 0.0
    %1967 = vmatprep.subr.mxu0 0.0
    %1968 = vmatpush1.msra.mxu0 0.0
    %1969 = vmatprep.subr.mxu0 0.0
    %1970 = vmatpush1.msra.mxu0 0.0
    %1971 = vmatprep.subr.mxu0 0.0
    %1972 = vmatpush1.msra.mxu0 0.0
    %1973 = vmatprep.subr.mxu0 0.0
    %1974 = vmatpush1.msra.mxu0 0.0
    %1975 = vmatprep.subr.mxu0 0.0
    %1976 = vmatpush1.msra.mxu0 0.0
    %1977 = vmatprep.subr.mxu0 0.0
    %1978 = vmatpush1.msra.mxu0 0.0
    %1979 = vmatprep.subr.mxu0 0.0
    %1980 = vmatpush1.msra.mxu0 0.0
    %1981 = vmatprep.subr.mxu0 0.0
    %1982 = vmatpush1.msra.mxu0 0.0
    %1983 = vmatprep.subr.mxu0 0.0
    %1984 = vmatpush1.msra.mxu0 0.0
    %1985 = vmatprep.subr.mxu0 0.0
    %1986 = vmatpush1.msra.mxu0 0.0
    %1987 = vmatprep.subr.mxu0 0.0
    %1988 = vmatpush1.msra.mxu0 0.0
    %1989 = vmatprep.subr.mxu0 0.0
    %1990 = vmatpush1.msra.mxu0 0.0
    %1991 = vmatprep.subr.mxu0 0.0
    %1992 = vmatpush1.msra.mxu0 0.0
    %1993 = vmatprep.subr.mxu0 0.0
    %1994 = vmatpush1.msra.mxu0 0.0
    %1995 = vmatprep.subr.mxu0 0.0
    %1996 = vmatpush1.msra.mxu0 0.0
    %1997 = vmatprep.subr.mxu0 0.0
    %1998 = vmatpush1.msra.mxu0 0.0
    %1999 = vmatprep.subr.mxu0 0.0
    %2000 = vmatpush1.msra.mxu0 0.0
    %2001 = vmatprep.subr.mxu0 0.0
    %2002 = vmatpush1.msra.mxu0 0.0
    %2003 = vmatprep.subr.mxu0 0.0
    %2004 = vmatpush1.msra.mxu0 0.0
    %2005 = vmatprep.subr.mxu0 0.0
    %2006 = vmatpush1.msra.mxu0 0.0
    %2007 = vmatprep.subr.mxu0 0.0
    %2008 = vmatpush1.msra.mxu0 0.0
    %2009 = vmatprep.subr.mxu0 0.0
    %2010 = vmatpush1.msra.mxu0 0.0
    %2011 = vmatprep.subr.mxu0 0.0
    %2012 = vmatpush1.msra.mxu0 0.0
    %2013 = vmatprep.subr.mxu0 0.0
    %2014 = vmatpush1.msra.mxu0 0.0
    %2015 = vmatprep.subr.mxu0 0.0
    %2016 = vmatpush1.msra.mxu0 0.0
    %2017 = vmatprep.mubr.f32.mxu0 0.0
    %2018 = vmatmul.mubr.f32.gmra.mrb[0].mxu0 %v1948
    %v2019 = vpop.f32.mrb[0].mxu0
    %v2020 = vadd.f32 %v548, %v2019
    %v2021 = vpop.f32.mrb[0].mxu0
    %2022 = vmatprep.mubr.f32.mxu0 0.0
    %2023 = vmatmul.mubr.f32.gmra.mrb[0].mxu0 %v1951
    %v2024 = vpop.f32.mrb[0].mxu0
    %v2025 = vadd.f32 %v548, %v2024
    %v2026 = vpop.f32.mrb[0].mxu0
    %2027 = vdwg.mxu0
    %v2028 = vadd.f32 %v1077, %v2020
    %v2029 = vxor.u32 %v2028, 2147483648
    %v2030 = vmul.f32 %v2029, 1.442695
    %v2031 = vpow.pop %v2030
    %v2032 = vadd.f32 %v2031, 1.0
    %v2033 = vrcp.pop %v2032
    %v2034 = vmul.f32 1.0, %v2033
    %v2035 = vtanh.pop %v2028
    %2037 = vrot.lane.b32.xlu0 %v2035, 32
    %v2038 = vpop.permute.xlu0 %2037
    %v2040 = vmul.f32 %v2034, %v2038
    %v2041 = vsub.f32 %v1941, %v1939
    %v2042 = vadd.f32 %v2041, %v1942
    %2044 = vrot.lane.b32.xlu0 %v2042, 96
    %v2045 = vpop.permute.xlu0 %2044
    %v2047 = vadd.f32 %v2040, %v2045
    %v2048 = vtanh.pop %v2047
    %2050 = vrot.lane.b32.xlu0 %v2048, 64
    %v2051 = vpop.permute.xlu0 %2050
    %v2053 = vmul.f32 %v2034, %v2051
    %2055 = vrot.lane.b32.xlu0 %v2053, 64
    %v2056 = vpop.permute.xlu0 %2055
    %2059 = vrot.lane.b32.xlu0 %v2047, 32
    %v2060 = vpop.permute.xlu0 %2059
    %v2062 = vsel %vm126, %v2056, %v2060
    %v2063 = vsel %vm755, %v238, 0.0
    %2064 = vadd.xlane.f32.xlu0 %v2063
    %v2065 = vpop.xlane.xlu0 %2064
    %v2066 = vsel %vm759, %v239, 0.0
    %2067 = vadd.xlane.f32.xlu0 %v2066
    %v2068 = vpop.xlane.xlu0 %2067
    %v2069 = vsub.f32 1.0, %v2065
    %v2070 = vsub.f32 1.0, %v2068
    %v2071 = vmul.f32 %v2069, 0.0
    %v2072 = vmul.f32 %v2070, 0.0
    %v2074 = vsel %vm755, %v238, 0
    %v2077 = vsel %vm755, %v239, 0
    %2079 = vmatprep.subr.mxu0 0.0
    %2080 = vmatpush1.msra.mxu0 %v2062
    %2081 = vmatprep.subr.mxu0 0.0
    %2082 = vmatpush1.msra.mxu0 0.0
    %2083 = vmatprep.subr.mxu0 0.0
    %2084 = vmatpush1.msra.mxu0 0.0
    %2085 = vmatprep.subr.mxu0 0.0
    %2086 = vmatpush1.msra.mxu0 0.0
    %2087 = vmatprep.subr.mxu0 0.0
    %2088 = vmatpush1.msra.mxu0 0.0
    %2089 = vmatprep.subr.mxu0 0.0
    %2090 = vmatpush1.msra.mxu0 0.0
    %2091 = vmatprep.subr.mxu0 0.0
    %2092 = vmatpush1.msra.mxu0 0.0
    %2093 = vmatprep.subr.mxu0 0.0
    %2094 = vmatpush1.msra.mxu0 0.0
    %2095 = vmatprep.subr.mxu0 0.0
    %2096 = vmatpush1.msra.mxu0 0.0
    %2097 = vmatprep.subr.mxu0 0.0
    %2098 = vmatpush1.msra.mxu0 0.0
    %2099 = vmatprep.subr.mxu0 0.0
    %2100 = vmatpush1.msra.mxu0 0.0
    %2101 = vmatprep.subr.mxu0 0.0
    %2102 = vmatpush1.msra.mxu0 0.0
    %2103 = vmatprep.subr.mxu0 0.0
    %2104 = vmatpush1.msra.mxu0 0.0
    %2105 = vmatprep.subr.mxu0 0.0
    %2106 = vmatpush1.msra.mxu0 0.0
    %2107 = vmatprep.subr.mxu0 0.0
    %2108 = vmatpush1.msra.mxu0 0.0
    %2109 = vmatprep.subr.mxu0 0.0
    %2110 = vmatpush1.msra.mxu0 0.0
    %2111 = vmatprep.subr.mxu0 0.0
    %2112 = vmatpush1.msra.mxu0 0.0
    %2113 = vmatprep.subr.mxu0 0.0
    %2114 = vmatpush1.msra.mxu0 0.0
    %2115 = vmatprep.subr.mxu0 0.0
    %2116 = vmatpush1.msra.mxu0 0.0
    %2117 = vmatprep.subr.mxu0 0.0
    %2118 = vmatpush1.msra.mxu0 0.0
    %2119 = vmatprep.subr.mxu0 0.0
    %2120 = vmatpush1.msra.mxu0 0.0
    %2121 = vmatprep.subr.mxu0 0.0
    %2122 = vmatpush1.msra.mxu0 0.0
    %2123 = vmatprep.subr.mxu0 0.0
    %2124 = vmatpush1.msra.mxu0 0.0
    %2125 = vmatprep.subr.mxu0 0.0
    %2126 = vmatpush1.msra.mxu0 0.0
    %2127 = vmatprep.subr.mxu0 0.0
    %2128 = vmatpush1.msra.mxu0 0.0
    %2129 = vmatprep.subr.mxu0 0.0
    %2130 = vmatpush1.msra.mxu0 0.0
    %2131 = vmatprep.subr.mxu0 0.0
    %2132 = vmatpush1.msra.mxu0 0.0
    %2133 = vmatprep.subr.mxu0 0.0
    %2134 = vmatpush1.msra.mxu0 0.0
    %2135 = vmatprep.subr.mxu0 0.0
    %2136 = vmatpush1.msra.mxu0 0.0
    %2137 = vmatprep.subr.mxu0 0.0
    %2138 = vmatpush1.msra.mxu0 0.0
    %2139 = vmatprep.subr.mxu0 0.0
    %2140 = vmatpush1.msra.mxu0 0.0
    %2141 = vmatprep.subr.mxu0 0.0
    %2142 = vmatpush1.msra.mxu0 0.0
    %2143 = vmatprep.mubr.f32.mxu0 0.0
    %2144 = vmatmul.mubr.f32.gmra.mrb[0].mxu0 %v2074
    %v2145 = vpop.f32.mrb[0].mxu0
    %v2146 = vadd.f32 0.0, %v2145
    %v2147 = vpop.f32.mrb[0].mxu0
    %2148 = vmatprep.mubr.f32.mxu0 0.0
    %2149 = vmatmul.mubr.f32.gmra.mrb[0].mxu0 %v2077
    %v2150 = vpop.f32.mrb[0].mxu0
    %v2151 = vadd.f32 0.0, %v2150
    %v2152 = vpop.f32.mrb[0].mxu0
    %2153 = vdwg.mxu0
    %v2154 = vadd.f32 %v2071, %v2146
    %v2155 = vadd.f32 %v2072, %v2151
    %2156 = vmatprep.subr.mxu0 0.0
    %2157 = vmatpush1.msra.mxu0 %v2056
    %2158 = vmatprep.subr.mxu0 0.0
    %2159 = vmatpush1.msra.mxu0 0.0
    %2160 = vmatprep.subr.mxu0 0.0
    %2161 = vmatpush1.msra.mxu0 0.0
    %2162 = vmatprep.subr.mxu0 0.0
    %2163 = vmatpush1.msra.mxu0 0.0
    %2164 = vmatprep.subr.mxu0 0.0
    %2165 = vmatpush1.msra.mxu0 0.0
    %2166 = vmatprep.subr.mxu0 0.0
    %2167 = vmatpush1.msra.mxu0 0.0
    %2168 = vmatprep.subr.mxu0 0.0
    %2169 = vmatpush1.msra.mxu0 0.0
    %2170 = vmatprep.subr.mxu0 0.0
    %2171 = vmatpush1.msra.mxu0 0.0
    %2172 = vmatprep.subr.mxu0 0.0
    %2173 = vmatpush1.msra.mxu0 0.0
    %2174 = vmatprep.subr.mxu0 0.0
    %2175 = vmatpush1.msra.mxu0 0.0
    %2176 = vmatprep.subr.mxu0 0.0
    %2177 = vmatpush1.msra.mxu0 0.0
    %2178 = vmatprep.subr.mxu0 0.0
    %2179 = vmatpush1.msra.mxu0 0.0
    %2180 = vmatprep.subr.mxu0 0.0
    %2181 = vmatpush1.msra.mxu0 0.0
    %2182 = vmatprep.subr.mxu0 0.0
    %2183 = vmatpush1.msra.mxu0 0.0
    %2184 = vmatprep.subr.mxu0 0.0
    %2185 = vmatpush1.msra.mxu0 0.0
    %2186 = vmatprep.subr.mxu0 0.0
    %2187 = vmatpush1.msra.mxu0 0.0
    %2188 = vmatprep.subr.mxu0 0.0
    %2189 = vmatpush1.msra.mxu0 0.0
    %2190 = vmatprep.subr.mxu0 0.0
    %2191 = vmatpush1.msra.mxu0 0.0
    %2192 = vmatprep.subr.mxu0 0.0
    %2193 = vmatpush1.msra.mxu0 0.0
    %2194 = vmatprep.subr.mxu0 0.0
    %2195 = vmatpush1.msra.mxu0 0.0
    %2196 = vmatprep.subr.mxu0 0.0
    %2197 = vmatpush1.msra.mxu0 0.0
    %2198 = vmatprep.subr.mxu0 0.0
    %2199 = vmatpush1.msra.mxu0 0.0
    %2200 = vmatprep.subr.mxu0 0.0
    %2201 = vmatpush1.msra.mxu0 0.0
    %2202 = vmatprep.subr.mxu0 0.0
    %2203 = vmatpush1.msra.mxu0 0.0
    %2204 = vmatprep.subr.mxu0 0.0
    %2205 = vmatpush1.msra.mxu0 0.0
    %2206 = vmatprep.subr.mxu0 0.0
    %2207 = vmatpush1.msra.mxu0 0.0
    %2208 = vmatprep.subr.mxu0 0.0
    %2209 = vmatpush1.msra.mxu0 0.0
    %2210 = vmatprep.subr.mxu0 0.0
    %2211 = vmatpush1.msra.mxu0 0.0
    %2212 = vmatprep.subr.mxu0 0.0
    %2213 = vmatpush1.msra.mxu0 0.0
    %2214 = vmatprep.subr.mxu0 0.0
    %2215 = vmatpush1.msra.mxu0 0.0
    %2216 = vmatprep.subr.mxu0 0.0
    %2217 = vmatpush1.msra.mxu0 0.0
    %2218 = vmatprep.subr.mxu0 0.0
    %2219 = vmatpush1.msra.mxu0 0.0
    %2220 = vmatprep.mubr.f32.mxu0 0.0
    %2221 = vmatmul.mubr.f32.gmra.mrb[0].mxu0 %v2074
    %v2222 = vpop.f32.mrb[0].mxu0
    %v2223 = vadd.f32 0.0, %v2222
    %v2224 = vpop.f32.mrb[0].mxu0
    %2225 = vmatprep.mubr.f32.mxu0 0.0
    %2226 = vmatmul.mubr.f32.gmra.mrb[0].mxu0 %v2077
    %v2227 = vpop.f32.mrb[0].mxu0
    %v2228 = vadd.f32 0.0, %v2227
    %v2229 = vpop.f32.mrb[0].mxu0
    %2230 = vdwg.mxu0
    %v2231 = vadd.f32 %v2071, %v2223
    %v2232 = vadd.f32 %v2072, %v2228
    %v2233 = vadd.f32 %v1077, %v2025
    %v2234 = vxor.u32 %v2233, 2147483648
    %v2235 = vmul.f32 %v2234, 1.442695
    %v2236 = vpow.pop %v2235
    %v2237 = vadd.f32 %v2236, 1.0
    %v2238 = vrcp.pop %v2237
    %v2239 = vmul.f32 1.0, %v2238
    %v2240 = vtanh.pop %v2233
    %2242 = vrot.lane.b32.xlu0 %v2240, 32
    %v2243 = vpop.permute.xlu0 %2242
    %v2245 = vmul.f32 %v2239, %v2243
    %v2246 = vsub.f32 %v1941, %v1940
    %v2247 = vadd.f32 %v2246, %v1942
    %2249 = vrot.lane.b32.xlu0 %v2247, 96
    %v2250 = vpop.permute.xlu0 %2249
    %v2252 = vadd.f32 %v2245, %v2250
    %v2253 = vtanh.pop %v2252
    %2255 = vrot.lane.b32.xlu0 %v2253, 64
    %v2256 = vpop.permute.xlu0 %2255
    %v2258 = vmul.f32 %v2239, %v2256
    %2260 = vrot.lane.b32.xlu0 %v2258, 64
    %v2261 = vpop.permute.xlu0 %2260
    %2264 = vrot.lane.b32.xlu0 %v2252, 32
    %v2265 = vpop.permute.xlu0 %2264
    %v2267 = vsel %vm126, %v2261, %v2265
    %v2268 = vsel %vm755, %v240, 0.0
    %2269 = vadd.xlane.f32.xlu0 %v2268
    %v2270 = vpop.xlane.xlu0 %2269
    %v2271 = vsel %vm759, %v241, 0.0
    %2272 = vadd.xlane.f32.xlu0 %v2271
    %v2273 = vpop.xlane.xlu0 %2272
    %v2274 = vsub.f32 1.0, %v2270
    %v2275 = vsub.f32 1.0, %v2273
    %v2276 = vmul.f32 %v2154, %v2274
    %v2277 = vmul.f32 %v2155, %v2275
    %v2279 = vsel %vm755, %v240, 0
    %v2282 = vsel %vm755, %v241, 0
    %2284 = vmatprep.subr.mxu0 0.0
    %2285 = vmatpush1.msra.mxu0 %v2267
    %2286 = vmatprep.subr.mxu0 0.0
    %2287 = vmatpush1.msra.mxu0 0.0
    %2288 = vmatprep.subr.mxu0 0.0
    %2289 = vmatpush1.msra.mxu0 0.0
    %2290 = vmatprep.subr.mxu0 0.0
    %2291 = vmatpush1.msra.mxu0 0.0
    %2292 = vmatprep.subr.mxu0 0.0
    %2293 = vmatpush1.msra.mxu0 0.0
    %2294 = vmatprep.subr.mxu0 0.0
    %2295 = vmatpush1.msra.mxu0 0.0
    %2296 = vmatprep.subr.mxu0 0.0
    %2297 = vmatpush1.msra.mxu0 0.0
    %2298 = vmatprep.subr.mxu0 0.0
    %2299 = vmatpush1.msra.mxu0 0.0
    %2300 = vmatprep.subr.mxu0 0.0
    %2301 = vmatpush1.msra.mxu0 0.0
    %2302 = vmatprep.subr.mxu0 0.0
    %2303 = vmatpush1.msra.mxu0 0.0
    %2304 = vmatprep.subr.mxu0 0.0
    %2305 = vmatpush1.msra.mxu0 0.0
    %2306 = vmatprep.subr.mxu0 0.0
    %2307 = vmatpush1.msra.mxu0 0.0
    %2308 = vmatprep.subr.mxu0 0.0
    %2309 = vmatpush1.msra.mxu0 0.0
    %2310 = vmatprep.subr.mxu0 0.0
    %2311 = vmatpush1.msra.mxu0 0.0
    %2312 = vmatprep.subr.mxu0 0.0
    %2313 = vmatpush1.msra.mxu0 0.0
    %2314 = vmatprep.subr.mxu0 0.0
    %2315 = vmatpush1.msra.mxu0 0.0
    %2316 = vmatprep.subr.mxu0 0.0
    %2317 = vmatpush1.msra.mxu0 0.0
    %2318 = vmatprep.subr.mxu0 0.0
    %2319 = vmatpush1.msra.mxu0 0.0
    %2320 = vmatprep.subr.mxu0 0.0
    %2321 = vmatpush1.msra.mxu0 0.0
    %2322 = vmatprep.subr.mxu0 0.0
    %2323 = vmatpush1.msra.mxu0 0.0
    %2324 = vmatprep.subr.mxu0 0.0
    %2325 = vmatpush1.msra.mxu0 0.0
    %2326 = vmatprep.subr.mxu0 0.0
    %2327 = vmatpush1.msra.mxu0 0.0
    %2328 = vmatprep.subr.mxu0 0.0
    %2329 = vmatpush1.msra.mxu0 0.0
    %2330 = vmatprep.subr.mxu0 0.0
    %2331 = vmatpush1.msra.mxu0 0.0
    %2332 = vmatprep.subr.mxu0 0.0
    %2333 = vmatpush1.msra.mxu0 0.0
    %2334 = vmatprep.subr.mxu0 0.0
    %2335 = vmatpush1.msra.mxu0 0.0
    %2336 = vmatprep.subr.mxu0 0.0
    %2337 = vmatpush1.msra.mxu0 0.0
    %2338 = vmatprep.subr.mxu0 0.0
    %2339 = vmatpush1.msra.mxu0 0.0
    %2340 = vmatprep.subr.mxu0 0.0
    %2341 = vmatpush1.msra.mxu0 0.0
    %2342 = vmatprep.subr.mxu0 0.0
    %2343 = vmatpush1.msra.mxu0 0.0
    %2344 = vmatprep.subr.mxu0 0.0
    %2345 = vmatpush1.msra.mxu0 0.0
    %2346 = vmatprep.subr.mxu0 0.0
    %2347 = vmatpush1.msra.mxu0 0.0
    %2348 = vmatprep.mubr.f32.mxu0 0.0
    %2349 = vmatmul.mubr.f32.gmra.mrb[0].mxu0 %v2279
    %v2350 = vpop.f32.mrb[0].mxu0
    %v2351 = vadd.f32 0.0, %v2350
    %v2352 = vpop.f32.mrb[0].mxu0
    %2353 = vmatprep.mubr.f32.mxu0 0.0
    %2354 = vmatmul.mubr.f32.gmra.mrb[0].mxu0 %v2282
    %v2355 = vpop.f32.mrb[0].mxu0
    %v2356 = vadd.f32 0.0, %v2355
    %v2357 = vpop.f32.mrb[0].mxu0
    %2358 = vdwg.mxu0
    %v2359 = vadd.f32 %v2276, %v2351
    %v2360 = vadd.f32 %v2277, %v2356
    %v2361 = vmul.f32 %v2231, %v2274
    %v2362 = vmul.f32 %v2232, %v2275
    %2363 = vmatprep.subr.mxu0 0.0
    %2364 = vmatpush1.msra.mxu0 %v2261
    %2365 = vmatprep.subr.mxu0 0.0
    %2366 = vmatpush1.msra.mxu0 0.0
    %2367 = vmatprep.subr.mxu0 0.0
    %2368 = vmatpush1.msra.mxu0 0.0
    %2369 = vmatprep.subr.mxu0 0.0
    %2370 = vmatpush1.msra.mxu0 0.0
    %2371 = vmatprep.subr.mxu0 0.0
    %2372 = vmatpush1.msra.mxu0 0.0
    %2373 = vmatprep.subr.mxu0 0.0
    %2374 = vmatpush1.msra.mxu0 0.0
    %2375 = vmatprep.subr.mxu0 0.0
    %2376 = vmatpush1.msra.mxu0 0.0
    %2377 = vmatprep.subr.mxu0 0.0
    %2378 = vmatpush1.msra.mxu0 0.0
    %2379 = vmatprep.subr.mxu0 0.0
    %2380 = vmatpush1.msra.mxu0 0.0
    %2381 = vmatprep.subr.mxu0 0.0
    %2382 = vmatpush1.msra.mxu0 0.0
    %2383 = vmatprep.subr.mxu0 0.0
    %2384 = vmatpush1.msra.mxu0 0.0
    %2385 = vmatprep.subr.mxu0 0.0
    %2386 = vmatpush1.msra.mxu0 0.0
    %2387 = vmatprep.subr.mxu0 0.0
    %2388 = vmatpush1.msra.mxu0 0.0
    %2389 = vmatprep.subr.mxu0 0.0
    %2390 = vmatpush1.msra.mxu0 0.0
    %2391 = vmatprep.subr.mxu0 0.0
    %2392 = vmatpush1.msra.mxu0 0.0
    %2393 = vmatprep.subr.mxu0 0.0
    %2394 = vmatpush1.msra.mxu0 0.0
    %2395 = vmatprep.subr.mxu0 0.0
    %2396 = vmatpush1.msra.mxu0 0.0
    %2397 = vmatprep.subr.mxu0 0.0
    %2398 = vmatpush1.msra.mxu0 0.0
    %2399 = vmatprep.subr.mxu0 0.0
    %2400 = vmatpush1.msra.mxu0 0.0
    %2401 = vmatprep.subr.mxu0 0.0
    %2402 = vmatpush1.msra.mxu0 0.0
    %2403 = vmatprep.subr.mxu0 0.0
    %2404 = vmatpush1.msra.mxu0 0.0
    %2405 = vmatprep.subr.mxu0 0.0
    %2406 = vmatpush1.msra.mxu0 0.0
    %2407 = vmatprep.subr.mxu0 0.0
    %2408 = vmatpush1.msra.mxu0 0.0
    %2409 = vmatprep.subr.mxu0 0.0
    %2410 = vmatpush1.msra.mxu0 0.0
    %2411 = vmatprep.subr.mxu0 0.0
    %2412 = vmatpush1.msra.mxu0 0.0
    %2413 = vmatprep.subr.mxu0 0.0
    %2414 = vmatpush1.msra.mxu0 0.0
    %2415 = vmatprep.subr.mxu0 0.0
    %2416 = vmatpush1.msra.mxu0 0.0
    %2417 = vmatprep.subr.mxu0 0.0
    %2418 = vmatpush1.msra.mxu0 0.0
    %2419 = vmatprep.subr.mxu0 0.0
    %2420 = vmatpush1.msra.mxu0 0.0
    %2421 = vmatprep.subr.mxu0 0.0
    %2422 = vmatpush1.msra.mxu0 0.0
    %2423 = vmatprep.subr.mxu0 0.0
    %2424 = vmatpush1.msra.mxu0 0.0
    %2425 = vmatprep.subr.mxu0 0.0
    %2426 = vmatpush1.msra.mxu0 0.0
    %2427 = vmatprep.mubr.f32.mxu0 0.0
    %2428 = vmatmul.mubr.f32.gmra.mrb[0].mxu0 %v2279
    %v2429 = vpop.f32.mrb[0].mxu0
    %v2430 = vadd.f32 0.0, %v2429
    %v2431 = vpop.f32.mrb[0].mxu0
    %2432 = vmatprep.mubr.f32.mxu0 0.0
    %2433 = vmatmul.mubr.f32.gmra.mrb[0].mxu0 %v2282
    %v2434 = vpop.f32.mrb[0].mxu0
    %v2435 = vadd.f32 0.0, %v2434
    %v2436 = vpop.f32.mrb[0].mxu0
    %2437 = vdwg.mxu0
    %v2438 = vadd.f32 %v2361, %v2430
    %v2439 = vadd.f32 %v2362, %v2435
    %v2441 = vsel %vm246, %v2360, 0
    %2443 = vmatprep.subr.mxu0 0.0
    %2444 = vmatpush1.msra.mxu0 %v2359
    %2445 = vmatprep.subr.mxu0 0.0
    %2446 = vmatpush1.msra.mxu0 %v2441
    %2447 = vmatprep.subr.mxu0 0.0
    %2448 = vmatpush1.msra.mxu0 0.0
    %2449 = vmatprep.subr.mxu0 0.0
    %2450 = vmatpush1.msra.mxu0 0.0
    %2451 = vmatprep.subr.mxu0 0.0
    %2452 = vmatpush1.msra.mxu0 0.0
    %2453 = vmatprep.subr.mxu0 0.0
    %2454 = vmatpush1.msra.mxu0 0.0
    %2455 = vmatprep.subr.mxu0 0.0
    %2456 = vmatpush1.msra.mxu0 0.0
    %2457 = vmatprep.subr.mxu0 0.0
    %2458 = vmatpush1.msra.mxu0 0.0
    %2459 = vmatprep.subr.mxu0 0.0
    %2460 = vmatpush1.msra.mxu0 0.0
    %2461 = vmatprep.subr.mxu0 0.0
    %2462 = vmatpush1.msra.mxu0 0.0
    %2463 = vmatprep.subr.mxu0 0.0
    %2464 = vmatpush1.msra.mxu0 0.0
    %2465 = vmatprep.subr.mxu0 0.0
    %2466 = vmatpush1.msra.mxu0 0.0
    %2467 = vmatprep.subr.mxu0 0.0
    %2468 = vmatpush1.msra.mxu0 0.0
    %2469 = vmatprep.subr.mxu0 0.0
    %2470 = vmatpush1.msra.mxu0 0.0
    %2471 = vmatprep.subr.mxu0 0.0
    %2472 = vmatpush1.msra.mxu0 0.0
    %2473 = vmatprep.subr.mxu0 0.0
    %2474 = vmatpush1.msra.mxu0 0.0
    %2475 = vmatprep.subr.mxu0 0.0
    %2476 = vmatpush1.msra.mxu0 0.0
    %2477 = vmatprep.subr.mxu0 0.0
    %2478 = vmatpush1.msra.mxu0 0.0
    %2479 = vmatprep.subr.mxu0 0.0
    %2480 = vmatpush1.msra.mxu0 0.0
    %2481 = vmatprep.subr.mxu0 0.0
    %2482 = vmatpush1.msra.mxu0 0.0
    %2483 = vmatprep.subr.mxu0 0.0
    %2484 = vmatpush1.msra.mxu0 0.0
    %2485 = vmatprep.subr.mxu0 0.0
    %2486 = vmatpush1.msra.mxu0 0.0
    %2487 = vmatprep.subr.mxu0 0.0
    %2488 = vmatpush1.msra.mxu0 0.0
    %2489 = vmatprep.subr.mxu0 0.0
    %2490 = vmatpush1.msra.mxu0 0.0
    %2491 = vmatprep.subr.mxu0 0.0
    %2492 = vmatpush1.msra.mxu0 0.0
    %2493 = vmatprep.subr.mxu0 0.0
    %2494 = vmatpush1.msra.mxu0 0.0
    %2495 = vmatprep.subr.mxu0 0.0
    %2496 = vmatpush1.msra.mxu0 0.0
    %2497 = vmatprep.subr.mxu0 0.0
    %2498 = vmatpush1.msra.mxu0 0.0
    %2499 = vmatprep.subr.mxu0 0.0
    %2500 = vmatpush1.msra.mxu0 0.0
    %2501 = vmatprep.subr.mxu0 0.0
    %2502 = vmatpush1.msra.mxu0 0.0
    %2503 = vmatprep.subr.mxu0 0.0
    %2504 = vmatpush1.msra.mxu0 0.0
    %2505 = vmatprep.subr.mxu0 0.0
    %2506 = vmatpush1.msra.mxu0 0.0
    %2507 = vmatprep.mubr.f32.mxu0 0.0
    %2508 = vmatmul.mubr.f32.gmra.mrb[0].mxu0 %v244
    %v2509 = vpop.f32.mrb[0].mxu0
    %v2510 = vadd.f32 0.0, %v2509
    %v2511 = vpop.f32.mrb[0].mxu0
    %2512 = vdwg.mxu0
    %2513 = vmatprep.subr.mxu0 0.0
    %2514 = vmatpush1.msra.mxu0 %v1526
    %2515 = vmatprep.subr.mxu0 0.0
    %2516 = vmatpush1.msra.mxu0 %v1686
    %2517 = vmatprep.subr.mxu0 0.0
    %2518 = vmatpush1.msra.mxu0 0.0
    %2519 = vmatprep.subr.mxu0 0.0
    %2520 = vmatpush1.msra.mxu0 0.0
    %2521 = vmatprep.subr.mxu0 0.0
    %2522 = vmatpush1.msra.mxu0 0.0
    %2523 = vmatprep.subr.mxu0 0.0
    %2524 = vmatpush1.msra.mxu0 0.0
    %2525 = vmatprep.subr.mxu0 0.0
    %2526 = vmatpush1.msra.mxu0 0.0
    %2527 = vmatprep.subr.mxu0 0.0
    %2528 = vmatpush1.msra.mxu0 0.0
    %2529 = vmatprep.subr.mxu0 0.0
    %2530 = vmatpush1.msra.mxu0 0.0
    %2531 = vmatprep.subr.mxu0 0.0
    %2532 = vmatpush1.msra.mxu0 0.0
    %2533 = vmatprep.subr.mxu0 0.0
    %2534 = vmatpush1.msra.mxu0 0.0
    %2535 = vmatprep.subr.mxu0 0.0
    %2536 = vmatpush1.msra.mxu0 0.0
    %2537 = vmatprep.subr.mxu0 0.0
    %2538 = vmatpush1.msra.mxu0 0.0
    %2539 = vmatprep.subr.mxu0 0.0
    %2540 = vmatpush1.msra.mxu0 0.0
    %2541 = vmatprep.subr.mxu0 0.0
    %2542 = vmatpush1.msra.mxu0 0.0
    %2543 = vmatprep.subr.mxu0 0.0
    %2544 = vmatpush1.msra.mxu0 0.0
    %2545 = vmatprep.subr.mxu0 0.0
    %2546 = vmatpush1.msra.mxu0 0.0
    %2547 = vmatprep.subr.mxu0 0.0
    %2548 = vmatpush1.msra.mxu0 0.0
    %2549 = vmatprep.subr.mxu0 0.0
    %2550 = vmatpush1.msra.mxu0 0.0
    %2551 = vmatprep.subr.mxu0 0.0
    %2552 = vmatpush1.msra.mxu0 0.0
    %2553 = vmatprep.subr.mxu0 0.0
    %2554 = vmatpush1.msra.mxu0 0.0
    %2555 = vmatprep.subr.mxu0 0.0
    %2556 = vmatpush1.msra.mxu0 0.0
    %2557 = vmatprep.subr.mxu0 0.0
    %2558 = vmatpush1.msra.mxu0 0.0
    %2559 = vmatprep.subr.mxu0 0.0
    %2560 = vmatpush1.msra.mxu0 0.0
    %2561 = vmatprep.subr.mxu0 0.0
    %2562 = vmatpush1.msra.mxu0 0.0
    %2563 = vmatprep.subr.mxu0 0.0
    %2564 = vmatpush1.msra.mxu0 0.0
    %2565 = vmatprep.subr.mxu0 0.0
    %2566 = vmatpush1.msra.mxu0 0.0
    %2567 = vmatprep.subr.mxu0 0.0
    %2568 = vmatpush1.msra.mxu0 0.0
    %2569 = vmatprep.subr.mxu0 0.0
    %2570 = vmatpush1.msra.mxu0 0.0
    %2571 = vmatprep.subr.mxu0 0.0
    %2572 = vmatpush1.msra.mxu0 0.0
    %2573 = vmatprep.subr.mxu0 0.0
    %2574 = vmatpush1.msra.mxu0 0.0
    %2575 = vmatprep.subr.mxu0 0.0
    %2576 = vmatpush1.msra.mxu0 0.0
    %2577 = vmatprep.mubr.f32.mxu0 0.0
    %2578 = vmatmul.mubr.f32.gmra.mrb[0].mxu0 %v395
    %v2579 = vpop.f32.mrb[0].mxu0
    %v2580 = vadd.f32 0.0, %v2579
    %v2581 = vpop.f32.mrb[0].mxu0
    %2582 = vdwg.mxu0
    %2583 = vmatprep.subr.mxu0 0.0
    %2584 = vmatpush1.msra.mxu0 %v1526
    %2585 = vmatprep.subr.mxu0 0.0
    %2586 = vmatpush1.msra.mxu0 %v1686
    %2587 = vmatprep.subr.mxu0 0.0
    %2588 = vmatpush1.msra.mxu0 0.0
    %2589 = vmatprep.subr.mxu0 0.0
    %2590 = vmatpush1.msra.mxu0 0.0
    %2591 = vmatprep.subr.mxu0 0.0
    %2592 = vmatpush1.msra.mxu0 0.0
    %2593 = vmatprep.subr.mxu0 0.0
    %2594 = vmatpush1.msra.mxu0 0.0
    %2595 = vmatprep.subr.mxu0 0.0
    %2596 = vmatpush1.msra.mxu0 0.0
    %2597 = vmatprep.subr.mxu0 0.0
    %2598 = vmatpush1.msra.mxu0 0.0
    %2599 = vmatprep.subr.mxu0 0.0
    %2600 = vmatpush1.msra.mxu0 0.0
    %2601 = vmatprep.subr.mxu0 0.0
    %2602 = vmatpush1.msra.mxu0 0.0
    %2603 = vmatprep.subr.mxu0 0.0
    %2604 = vmatpush1.msra.mxu0 0.0
    %2605 = vmatprep.subr.mxu0 0.0
    %2606 = vmatpush1.msra.mxu0 0.0
    %2607 = vmatprep.subr.mxu0 0.0
    %2608 = vmatpush1.msra.mxu0 0.0
    %2609 = vmatprep.subr.mxu0 0.0
    %2610 = vmatpush1.msra.mxu0 0.0
    %2611 = vmatprep.subr.mxu0 0.0
    %2612 = vmatpush1.msra.mxu0 0.0
    %2613 = vmatprep.subr.mxu0 0.0
    %2614 = vmatpush1.msra.mxu0 0.0
    %2615 = vmatprep.subr.mxu0 0.0
    %2616 = vmatpush1.msra.mxu0 0.0
    %2617 = vmatprep.subr.mxu0 0.0
    %2618 = vmatpush1.msra.mxu0 0.0
    %2619 = vmatprep.subr.mxu0 0.0
    %2620 = vmatpush1.msra.mxu0 0.0
    %2621 = vmatprep.subr.mxu0 0.0
    %2622 = vmatpush1.msra.mxu0 0.0
    %2623 = vmatprep.subr.mxu0 0.0
    %2624 = vmatpush1.msra.mxu0 0.0
    %2625 = vmatprep.subr.mxu0 0.0
    %2626 = vmatpush1.msra.mxu0 0.0
    %2627 = vmatprep.subr.mxu0 0.0
    %2628 = vmatpush1.msra.mxu0 0.0
    %2629 = vmatprep.subr.mxu0 0.0
    %2630 = vmatpush1.msra.mxu0 0.0
    %2631 = vmatprep.subr.mxu0 0.0
    %2632 = vmatpush1.msra.mxu0 0.0
    %2633 = vmatprep.subr.mxu0 0.0
    %2634 = vmatpush1.msra.mxu0 0.0
    %2635 = vmatprep.subr.mxu0 0.0
    %2636 = vmatpush1.msra.mxu0 0.0
    %2637 = vmatprep.subr.mxu0 0.0
    %2638 = vmatpush1.msra.mxu0 0.0
    %2639 = vmatprep.subr.mxu0 0.0
    %2640 = vmatpush1.msra.mxu0 0.0
    %2641 = vmatprep.subr.mxu0 0.0
    %2642 = vmatpush1.msra.mxu0 0.0
    %2643 = vmatprep.subr.mxu0 0.0
    %2644 = vmatpush1.msra.mxu0 0.0
    %2645 = vmatprep.subr.mxu0 0.0
    %2646 = vmatpush1.msra.mxu0 0.0
    %2647 = vmatprep.mubr.f32.mxu0 0.0
    %2648 = vmatmul.mubr.f32.gmra.mrb[0].mxu0 %v471
    %v2649 = vpop.f32.mrb[0].mxu0
    %v2650 = vadd.f32 0.0, %v2649
    %v2651 = vpop.f32.mrb[0].mxu0
    %2652 = vdwg.mxu0
    %v2653 = vadd.f32 %v2580, %v2650
    %v2655 = vsel %vm126, %v2580, 0
    %v2658 = vsel %vm126, %v2650, 0
    %v2661 = vsel %vm126, %v2510, 0
    %2663 = vmatprep.subr.mxu0 0.0
    %2664 = vmatpush1.msra.mxu0 %v115
    %2665 = vmatprep.subr.mxu0 0.0
    %2666 = vmatpush1.msra.mxu0 %v116
    %2667 = vmatprep.subr.mxu0 0.0
    %2668 = vmatpush1.msra.mxu0 %v117
    %2669 = vmatprep.subr.mxu0 0.0
    %2670 = vmatpush1.msra.mxu0 %v118
    %2671 = vmatprep.subr.mxu0 0.0
    %2672 = vmatpush1.msra.mxu0 0.0
    %2673 = vmatprep.subr.mxu0 0.0
    %2674 = vmatpush1.msra.mxu0 0.0
    %2675 = vmatprep.subr.mxu0 0.0
    %2676 = vmatpush1.msra.mxu0 0.0
    %2677 = vmatprep.subr.mxu0 0.0
    %2678 = vmatpush1.msra.mxu0 0.0
    %2679 = vmatprep.subr.mxu0 0.0
    %2680 = vmatpush1.msra.mxu0 0.0
    %2681 = vmatprep.subr.mxu0 0.0
    %2682 = vmatpush1.msra.mxu0 0.0
    %2683 = vmatprep.subr.mxu0 0.0
    %2684 = vmatpush1.msra.mxu0 0.0
    %2685 = vmatprep.subr.mxu0 0.0
    %2686 = vmatpush1.msra.mxu0 0.0
    %2687 = vmatprep.subr.mxu0 0.0
    %2688 = vmatpush1.msra.mxu0 0.0
    %2689 = vmatprep.subr.mxu0 0.0
    %2690 = vmatpush1.msra.mxu0 0.0
    %2691 = vmatprep.subr.mxu0 0.0
    %2692 = vmatpush1.msra.mxu0 0.0
    %2693 = vmatprep.subr.mxu0 0.0
    %2694 = vmatpush1.msra.mxu0 0.0
    %2695 = vmatprep.subr.mxu0 0.0
    %2696 = vmatpush1.msra.mxu0 0.0
    %2697 = vmatprep.subr.mxu0 0.0
    %2698 = vmatpush1.msra.mxu0 0.0
    %2699 = vmatprep.subr.mxu0 0.0
    %2700 = vmatpush1.msra.mxu0 0.0
    %2701 = vmatprep.subr.mxu0 0.0
    %2702 = vmatpush1.msra.mxu0 0.0
    %2703 = vmatprep.subr.mxu0 0.0
    %2704 = vmatpush1.msra.mxu0 0.0
    %2705 = vmatprep.subr.mxu0 0.0
    %2706 = vmatpush1.msra.mxu0 0.0
    %2707 = vmatprep.subr.mxu0 0.0
    %2708 = vmatpush1.msra.mxu0 0.0
    %2709 = vmatprep.subr.mxu0 0.0
    %2710 = vmatpush1.msra.mxu0 0.0
    %2711 = vmatprep.subr.mxu0 0.0
    %2712 = vmatpush1.msra.mxu0 0.0
    %2713 = vmatprep.subr.mxu0 0.0
    %2714 = vmatpush1.msra.mxu0 0.0
    %2715 = vmatprep.subr.mxu0 0.0
    %2716 = vmatpush1.msra.mxu0 0.0
    %2717 = vmatprep.subr.mxu0 0.0
    %2718 = vmatpush1.msra.mxu0 0.0
    %2719 = vmatprep.subr.mxu0 0.0
    %2720 = vmatpush1.msra.mxu0 0.0
    %2721 = vmatprep.subr.mxu0 0.0
    %2722 = vmatpush1.msra.mxu0 0.0
    %2723 = vmatprep.subr.mxu0 0.0
    %2724 = vmatpush1.msra.mxu0 0.0
    %2725 = vmatprep.subr.mxu0 0.0
    %2726 = vmatpush1.msra.mxu0 0.0
    %2727 = vmatprep.mubr.f32.mxu0 0.0
    %2728 = vmatmul.mubr.f32.gmra.mrb[0].mxu0 %v2655
    %v2729 = vpop.f32.mrb[0].mxu0
    %v2730 = vadd.f32 %v548, %v2729
    %v2731 = vpop.f32.mrb[0].mxu0
    %2732 = vmatprep.mubr.f32.mxu0 0.0
    %2733 = vmatmul.mubr.f32.gmra.mrb[0].mxu0 %v2658
    %v2734 = vpop.f32.mrb[0].mxu0
    %v2735 = vadd.f32 %v548, %v2734
    %v2736 = vpop.f32.mrb[0].mxu0
    %2737 = vmatprep.mubr.f32.mxu0 0.0
    %2738 = vmatmul.mubr.f32.gmra.mrb[0].mxu0 %v2661
    %v2739 = vpop.f32.mrb[0].mxu0
    %v2740 = vadd.f32 %v548, %v2739
    %v2741 = vpop.f32.mrb[0].mxu0
    %2742 = vdwg.mxu0
    %v2743 = vadd.f32 %v391, %v2730
    %v2744 = vxor.u32 %v2743, 2147483648
    %v2745 = vmul.f32 %v2744, 1.442695
    %v2746 = vpow.pop %v2745
    %v2747 = vadd.f32 %v2746, 1.0
    %v2748 = vrcp.pop %v2747
    %v2749 = vmul.f32 1.0, %v2748
    %v2750 = vadd.f32 %v391, %v2735
    %v2751 = vxor.u32 %v2750, 2147483648
    %v2752 = vmul.f32 %v2751, 1.442695
    %v2753 = vpow.pop %v2752
    %v2754 = vadd.f32 %v2753, 1.0
    %v2755 = vrcp.pop %v2754
    %v2756 = vmul.f32 1.0, %v2755
    %v2757 = vadd.f32 %v391, %v2740
    %v2758 = vxor.u32 %v2757, 2147483648
    %v2759 = vmul.f32 %v2758, 1.442695
    %v2760 = vpow.pop %v2759
    %v2761 = vadd.f32 %v2760, 1.0
    %v2762 = vrcp.pop %v2761
    %v2763 = vmul.f32 1.0, %v2762
    %v2764 = vmul.f32 %v2749, %v2580
    %v2765 = vmul.f32 %v2756, %v2650
    %v2766 = vadd.f32 %v2764, %v2765
    %v2767 = vmul.f32 %v2763, %v2510
    %v2768 = vsub.f32 %v2653, %v2580
    %v2769 = vadd.f32 %v2768, %v2510
    %v2770 = vsub.f32 %v2653, %v2650
    %v2771 = vadd.f32 %v2770, %v2510
    %v2773 = vsel %vm126, %v2769, 0
    %v2776 = vsel %vm126, %v2771, 0
    %2778 = vmatprep.subr.mxu0 0.0
    %2779 = vmatpush1.msra.mxu0 %v115
    %2780 = vmatprep.subr.mxu0 0.0
    %2781 = vmatpush1.msra.mxu0 %v116
    %2782 = vmatprep.subr.mxu0 0.0
    %2783 = vmatpush1.msra.mxu0 %v117
    %2784 = vmatprep.subr.mxu0 0.0
    %2785 = vmatpush1.msra.mxu0 %v118
    %2786 = vmatprep.subr.mxu0 0.0
    %2787 = vmatpush1.msra.mxu0 0.0
    %2788 = vmatprep.subr.mxu0 0.0
    %2789 = vmatpush1.msra.mxu0 0.0
    %2790 = vmatprep.subr.mxu0 0.0
    %2791 = vmatpush1.msra.mxu0 0.0
    %2792 = vmatprep.subr.mxu0 0.0
    %2793 = vmatpush1.msra.mxu0 0.0
    %2794 = vmatprep.subr.mxu0 0.0
    %2795 = vmatpush1.msra.mxu0 0.0
    %2796 = vmatprep.subr.mxu0 0.0
    %2797 = vmatpush1.msra.mxu0 0.0
    %2798 = vmatprep.subr.mxu0 0.0
    %2799 = vmatpush1.msra.mxu0 0.0
    %2800 = vmatprep.subr.mxu0 0.0
    %2801 = vmatpush1.msra.mxu0 0.0
    %2802 = vmatprep.subr.mxu0 0.0
    %2803 = vmatpush1.msra.mxu0 0.0
    %2804 = vmatprep.subr.mxu0 0.0
    %2805 = vmatpush1.msra.mxu0 0.0
    %2806 = vmatprep.subr.mxu0 0.0
    %2807 = vmatpush1.msra.mxu0 0.0
    %2808 = vmatprep.subr.mxu0 0.0
    %2809 = vmatpush1.msra.mxu0 0.0
    %2810 = vmatprep.subr.mxu0 0.0
    %2811 = vmatpush1.msra.mxu0 0.0
    %2812 = vmatprep.subr.mxu0 0.0
    %2813 = vmatpush1.msra.mxu0 0.0
    %2814 = vmatprep.subr.mxu0 0.0
    %2815 = vmatpush1.msra.mxu0 0.0
    %2816 = vmatprep.subr.mxu0 0.0
    %2817 = vmatpush1.msra.mxu0 0.0
    %2818 = vmatprep.subr.mxu0 0.0
    %2819 = vmatpush1.msra.mxu0 0.0
    %2820 = vmatprep.subr.mxu0 0.0
    %2821 = vmatpush1.msra.mxu0 0.0
    %2822 = vmatprep.subr.mxu0 0.0
    %2823 = vmatpush1.msra.mxu0 0.0
    %2824 = vmatprep.subr.mxu0 0.0
    %2825 = vmatpush1.msra.mxu0 0.0
    %2826 = vmatprep.subr.mxu0 0.0
    %2827 = vmatpush1.msra.mxu0 0.0
    %2828 = vmatprep.subr.mxu0 0.0
    %2829 = vmatpush1.msra.mxu0 0.0
    %2830 = vmatprep.subr.mxu0 0.0
    %2831 = vmatpush1.msra.mxu0 0.0
    %2832 = vmatprep.subr.mxu0 0.0
    %2833 = vmatpush1.msra.mxu0 0.0
    %2834 = vmatprep.subr.mxu0 0.0
    %2835 = vmatpush1.msra.mxu0 0.0
    %2836 = vmatprep.subr.mxu0 0.0
    %2837 = vmatpush1.msra.mxu0 0.0
    %2838 = vmatprep.subr.mxu0 0.0
    %2839 = vmatpush1.msra.mxu0 0.0
    %2840 = vmatprep.subr.mxu0 0.0
    %2841 = vmatpush1.msra.mxu0 0.0
    %2842 = vmatprep.mubr.f32.mxu0 0.0
    %2843 = vmatmul.mubr.f32.gmra.mrb[0].mxu0 %v2773
    %v2844 = vpop.f32.mrb[0].mxu0
    %v2845 = vadd.f32 %v548, %v2844
    %v2846 = vpop.f32.mrb[0].mxu0
    %2847 = vmatprep.mubr.f32.mxu0 0.0
    %2848 = vmatmul.mubr.f32.gmra.mrb[0].mxu0 %v2776
    %v2849 = vpop.f32.mrb[0].mxu0
    %v2850 = vadd.f32 %v548, %v2849
    %v2851 = vpop.f32.mrb[0].mxu0
    %2852 = vdwg.mxu0
    %v2853 = vadd.f32 %v391, %v2845
    %v2854 = vxor.u32 %v2853, 2147483648
    %v2855 = vmul.f32 %v2854, 1.442695
    %v2856 = vpow.pop %v2855
    %v2857 = vadd.f32 %v2856, 1.0
    %v2858 = vrcp.pop %v2857
    %v2859 = vmul.f32 1.0, %v2858
    %v2860 = vtanh.pop %v2853
    %2862 = vrot.lane.b32.xlu0 %v2860, 32
    %v2863 = vpop.permute.xlu0 %2862
    %v2865 = vmul.f32 %v2859, %v2863
    %v2866 = vsub.f32 %v2766, %v2764
    %v2867 = vadd.f32 %v2866, %v2767
    %2869 = vrot.lane.b32.xlu0 %v2867, 96
    %v2870 = vpop.permute.xlu0 %2869
    %v2872 = vadd.f32 %v2865, %v2870
    %v2873 = vtanh.pop %v2872
    %2875 = vrot.lane.b32.xlu0 %v2873, 64
    %v2876 = vpop.permute.xlu0 %2875
    %v2878 = vmul.f32 %v2859, %v2876
    %v2879 = vsel %vm755, %v229, 0.0
    %2880 = vadd.xlane.f32.xlu0 %v2879
    %v2881 = vpop.xlane.xlu0 %2880
    %v2882 = vsel %vm759, %v230, 0.0
    %2883 = vadd.xlane.f32.xlu0 %v2882
    %v2884 = vpop.xlane.xlu0 %2883
    %v2885 = vsub.f32 1.0, %v2881
    %v2886 = vsub.f32 1.0, %v2884
    %v2887 = vmul.f32 %v2438, %v2885
    %v2888 = vmul.f32 %v2439, %v2886
    %2890 = vrot.lane.b32.xlu0 %v2878, 64
    %v2891 = vpop.permute.xlu0 %2890
    %v2894 = vsel %vm755, %v229, 0
    %v2897 = vsel %vm755, %v230, 0
    %2899 = vmatprep.subr.mxu0 0.0
    %2900 = vmatpush1.msra.mxu0 %v2891
    %2901 = vmatprep.subr.mxu0 0.0
    %2902 = vmatpush1.msra.mxu0 0.0
    %2903 = vmatprep.subr.mxu0 0.0
    %2904 = vmatpush1.msra.mxu0 0.0
    %2905 = vmatprep.subr.mxu0 0.0
    %2906 = vmatpush1.msra.mxu0 0.0
    %2907 = vmatprep.subr.mxu0 0.0
    %2908 = vmatpush1.msra.mxu0 0.0
    %2909 = vmatprep.subr.mxu0 0.0
    %2910 = vmatpush1.msra.mxu0 0.0
    %2911 = vmatprep.subr.mxu0 0.0
    %2912 = vmatpush1.msra.mxu0 0.0
    %2913 = vmatprep.subr.mxu0 0.0
    %2914 = vmatpush1.msra.mxu0 0.0
    %2915 = vmatprep.subr.mxu0 0.0
    %2916 = vmatpush1.msra.mxu0 0.0
    %2917 = vmatprep.subr.mxu0 0.0
    %2918 = vmatpush1.msra.mxu0 0.0
    %2919 = vmatprep.subr.mxu0 0.0
    %2920 = vmatpush1.msra.mxu0 0.0
    %2921 = vmatprep.subr.mxu0 0.0
    %2922 = vmatpush1.msra.mxu0 0.0
    %2923 = vmatprep.subr.mxu0 0.0
    %2924 = vmatpush1.msra.mxu0 0.0
    %2925 = vmatprep.subr.mxu0 0.0
    %2926 = vmatpush1.msra.mxu0 0.0
    %2927 = vmatprep.subr.mxu0 0.0
    %2928 = vmatpush1.msra.mxu0 0.0
    %2929 = vmatprep.subr.mxu0 0.0
    %2930 = vmatpush1.msra.mxu0 0.0
    %2931 = vmatprep.subr.mxu0 0.0
    %2932 = vmatpush1.msra.mxu0 0.0
    %2933 = vmatprep.subr.mxu0 0.0
    %2934 = vmatpush1.msra.mxu0 0.0
    %2935 = vmatprep.subr.mxu0 0.0
    %2936 = vmatpush1.msra.mxu0 0.0
    %2937 = vmatprep.subr.mxu0 0.0
    %2938 = vmatpush1.msra.mxu0 0.0
    %2939 = vmatprep.subr.mxu0 0.0
    %2940 = vmatpush1.msra.mxu0 0.0
    %2941 = vmatprep.subr.mxu0 0.0
    %2942 = vmatpush1.msra.mxu0 0.0
    %2943 = vmatprep.subr.mxu0 0.0
    %2944 = vmatpush1.msra.mxu0 0.0
    %2945 = vmatprep.subr.mxu0 0.0
    %2946 = vmatpush1.msra.mxu0 0.0
    %2947 = vmatprep.subr.mxu0 0.0
    %2948 = vmatpush1.msra.mxu0 0.0
    %2949 = vmatprep.subr.mxu0 0.0
    %2950 = vmatpush1.msra.mxu0 0.0
    %2951 = vmatprep.subr.mxu0 0.0
    %2952 = vmatpush1.msra.mxu0 0.0
    %2953 = vmatprep.subr.mxu0 0.0
    %2954 = vmatpush1.msra.mxu0 0.0
    %2955 = vmatprep.subr.mxu0 0.0
    %2956 = vmatpush1.msra.mxu0 0.0
    %2957 = vmatprep.subr.mxu0 0.0
    %2958 = vmatpush1.msra.mxu0 0.0
    %2959 = vmatprep.subr.mxu0 0.0
    %2960 = vmatpush1.msra.mxu0 0.0
    %2961 = vmatprep.subr.mxu0 0.0
    %2962 = vmatpush1.msra.mxu0 0.0
    %2963 = vmatprep.mubr.f32.mxu0 0.0
    %2964 = vmatmul.mubr.f32.gmra.mrb[0].mxu0 %v2894
    %v2965 = vpop.f32.mrb[0].mxu0
    %v2966 = vadd.f32 0.0, %v2965
    %v2967 = vpop.f32.mrb[0].mxu0
    %2968 = vmatprep.mubr.f32.mxu0 0.0
    %2969 = vmatmul.mubr.f32.gmra.mrb[0].mxu0 %v2897
    %v2970 = vpop.f32.mrb[0].mxu0
    %v2971 = vadd.f32 0.0, %v2970
    %v2972 = vpop.f32.mrb[0].mxu0
    %2973 = vdwg.mxu0
    %v2974 = vadd.f32 %v2887, %v2966
    %v2975 = vadd.f32 %v2888, %v2971
    %v2976 = vadd.f32 %v391, %v2850
    %v2977 = vxor.u32 %v2976, 2147483648
    %v2978 = vmul.f32 %v2977, 1.442695
    %v2979 = vpow.pop %v2978
    %v2980 = vadd.f32 %v2979, 1.0
    %v2981 = vrcp.pop %v2980
    %v2982 = vmul.f32 1.0, %v2981
    %v2983 = vtanh.pop %v2976
    %2985 = vrot.lane.b32.xlu0 %v2983, 32
    %v2986 = vpop.permute.xlu0 %2985
    %v2988 = vmul.f32 %v2982, %v2986
    %v2989 = vsub.f32 %v2766, %v2765
    %v2990 = vadd.f32 %v2989, %v2767
    %2992 = vrot.lane.b32.xlu0 %v2990, 96
    %v2993 = vpop.permute.xlu0 %2992
    %v2995 = vadd.f32 %v2988, %v2993
    %v2996 = vtanh.pop %v2995
    %2998 = vrot.lane.b32.xlu0 %v2996, 64
    %v2999 = vpop.permute.xlu0 %2998
    %v3001 = vmul.f32 %v2982, %v2999
    %v3002 = vsel %vm755, %v231, 0.0
    %3003 = vadd.xlane.f32.xlu0 %v3002
    %v3004 = vpop.xlane.xlu0 %3003
    %v3005 = vsel %vm759, %v232, 0.0
    %3006 = vadd.xlane.f32.xlu0 %v3005
    %v3007 = vpop.xlane.xlu0 %3006
    %v3008 = vsub.f32 1.0, %v3004
    %v3009 = vsub.f32 1.0, %v3007
    %v3010 = vmul.f32 %v2974, %v3008
    %v3011 = vmul.f32 %v2975, %v3009
    %3013 = vrot.lane.b32.xlu0 %v3001, 64
    %v3014 = vpop.permute.xlu0 %3013
    %v3017 = vsel %vm755, %v231, 0
    %v3020 = vsel %vm755, %v232, 0
    %3022 = vmatprep.subr.mxu0 0.0
    %3023 = vmatpush1.msra.mxu0 %v3014
    %3024 = vmatprep.subr.mxu0 0.0
    %3025 = vmatpush1.msra.mxu0 0.0
    %3026 = vmatprep.subr.mxu0 0.0
    %3027 = vmatpush1.msra.mxu0 0.0
    %3028 = vmatprep.subr.mxu0 0.0
    %3029 = vmatpush1.msra.mxu0 0.0
    %3030 = vmatprep.subr.mxu0 0.0
    %3031 = vmatpush1.msra.mxu0 0.0
    %3032 = vmatprep.subr.mxu0 0.0
    %3033 = vmatpush1.msra.mxu0 0.0
    %3034 = vmatprep.subr.mxu0 0.0
    %3035 = vmatpush1.msra.mxu0 0.0
    %3036 = vmatprep.subr.mxu0 0.0
    %3037 = vmatpush1.msra.mxu0 0.0
    %3038 = vmatprep.subr.mxu0 0.0
    %3039 = vmatpush1.msra.mxu0 0.0
    %3040 = vmatprep.subr.mxu0 0.0
    %3041 = vmatpush1.msra.mxu0 0.0
    %3042 = vmatprep.subr.mxu0 0.0
    %3043 = vmatpush1.msra.mxu0 0.0
    %3044 = vmatprep.subr.mxu0 0.0
    %3045 = vmatpush1.msra.mxu0 0.0
    %3046 = vmatprep.subr.mxu0 0.0
    %3047 = vmatpush1.msra.mxu0 0.0
    %3048 = vmatprep.subr.mxu0 0.0
    %3049 = vmatpush1.msra.mxu0 0.0
    %3050 = vmatprep.subr.mxu0 0.0
    %3051 = vmatpush1.msra.mxu0 0.0
    %3052 = vmatprep.subr.mxu0 0.0
    %3053 = vmatpush1.msra.mxu0 0.0
    %3054 = vmatprep.subr.mxu0 0.0
    %3055 = vmatpush1.msra.mxu0 0.0
    %3056 = vmatprep.subr.mxu0 0.0
    %3057 = vmatpush1.msra.mxu0 0.0
    %3058 = vmatprep.subr.mxu0 0.0
    %3059 = vmatpush1.msra.mxu0 0.0
    %3060 = vmatprep.subr.mxu0 0.0
    %3061 = vmatpush1.msra.mxu0 0.0
    %3062 = vmatprep.subr.mxu0 0.0
    %3063 = vmatpush1.msra.mxu0 0.0
    %3064 = vmatprep.subr.mxu0 0.0
    %3065 = vmatpush1.msra.mxu0 0.0
    %3066 = vmatprep.subr.mxu0 0.0
    %3067 = vmatpush1.msra.mxu0 0.0
    %3068 = vmatprep.subr.mxu0 0.0
    %3069 = vmatpush1.msra.mxu0 0.0
    %3070 = vmatprep.subr.mxu0 0.0
    %3071 = vmatpush1.msra.mxu0 0.0
    %3072 = vmatprep.subr.mxu0 0.0
    %3073 = vmatpush1.msra.mxu0 0.0
    %3074 = vmatprep.subr.mxu0 0.0
    %3075 = vmatpush1.msra.mxu0 0.0
    %3076 = vmatprep.subr.mxu0 0.0
    %3077 = vmatpush1.msra.mxu0 0.0
    %3078 = vmatprep.subr.mxu0 0.0
    %3079 = vmatpush1.msra.mxu0 0.0
    %3080 = vmatprep.subr.mxu0 0.0
    %3081 = vmatpush1.msra.mxu0 0.0
    %3082 = vmatprep.subr.mxu0 0.0
    %3083 = vmatpush1.msra.mxu0 0.0
    %3084 = vmatprep.subr.mxu0 0.0
    %3085 = vmatpush1.msra.mxu0 0.0
    %3086 = vmatprep.mubr.f32.mxu0 0.0
    %3087 = vmatmul.mubr.f32.gmra.mrb[0].mxu0 %v3017
    %v3088 = vpop.f32.mrb[0].mxu0
    %v3089 = vadd.f32 0.0, %v3088
    %v3090 = vpop.f32.mrb[0].mxu0
    %3091 = vmatprep.mubr.f32.mxu0 0.0
    %3092 = vmatmul.mubr.f32.gmra.mrb[0].mxu0 %v3020
    %v3093 = vpop.f32.mrb[0].mxu0
    %v3094 = vadd.f32 0.0, %v3093
    %v3095 = vpop.f32.mrb[0].mxu0
    %3096 = vdwg.mxu0
    %v3097 = vadd.f32 %v3010, %v3089
    %v3098 = vadd.f32 %v3011, %v3094
    %3101 = vrot.lane.b32.xlu0 %v3097, 32
    %v3102 = vpop.permute.xlu0 %3101
    %3103 = vrot.lane.b32.xlu0 %v3098, 32
    %v3104 = vpop.permute.xlu0 %3103
    %v3107 = vsel %vm126, %v1610, %v3102
    %v3108 = vsel %vm126, %v1611, %v3104
    %3109 = vst.msk [vmem:[#allocation10] sm:$0xff] %vm320, %v3107
    %vm3110 = vcmask 521216
    %3111 = vst.msk [vmem:[#allocation10 + $0x8] sm:$0x3f] %vm3110, %v3108
    // Predicated region
    $region90: #{tpu_custom_call.1} parent=1 // pred_check
      _
    $region91: #{tpu_custom_call.1} parent=1 // pred_check_branch
      %3113 = sbr.rel (0) target = $region93
    $region92: #{tpu_custom_call.1} parent=1 // pred_region
      %s3115 = ssub.s32 256, 256
      %3116 = vsyncadd [#allocation4], %s3115
      %s3117 = sshll.u32 [#allocation10], 4
      %s3118 = int_to_ptr.vmem [resolvable:$true] %s3117
      %3123 = dma.vmem_to_hbm [thread:$0]  %s3118, 256, %s18, [#allocation4], 128, 128, 8
    $region93: #{tpu_custom_call.1} parent=1 // pred_fallthru
      _
    // Predicated region
    $region94: #{tpu_custom_call.1} parent=1 // pred_check
      _
    $region95: #{tpu_custom_call.1} parent=1 // pred_check_branch
      %3125 = sbr.rel (0) target = $region97
    $region96: #{tpu_custom_call.1} parent=1 // pred_region
      %3126 = dma.done [#allocation4], 256
    $region97: #{tpu_custom_call.1} parent=1 // pred_fallthru
      _
    %3127 = vsyncpa [#allocation3], 1
    %3128 = vsyncpa [#allocation6], 1
    %3129 = vsyncpa [#allocation9], 1
    %3130 = vsyncpa [#allocation4], 1

</llo_original>
